<compile_context>
chip_gen: v5e
topology: v5e:2x2
jax: 0.10.0
libtpu: 0.0.40
codegen_flags: <defaults>
</compile_context>

<pallas_src>
import functools

import jax
import jax.numpy as jnp
from jax.experimental import pallas as pl
from jax.experimental.pallas import tpu as pltpu


def _round_up(x, m):
    return ((x + m - 1) // m) * m


# ----------------------------------------------------------------------------
# Fused forward kernel: grid = (n_layers,), sequential ("arbitrary").
#   layer 0      : run image-encoder projection, load embedded tokens into VMEM
#   every layer  : self-attn -> LN -> enc-dec attn -> LN -> FFN -> LN (in VMEM)
#   last layer   : tied vocab projection + log-softmax, lane-padded output
# ----------------------------------------------------------------------------
def _fused_forward_kernel(
    # shared (layer-invariant) inputs
    x0_ref, feats_ref, enc_w_ref, enc_b_ref, bias_ref, we_ref, pb_ref,
    # per-layer (stacked along leading layer axis) parameters
    wqkv_s_ref, bqkv_s_ref, wo_s_ref, bo_s_ref,
    wq_e_ref, bq_e_ref, wkv_e_ref, bkv_e_ref, wo_e_ref, bo_e_ref,
    w1_ref, b1_ref, w2_ref, b2_ref, lng_ref, lnb_ref,
    # output
    out_ref,
    # scratch (persists across grid steps)
    x_scr, enc_scr,
    *, B, L, A, D, H, dk, dv, n_valid, eps, n_layers):

    layer = pl.program_id(0)
    scale = 1.0 / (float(dk) ** 0.5)          # python float -> baked constant
    Hdk, Hdv = H * dk, H * dv

    # ---- layer 0: encoder projection (ReLU) + load embedded target tokens ----
    @pl.when(layer == 0)
    def _init():
        feats2 = feats_ref[...].reshape(B * A, -1)
        enc = jnp.dot(feats2, enc_w_ref[...], preferred_element_type=jnp.float32)
        enc_scr[...] = jnp.maximum(enc + enc_b_ref[...], 0.0)
        x_scr[...] = x0_ref[...].reshape(B * L, D)

    def layer_norm(y, g, b):
        mu = jnp.mean(y, axis=-1, keepdims=True)
        var = jnp.mean((y - mu) * (y - mu), axis=-1, keepdims=True)
        return (y - mu) * jax.lax.rsqrt(var + eps) * g + b

    def softmax(s):
        m = jnp.max(s, axis=-1, keepdims=True)
        e = jnp.exp(s - m)
        return e / jnp.sum(e, axis=-1, keepdims=True)

    def mha(q3, k3, v3, bias):
        # q3: (B, Lq, H*dk), k3: (B, Lk, H*dk), v3: (B, Lk, H*dv)
        heads = []
        for h in range(H):                                   # static unroll
            qh = q3[:, :, h * dk:(h + 1) * dk]
            kh = k3[:, :, h * dk:(h + 1) * dk]
            vh = v3[:, :, h * dv:(h + 1) * dv]
            s = jnp.einsum("bqd,bkd->bqk", qh, kh,
                           preferred_element_type=jnp.float32) * scale
            if bias is not None:
                s = s + bias
            p = softmax(s)
            heads.append(jnp.einsum("bqk,bkd->bqd", p, vh,
                                    preferred_element_type=jnp.float32))
        return jnp.concatenate(heads, axis=-1)               # (B, Lq, H*dv)

    lng = lng_ref[0]          # (3, D) — gammas for the 3 LayerNorms
    lnb = lnb_ref[0]          # (3, D)

    x2 = x_scr[...]           # (B*L, D)

    # ---- masked self-attention (fused QKV projection: one matmul, N=3*Hd) ----
    qkv = jnp.dot(x2, wqkv_s_ref[0], preferred_element_type=jnp.float32) + bqkv_s_ref[0]
    q = qkv[:, :Hdk].reshape(B, L, Hdk)
    k = qkv[:, Hdk:2 * Hdk].reshape(B, L, Hdk)
    v = qkv[:, 2 * Hdk:].reshape(B, L, Hdv)
    ctx = mha(q, k, v, bias_ref[...]).reshape(B * L, Hdv)
    sa = jnp.dot(ctx, wo_s_ref[0], preferred_element_type=jnp.float32) + bo_s_ref[0]
    x2 = layer_norm(x2 + sa, lng[0:1, :], lnb[0:1, :])

    # ---- encoder-decoder attention (fused KV projection of encoder output) ----
    enc2 = enc_scr[...]       # (B*A, D)
    qe = (jnp.dot(x2, wq_e_ref[0], preferred_element_type=jnp.float32)
          + bq_e_ref[0]).reshape(B, L, Hdk)
    kve = jnp.dot(enc2, wkv_e_ref[0], preferred_element_type=jnp.float32) + bkv_e_ref[0]
    ke = kve[:, :Hdk].reshape(B, A, Hdk)
    ve = kve[:, Hdk:].reshape(B, A, Hdv)
    ctx = mha(qe, ke, ve, None).reshape(B * L, Hdv)          # no image padding
    ca = jnp.dot(ctx, wo_e_ref[0], preferred_element_type=jnp.float32) + bo_e_ref[0]
    x2 = layer_norm(x2 + ca, lng[1:2, :], lnb[1:2, :])

    # ---- position-wise FFN (intermediate stays in VMEM) ----
    h1 = jnp.maximum(
        jnp.dot(x2, w1_ref[0], preferred_element_type=jnp.float32) + b1_ref[0], 0.0)
    ff = jnp.dot(h1, w2_ref[0], preferred_element_type=jnp.float32) + b2_ref[0]
    x2 = layer_norm(x2 + ff, lng[2:3, :], lnb[2:3, :])

    x_scr[...] = x2           # carry to the next layer

    # ---- last layer: tied vocab projection (x @ W_e^T, no transpose in HBM) ----
    @pl.when(layer == n_layers - 1)
    def _final():
        logits = jax.lax.dot_general(
            x2, we_ref[...], (((1,), (1,)), ((), ())),
            preferred_element_type=jnp.float32) + pb_ref[...]
        vpad = we_ref.shape[0]
        col = jax.lax.broadcasted_iota(jnp.int32, (B * L, vpad), 1)
        logits = jnp.where(col < n_valid, logits, -1e30)     # kill padded vocab cols
        m = jnp.max(logits, axis=-1, keepdims=True)
        lse = jnp.log(jnp.sum(jnp.exp(logits - m), axis=-1, keepdims=True)) + m
        out_ref[...] = (logits - lse).reshape(B, L, vpad)    # lane-dense store


# ----------------------------------------------------------------------------
# Forward wrapper (embedding gathers / mask construction are glue in XLA)
# ----------------------------------------------------------------------------
def forward(params, att_feats, target_seq, masks, cfg):
    B, A, F = att_feats.shape
    _, L = target_seq.shape
    D, H, dk, dv = cfg["D"], cfg["H"], cfg["dk"], cfg["dv"]
    V, nl = cfg["V"], cfg["n_layers"]
    Vp = _round_up(V + 1, 128)                # lane-dense vocab width

    # target positions (pos = j+1, zeroed at padded positions)
    target_pos = (jnp.arange(1, L + 1, dtype=jnp.int32)[None, :]
                  * masks.astype(jnp.int32))
    x0 = (jnp.take(params["word_embed"], target_seq, axis=0)
          + jnp.take(params["pos_embed"], target_pos, axis=0))          # (B, L, D)

    # causal + key-padding bias for masked self-attention
    causal = (jnp.arange(L)[:, None] >= jnp.arange(L)[None, :]).astype(jnp.float32)
    keep = causal[None, :, :] * masks[:, None, :]
    self_bias = (1.0 - keep) * (-1e9)                                   # (B, L, L)

    # tied output projection weights, padded to a multiple of 128 lanes
    we_pad = jnp.zeros((Vp, D), jnp.float32).at[: V + 1, :].set(params["word_embed"])
    pb_pad = jnp.zeros((1, Vp), jnp.float32).at[0, : V + 1].set(params["proj_b"])

    def b3(name):
        b = params[name]
        return b.reshape(nl, 1, b.shape[-1])

    ops = [
        x0, att_feats, params["enc_w"], params["enc_b"].reshape(1, D),
        self_bias, we_pad, pb_pad,
        params["w_qkv_s"], b3("b_qkv_s"), params["wo_s"], b3("bo_s"),
        params["wq_e"], b3("bq_e"), params["wkv_e"], b3("bkv_e"),
        params["wo_e"], b3("bo_e"),
        params["ffn_w1"], b3("ffn_b1"), params["ffn_w2"], b3("ffn_b2"),
        params["ln_g"], params["ln_b"],
    ]
    n_shared = 7

    def shared_spec(arr):
        nd = arr.ndim
        return pl.BlockSpec(arr.shape, lambda l, nd=nd: (0,) * nd)

    def layer_spec(arr):
        tail = arr.shape[1:]
        return pl.BlockSpec((1,) + tail, lambda l, n=len(tail): (l,) + (0,) * n)

    in_specs = ([shared_spec(a) for a in ops[:n_shared]]
                + [layer_spec(a) for a in ops[n_shared:]])

    kern = functools.partial(
        _fused_forward_kernel,
        B=B, L=L, A=A, D=D, H=H, dk=dk, dv=dv,
        n_valid=V + 1, eps=1e-5, n_layers=nl)

    out = pl.pallas_call(
        kern,
        out_shape=jax.ShapeDtypeStruct((B, L, Vp), jnp.float32),
        grid=(nl,),
        in_specs=in_specs,
        out_specs=pl.BlockSpec((B, L, Vp), lambda l: (0, 0, 0)),
        scratch_shapes=[
            pltpu.VMEM((B * L, D), jnp.float32),   # decoder activations carry
            pltpu.VMEM((B * A, D), jnp.float32),   # encoder output (computed once)
        ],
        compiler_params=pltpu.CompilerParams(
            dimension_semantics=("arbitrary",),    # layers are sequential
            vmem_limit_bytes=32 * 1024 * 1024,
        ),
    )(*ops)

    return out[:, :, : V + 1]


# ----------------------------------------------------------------------------
# Deterministic parameter init (stacked per-layer weights, fused QKV / KV)
# ----------------------------------------------------------------------------
def init_params(key, cfg):
    D, F, H, dk, dv = cfg["D"], cfg["F"], cfg["H"], cfg["dk"], cfg["dv"]
    V, L, inner, nl = cfg["V"], cfg["L"], cfg["inner"], cfg["n_layers"]
    Hdk, Hdv = H * dk, H * dv
    cnt = [0]

    def nxt():
        cnt[0] += 1
        return jax.random.fold_in(key, cnt[0])

    def w(shape, scale):
        return scale * jax.random.normal(nxt(), shape, jnp.float32)

    p = {}
    # embeddings (row 0 = padding_idx -> zeros); word_embed is also the tied proj weight
    p["word_embed"] = w((V + 1, D), 0.1).at[0].set(0.0)
    p["pos_embed"] = w((L + 2, D), 0.1).at[0].set(0.0)
    p["proj_b"] = jnp.zeros((V + 1,), jnp.float32)
    # image encoder projection
    p["enc_w"] = w((F, D), 1.0 / float(F) ** 0.5)
    p["enc_b"] = jnp.zeros((D,), jnp.float32)

    sD = 1.0 / float(D) ** 0.5
    p["w_qkv_s"] = w((nl, D, 2 * Hdk + Hdv), sD)          # fused Wq|Wk|Wv (self)
    p["b_qkv_s"] = jnp.zeros((nl, 2 * Hdk + Hdv), jnp.float32)
    p["wo_s"] = w((nl, Hdv, D), 1.0 / float(Hdv) ** 0.5)
    p["bo_s"] = jnp.zeros((nl, D), jnp.float32)
    p["wq_e"] = w((nl, D, Hdk), sD)                       # enc-dec attention
    p["bq_e"] = jnp.zeros((nl, Hdk), jnp.float32)
    p["wkv_e"] = w((nl, D, Hdk + Hdv), sD)                # fused Wk|Wv (enc-dec)
    p["bkv_e"] = jnp.zeros((nl, Hdk + Hdv), jnp.float32)
    p["wo_e"] = w((nl, Hdv, D), 1.0 / float(Hdv) ** 0.5)
    p["bo_e"] = jnp.zeros((nl, D), jnp.float32)
    p["ffn_w1"] = w((nl, D, inner), sD)
    p["ffn_b1"] = jnp.zeros((nl, inner), jnp.float32)
    p["ffn_w2"] = w((nl, inner, D), 1.0 / float(inner) ** 0.5)
    p["ffn_b2"] = jnp.zeros((nl, D), jnp.float32)
    p["ln_g"] = jnp.ones((nl, 3, D), jnp.float32)         # 3 LayerNorms / layer
    p["ln_b"] = jnp.zeros((nl, 3, D), jnp.float32)
    return p


# ----------------------------------------------------------------------------
if __name__ == "__main__":
    cfg = dict(
        D=32,          # model_size
        F=32,          # att_feat_size
        V=20,          # vocab_size (output dim = vocab_size + 1 = 21)
        L=8,           # target sequence length
        H=4,           # head_size (number of heads)
        dk=8,          # k_size
        dv=8,          # v_size
        inner=64,      # inner_layer_size
        n_layers=2,    # n_layers
    )
    B, A = 2, 16

    key = jax.random.PRNGKey(0)
    kp, k1, k2 = jax.random.split(key, 3)
    params = init_params(kp, cfg)

    att_feats = jax.random.normal(k1, (B, A, cfg["F"]), jnp.float32)
    target_seq = jax.random.randint(k2, (B, cfg["L"]), 1, cfg["V"] + 1).astype(jnp.int32)
    masks = jnp.array([[1.0] * 8, [1.0] * 6 + [0.0] * 2], dtype=jnp.float32)

    fwd = jax.jit(functools.partial(forward, cfg=cfg))
    out = fwd(params, att_feats, target_seq, masks)
    jax.block_until_ready(out)
    assert out.shape == (B, cfg["L"], cfg["V"] + 1)
    assert bool(jnp.all(jnp.isfinite(out)))
    print("KERNEL_OK")
</pallas_src>

<mosaic_0001>
module attributes {stable_mosaic.version = 11 : i64} {
  func.func @_fused_forward_kernel(%arg0: i32, %arg1: memref<2x8x32xf32, #tpu.memory_space<vmem>>, %arg2: memref<2x16x32xf32, #tpu.memory_space<vmem>>, %arg3: memref<32x32xf32, #tpu.memory_space<vmem>>, %arg4: memref<1x32xf32, #tpu.memory_space<vmem>>, %arg5: memref<2x8x8xf32, #tpu.memory_space<vmem>>, %arg6: memref<128x32xf32, #tpu.memory_space<vmem>>, %arg7: memref<1x128xf32, #tpu.memory_space<vmem>>, %arg8: memref<1x32x96xf32, #tpu.memory_space<vmem>>, %arg9: memref<1x1x96xf32, #tpu.memory_space<vmem>>, %arg10: memref<1x32x32xf32, #tpu.memory_space<vmem>>, %arg11: memref<1x1x32xf32, #tpu.memory_space<vmem>>, %arg12: memref<1x32x32xf32, #tpu.memory_space<vmem>>, %arg13: memref<1x1x32xf32, #tpu.memory_space<vmem>>, %arg14: memref<1x32x64xf32, #tpu.memory_space<vmem>>, %arg15: memref<1x1x64xf32, #tpu.memory_space<vmem>>, %arg16: memref<1x32x32xf32, #tpu.memory_space<vmem>>, %arg17: memref<1x1x32xf32, #tpu.memory_space<vmem>>, %arg18: memref<1x32x64xf32, #tpu.memory_space<vmem>>, %arg19: memref<1x1x64xf32, #tpu.memory_space<vmem>>, %arg20: memref<1x64x32xf32, #tpu.memory_space<vmem>>, %arg21: memref<1x1x32xf32, #tpu.memory_space<vmem>>, %arg22: memref<1x3x32xf32, #tpu.memory_space<vmem>>, %arg23: memref<1x3x32xf32, #tpu.memory_space<vmem>>, %arg24: memref<2x8x128xf32, #tpu.memory_space<vmem>>, %arg25: memref<16x32xf32, #tpu.memory_space<vmem>>, %arg26: memref<32x32xf32, #tpu.memory_space<vmem>>) attributes {dimension_semantics = [#tpu.dimension_semantics<arbitrary>], iteration_bounds = array<i64: 2>, scalar_prefetch = 0 : i64, scratch_operands = 2 : i64, tpu.core_type = #tpu.core_type<tc>, window_params = [{pipeline_mode = #tpu.pipeline_mode<synchronous>, transform_indices = @transform_0, window_bounds = array<i64: 2, 8, 32>}, {pipeline_mode = #tpu.pipeline_mode<synchronous>, transform_indices = @transform_1, window_bounds = array<i64: 2, 16, 32>}, {pipeline_mode = #tpu.pipeline_mode<synchronous>, transform_indices = @transform_2, window_bounds = array<i64: 32, 32>}, {pipeline_mode = #tpu.pipeline_mode<synchronous>, transform_indices = @transform_3, window_bounds = array<i64: 1, 32>}, {pipeline_mode = #tpu.pipeline_mode<synchronous>, transform_indices = @transform_4, window_bounds = array<i64: 2, 8, 8>}, {pipeline_mode = #tpu.pipeline_mode<synchronous>, transform_indices = @transform_5, window_bounds = array<i64: 128, 32>}, {pipeline_mode = #tpu.pipeline_mode<synchronous>, transform_indices = @transform_6, window_bounds = array<i64: 1, 128>}, {transform_indices = @transform_7, window_bounds = array<i64: 1, 32, 96>}, {transform_indices = @transform_8, window_bounds = array<i64: 1, 1, 96>}, {transform_indices = @transform_9, window_bounds = array<i64: 1, 32, 32>}, {transform_indices = @transform_10, window_bounds = array<i64: 1, 1, 32>}, {transform_indices = @transform_11, window_bounds = array<i64: 1, 32, 32>}, {transform_indices = @transform_12, window_bounds = array<i64: 1, 1, 32>}, {transform_indices = @transform_13, window_bounds = array<i64: 1, 32, 64>}, {transform_indices = @transform_14, window_bounds = array<i64: 1, 1, 64>}, {transform_indices = @transform_15, window_bounds = array<i64: 1, 32, 32>}, {transform_indices = @transform_16, window_bounds = array<i64: 1, 1, 32>}, {transform_indices = @transform_17, window_bounds = array<i64: 1, 32, 64>}, {transform_indices = @transform_18, window_bounds = array<i64: 1, 1, 64>}, {transform_indices = @transform_19, window_bounds = array<i64: 1, 64, 32>}, {transform_indices = @transform_20, window_bounds = array<i64: 1, 1, 32>}, {transform_indices = @transform_21, window_bounds = array<i64: 1, 3, 32>}, {transform_indices = @transform_22, window_bounds = array<i64: 1, 3, 32>}, {pipeline_mode = #tpu.pipeline_mode<synchronous>, transform_indices = @transform_23, window_bounds = array<i64: 2, 8, 128>}]} {
    %c0_i32 = arith.constant 0 : i32
    %0 = arith.cmpi eq, %arg0, %c0_i32 : i32
    %1 = arith.extui %0 : i1 to i32
    %c0_i32_0 = arith.constant 0 : i32
    %2 = arith.cmpi ne, %1, %c0_i32_0 : i32
    scf.if %2 {
      %c0_120 = arith.constant 0 : index
      %c0_121 = arith.constant 0 : index
      %c0_122 = arith.constant 0 : index
      %293 = vector.load %arg2[%c0_120, %c0_121, %c0_122] : memref<2x16x32xf32, #tpu.memory_space<vmem>>, vector<2x16x32xf32>
      %294 = vector.shape_cast %293 : vector<2x16x32xf32> to vector<32x32xf32>
      %c0_123 = arith.constant 0 : index
      %c0_124 = arith.constant 0 : index
      %295 = vector.load %arg3[%c0_123, %c0_124] : memref<32x32xf32, #tpu.memory_space<vmem>>, vector<32x32xf32>
      %cst_125 = arith.constant dense<0.000000e+00> : vector<32x32xf32>
      %296 = tpu.matmul %294, %295, %cst_125 {dimension_numbers = #tpu.dot_dimension_numbers<[1], [0], [0], [1], [0, 0, 1, 1], [], []>} : vector<32x32xf32>, vector<32x32xf32>, vector<32x32xf32> -> vector<32x32xf32>
      %c0_126 = arith.constant 0 : index
      %c0_127 = arith.constant 0 : index
      %297 = vector.load %arg4[%c0_126, %c0_127] : memref<1x32xf32, #tpu.memory_space<vmem>>, vector<1x32xf32>
      %298 = vector.broadcast %297 : vector<1x32xf32> to vector<32x32xf32>
      %299 = arith.addf %296, %298 : vector<32x32xf32>
      %cst_128 = arith.constant 0.000000e+00 : f32
      %300 = vector.broadcast %cst_128 : f32 to vector<32x32xf32>
      %301 = arith.maximumf %299, %300 : vector<32x32xf32>
      %c0_129 = arith.constant 0 : index
      %c0_130 = arith.constant 0 : index
      %302 = vector.load %arg26[%c0_129, %c0_130] : memref<32x32xf32, #tpu.memory_space<vmem>>, vector<32x32xf32>
      tpu.vector_store %arg26[%c0_129, %c0_130], %301 {strides = array<i32>} : memref<32x32xf32, #tpu.memory_space<vmem>>, vector<32x32xf32>,
      %c0_131 = arith.constant 0 : index
      %c0_132 = arith.constant 0 : index
      %c0_133 = arith.constant 0 : index
      %303 = vector.load %arg1[%c0_131, %c0_132, %c0_133] : memref<2x8x32xf32, #tpu.memory_space<vmem>>, vector<2x8x32xf32>
      %304 = vector.shape_cast %303 : vector<2x8x32xf32> to vector<16x32xf32>
      %c0_134 = arith.constant 0 : index
      %c0_135 = arith.constant 0 : index
      %305 = vector.load %arg25[%c0_134, %c0_135] : memref<16x32xf32, #tpu.memory_space<vmem>>, vector<16x32xf32>
      tpu.vector_store %arg25[%c0_134, %c0_135], %304 {strides = array<i32>} : memref<16x32xf32, #tpu.memory_space<vmem>>, vector<16x32xf32>,
    } else {
    }
    %c0 = arith.constant 0 : index
    %c0_1 = arith.constant 0 : index
    %c0_2 = arith.constant 0 : index
    %3 = vector.load %arg22[%c0, %c0_1, %c0_2] : memref<1x3x32xf32, #tpu.memory_space<vmem>>, vector<1x3x32xf32>
    %4 = vector.shape_cast %3 : vector<1x3x32xf32> to vector<3x32xf32>
    %c0_3 = arith.constant 0 : index
    %c0_4 = arith.constant 0 : index
    %c0_5 = arith.constant 0 : index
    %5 = vector.load %arg23[%c0_3, %c0_4, %c0_5] : memref<1x3x32xf32, #tpu.memory_space<vmem>>, vector<1x3x32xf32>
    %6 = vector.shape_cast %5 : vector<1x3x32xf32> to vector<3x32xf32>
    %c0_6 = arith.constant 0 : index
    %c0_7 = arith.constant 0 : index
    %7 = vector.load %arg25[%c0_6, %c0_7] : memref<16x32xf32, #tpu.memory_space<vmem>>, vector<16x32xf32>
    %c0_8 = arith.constant 0 : index
    %c0_9 = arith.constant 0 : index
    %c0_10 = arith.constant 0 : index
    %8 = vector.load %arg8[%c0_8, %c0_9, %c0_10] : memref<1x32x96xf32, #tpu.memory_space<vmem>>, vector<1x32x96xf32>
    %9 = vector.shape_cast %8 : vector<1x32x96xf32> to vector<32x96xf32>
    %cst = arith.constant dense<0.000000e+00> : vector<16x96xf32>
    %10 = tpu.matmul %7, %9, %cst {dimension_numbers = #tpu.dot_dimension_numbers<[1], [0], [0], [1], [0, 0, 1, 1], [], []>} : vector<16x32xf32>, vector<32x96xf32>, vector<16x96xf32> -> vector<16x96xf32>
    %c0_11 = arith.constant 0 : index
    %c0_12 = arith.constant 0 : index
    %c0_13 = arith.constant 0 : index
    %11 = vector.load %arg9[%c0_11, %c0_12, %c0_13] : memref<1x1x96xf32, #tpu.memory_space<vmem>>, vector<1x1x96xf32>
    %12 = vector.shape_cast %11 : vector<1x1x96xf32> to vector<1x96xf32>
    %13 = vector.broadcast %12 : vector<1x96xf32> to vector<16x96xf32>
    %14 = arith.addf %10, %13 : vector<16x96xf32>
    %15 = vector.extract_strided_slice %14 {offsets = [0, 0], sizes = [16, 32], strides = [1, 1]} : vector<16x96xf32> to vector<16x32xf32>
    %16 = vector.shape_cast %15 : vector<16x32xf32> to vector<2x8x32xf32>
    %17 = vector.extract_strided_slice %14 {offsets = [0, 32], sizes = [16, 32], strides = [1, 1]} : vector<16x96xf32> to vector<16x32xf32>
    %18 = vector.shape_cast %17 : vector<16x32xf32> to vector<2x8x32xf32>
    %19 = vector.extract_strided_slice %14 {offsets = [0, 64], sizes = [16, 32], strides = [1, 1]} : vector<16x96xf32> to vector<16x32xf32>
    %20 = vector.shape_cast %19 : vector<16x32xf32> to vector<2x8x32xf32>
    %c0_14 = arith.constant 0 : index
    %c0_15 = arith.constant 0 : index
    %c0_16 = arith.constant 0 : index
    %21 = vector.load %arg5[%c0_14, %c0_15, %c0_16] : memref<2x8x8xf32, #tpu.memory_space<vmem>>, vector<2x8x8xf32>
    %22 = vector.extract_strided_slice %16 {offsets = [0, 0, 0], sizes = [2, 8, 8], strides = [1, 1, 1]} : vector<2x8x32xf32> to vector<2x8x8xf32>
    %23 = vector.extract_strided_slice %18 {offsets = [0, 0, 0], sizes = [2, 8, 8], strides = [1, 1, 1]} : vector<2x8x32xf32> to vector<2x8x8xf32>
    %24 = vector.extract_strided_slice %20 {offsets = [0, 0, 0], sizes = [2, 8, 8], strides = [1, 1, 1]} : vector<2x8x32xf32> to vector<2x8x8xf32>
    "tpu.trace_start"() <{level = 10 : i32, message = "bqd,bkd->bqk"}> : () -> ()
    %cst_17 = arith.constant dense<0.000000e+00> : vector<2x8x8xf32>
    %25 = tpu.matmul %22, %23, %cst_17 {dimension_numbers = #tpu.dot_dimension_numbers<[2], [2], [1], [1], [0, 0, 0, 1, 1, 1], [0], [0]>} : vector<2x8x8xf32>, vector<2x8x8xf32>, vector<2x8x8xf32> -> vector<2x8x8xf32>
    "tpu.trace_stop"() : () -> ()
    %cst_18 = arith.constant 0.353553385 : f32
    %26 = vector.broadcast %cst_18 : f32 to vector<2x8x8xf32>
    %27 = arith.mulf %25, %26 : vector<2x8x8xf32>
    %28 = arith.addf %27, %21 : vector<2x8x8xf32>
    %cst_19 = arith.constant dense<0xFF800000> : vector<2x8xf32>
    %29 = vector.multi_reduction <maximumf>, %28, %cst_19 [2] : vector<2x8x8xf32> to vector<2x8xf32>
    %30 = vector.shape_cast %29 : vector<2x8xf32> to vector<2x8x1xf32>
    %31 = vector.broadcast %30 : vector<2x8x1xf32> to vector<2x8x8xf32>
    %32 = arith.subf %28, %31 : vector<2x8x8xf32>
    %33 = math.exp %32 : vector<2x8x8xf32>
    %cst_20 = arith.constant dense<0.000000e+00> : vector<2x8xf32>
    %34 = vector.multi_reduction <add>, %33, %cst_20 [2] : vector<2x8x8xf32> to vector<2x8xf32>
    %35 = vector.shape_cast %34 : vector<2x8xf32> to vector<2x8x1xf32>
    %36 = vector.broadcast %35 : vector<2x8x1xf32> to vector<2x8x8xf32>
    %37 = arith.divf %33, %36 : vector<2x8x8xf32>
    "tpu.trace_start"() <{level = 10 : i32, message = "bqk,bkd->bqd"}> : () -> ()
    %cst_21 = arith.constant dense<0.000000e+00> : vector<2x8x8xf32>
    %38 = tpu.matmul %37, %24, %cst_21 {dimension_numbers = #tpu.dot_dimension_numbers<[2], [1], [1], [2], [0, 0, 0, 1, 1, 2], [0], [0]>} : vector<2x8x8xf32>, vector<2x8x8xf32>, vector<2x8x8xf32> -> vector<2x8x8xf32>
    "tpu.trace_stop"() : () -> ()
    %39 = vector.extract_strided_slice %16 {offsets = [0, 0, 8], sizes = [2, 8, 8], strides = [1, 1, 1]} : vector<2x8x32xf32> to vector<2x8x8xf32>
    %40 = vector.extract_strided_slice %18 {offsets = [0, 0, 8], sizes = [2, 8, 8], strides = [1, 1, 1]} : vector<2x8x32xf32> to vector<2x8x8xf32>
    %41 = vector.extract_strided_slice %20 {offsets = [0, 0, 8], sizes = [2, 8, 8], strides = [1, 1, 1]} : vector<2x8x32xf32> to vector<2x8x8xf32>
    "tpu.trace_start"() <{level = 10 : i32, message = "bqd,bkd->bqk"}> : () -> ()
    %cst_22 = arith.constant dense<0.000000e+00> : vector<2x8x8xf32>
    %42 = tpu.matmul %39, %40, %cst_22 {dimension_numbers = #tpu.dot_dimension_numbers<[2], [2], [1], [1], [0, 0, 0, 1, 1, 1], [0], [0]>} : vector<2x8x8xf32>, vector<2x8x8xf32>, vector<2x8x8xf32> -> vector<2x8x8xf32>
    "tpu.trace_stop"() : () -> ()
    %cst_23 = arith.constant 0.353553385 : f32
    %43 = vector.broadcast %cst_23 : f32 to vector<2x8x8xf32>
    %44 = arith.mulf %42, %43 : vector<2x8x8xf32>
    %45 = arith.addf %44, %21 : vector<2x8x8xf32>
    %cst_24 = arith.constant dense<0xFF800000> : vector<2x8xf32>
    %46 = vector.multi_reduction <maximumf>, %45, %cst_24 [2] : vector<2x8x8xf32> to vector<2x8xf32>
    %47 = vector.shape_cast %46 : vector<2x8xf32> to vector<2x8x1xf32>
    %48 = vector.broadcast %47 : vector<2x8x1xf32> to vector<2x8x8xf32>
    %49 = arith.subf %45, %48 : vector<2x8x8xf32>
    %50 = math.exp %49 : vector<2x8x8xf32>
    %cst_25 = arith.constant dense<0.000000e+00> : vector<2x8xf32>
    %51 = vector.multi_reduction <add>, %50, %cst_25 [2] : vector<2x8x8xf32> to vector<2x8xf32>
    %52 = vector.shape_cast %51 : vector<2x8xf32> to vector<2x8x1xf32>
    %53 = vector.broadcast %52 : vector<2x8x1xf32> to vector<2x8x8xf32>
    %54 = arith.divf %50, %53 : vector<2x8x8xf32>
    "tpu.trace_start"() <{level = 10 : i32, message = "bqk,bkd->bqd"}> : () -> ()
    %cst_26 = arith.constant dense<0.000000e+00> : vector<2x8x8xf32>
    %55 = tpu.matmul %54, %41, %cst_26 {dimension_numbers = #tpu.dot_dimension_numbers<[2], [1], [1], [2], [0, 0, 0, 1, 1, 2], [0], [0]>} : vector<2x8x8xf32>, vector<2x8x8xf32>, vector<2x8x8xf32> -> vector<2x8x8xf32>
    "tpu.trace_stop"() : () -> ()
    %56 = vector.extract_strided_slice %16 {offsets = [0, 0, 16], sizes = [2, 8, 8], strides = [1, 1, 1]} : vector<2x8x32xf32> to vector<2x8x8xf32>
    %57 = vector.extract_strided_slice %18 {offsets = [0, 0, 16], sizes = [2, 8, 8], strides = [1, 1, 1]} : vector<2x8x32xf32> to vector<2x8x8xf32>
    %58 = vector.extract_strided_slice %20 {offsets = [0, 0, 16], sizes = [2, 8, 8], strides = [1, 1, 1]} : vector<2x8x32xf32> to vector<2x8x8xf32>
    "tpu.trace_start"() <{level = 10 : i32, message = "bqd,bkd->bqk"}> : () -> ()
    %cst_27 = arith.constant dense<0.000000e+00> : vector<2x8x8xf32>
    %59 = tpu.matmul %56, %57, %cst_27 {dimension_numbers = #tpu.dot_dimension_numbers<[2], [2], [1], [1], [0, 0, 0, 1, 1, 1], [0], [0]>} : vector<2x8x8xf32>, vector<2x8x8xf32>, vector<2x8x8xf32> -> vector<2x8x8xf32>
    "tpu.trace_stop"() : () -> ()
    %cst_28 = arith.constant 0.353553385 : f32
    %60 = vector.broadcast %cst_28 : f32 to vector<2x8x8xf32>
    %61 = arith.mulf %59, %60 : vector<2x8x8xf32>
    %62 = arith.addf %61, %21 : vector<2x8x8xf32>
    %cst_29 = arith.constant dense<0xFF800000> : vector<2x8xf32>
    %63 = vector.multi_reduction <maximumf>, %62, %cst_29 [2] : vector<2x8x8xf32> to vector<2x8xf32>
    %64 = vector.shape_cast %63 : vector<2x8xf32> to vector<2x8x1xf32>
    %65 = vector.broadcast %64 : vector<2x8x1xf32> to vector<2x8x8xf32>
    %66 = arith.subf %62, %65 : vector<2x8x8xf32>
    %67 = math.exp %66 : vector<2x8x8xf32>
    %cst_30 = arith.constant dense<0.000000e+00> : vector<2x8xf32>
    %68 = vector.multi_reduction <add>, %67, %cst_30 [2] : vector<2x8x8xf32> to vector<2x8xf32>
    %69 = vector.shape_cast %68 : vector<2x8xf32> to vector<2x8x1xf32>
    %70 = vector.broadcast %69 : vector<2x8x1xf32> to vector<2x8x8xf32>
    %71 = arith.divf %67, %70 : vector<2x8x8xf32>
    "tpu.trace_start"() <{level = 10 : i32, message = "bqk,bkd->bqd"}> : () -> ()
    %cst_31 = arith.constant dense<0.000000e+00> : vector<2x8x8xf32>
    %72 = tpu.matmul %71, %58, %cst_31 {dimension_numbers = #tpu.dot_dimension_numbers<[2], [1], [1], [2], [0, 0, 0, 1, 1, 2], [0], [0]>} : vector<2x8x8xf32>, vector<2x8x8xf32>, vector<2x8x8xf32> -> vector<2x8x8xf32>
    "tpu.trace_stop"() : () -> ()
    %73 = vector.extract_strided_slice %16 {offsets = [0, 0, 24], sizes = [2, 8, 8], strides = [1, 1, 1]} : vector<2x8x32xf32> to vector<2x8x8xf32>
    %74 = vector.extract_strided_slice %18 {offsets = [0, 0, 24], sizes = [2, 8, 8], strides = [1, 1, 1]} : vector<2x8x32xf32> to vector<2x8x8xf32>
    %75 = vector.extract_strided_slice %20 {offsets = [0, 0, 24], sizes = [2, 8, 8], strides = [1, 1, 1]} : vector<2x8x32xf32> to vector<2x8x8xf32>
    "tpu.trace_start"() <{level = 10 : i32, message = "bqd,bkd->bqk"}> : () -> ()
    %cst_32 = arith.constant dense<0.000000e+00> : vector<2x8x8xf32>
    %76 = tpu.matmul %73, %74, %cst_32 {dimension_numbers = #tpu.dot_dimension_numbers<[2], [2], [1], [1], [0, 0, 0, 1, 1, 1], [0], [0]>} : vector<2x8x8xf32>, vector<2x8x8xf32>, vector<2x8x8xf32> -> vector<2x8x8xf32>
    "tpu.trace_stop"() : () -> ()
    %cst_33 = arith.constant 0.353553385 : f32
    %77 = vector.broadcast %cst_33 : f32 to vector<2x8x8xf32>
    %78 = arith.mulf %76, %77 : vector<2x8x8xf32>
    %79 = arith.addf %78, %21 : vector<2x8x8xf32>
    %cst_34 = arith.constant dense<0xFF800000> : vector<2x8xf32>
    %80 = vector.multi_reduction <maximumf>, %79, %cst_34 [2] : vector<2x8x8xf32> to vector<2x8xf32>
    %81 = vector.shape_cast %80 : vector<2x8xf32> to vector<2x8x1xf32>
    %82 = vector.broadcast %81 : vector<2x8x1xf32> to vector<2x8x8xf32>
    %83 = arith.subf %79, %82 : vector<2x8x8xf32>
    %84 = math.exp %83 : vector<2x8x8xf32>
    %cst_35 = arith.constant dense<0.000000e+00> : vector<2x8xf32>
    %85 = vector.multi_reduction <add>, %84, %cst_35 [2] : vector<2x8x8xf32> to vector<2x8xf32>
    %86 = vector.shape_cast %85 : vector<2x8xf32> to vector<2x8x1xf32>
    %87 = vector.broadcast %86 : vector<2x8x1xf32> to vector<2x8x8xf32>
    %88 = arith.divf %84, %87 : vector<2x8x8xf32>
    "tpu.trace_start"() <{level = 10 : i32, message = "bqk,bkd->bqd"}> : () -> ()
    %cst_36 = arith.constant dense<0.000000e+00> : vector<2x8x8xf32>
    %89 = tpu.matmul %88, %75, %cst_36 {dimension_numbers = #tpu.dot_dimension_numbers<[2], [1], [1], [2], [0, 0, 0, 1, 1, 2], [0], [0]>} : vector<2x8x8xf32>, vector<2x8x8xf32>, vector<2x8x8xf32> -> vector<2x8x8xf32>
    "tpu.trace_stop"() : () -> ()
    %90 = tpu.concatenate %38, %55, %72, %89 in 2 : vector<2x8x8xf32>, vector<2x8x8xf32>, vector<2x8x8xf32>, vector<2x8x8xf32> -> vector<2x8x32xf32>
    %91 = vector.shape_cast %90 : vector<2x8x32xf32> to vector<16x32xf32>
    %c0_37 = arith.constant 0 : index
    %c0_38 = arith.constant 0 : index
    %c0_39 = arith.constant 0 : index
    %92 = vector.load %arg10[%c0_37, %c0_38, %c0_39] : memref<1x32x32xf32, #tpu.memory_space<vmem>>, vector<1x32x32xf32>
    %93 = vector.shape_cast %92 : vector<1x32x32xf32> to vector<32x32xf32>
    %cst_40 = arith.constant dense<0.000000e+00> : vector<16x32xf32>
    %94 = tpu.matmul %91, %93, %cst_40 {dimension_numbers = #tpu.dot_dimension_numbers<[1], [0], [0], [1], [0, 0, 1, 1], [], []>} : vector<16x32xf32>, vector<32x32xf32>, vector<16x32xf32> -> vector<16x32xf32>
    %c0_41 = arith.constant 0 : index
    %c0_42 = arith.constant 0 : index
    %c0_43 = arith.constant 0 : index
    %95 = vector.load %arg11[%c0_41, %c0_42, %c0_43] : memref<1x1x32xf32, #tpu.memory_space<vmem>>, vector<1x1x32xf32>
    %96 = vector.shape_cast %95 : vector<1x1x32xf32> to vector<1x32xf32>
    %97 = vector.broadcast %96 : vector<1x32xf32> to vector<16x32xf32>
    %98 = arith.addf %94, %97 : vector<16x32xf32>
    %99 = arith.addf %7, %98 : vector<16x32xf32>
    %100 = vector.extract_strided_slice %4 {offsets = [0, 0], sizes = [1, 32], strides = [1, 1]} : vector<3x32xf32> to vector<1x32xf32>
    %101 = vector.extract_strided_slice %6 {offsets = [0, 0], sizes = [1, 32], strides = [1, 1]} : vector<3x32xf32> to vector<1x32xf32>
    %cst_44 = arith.constant dense<0.000000e+00> : vector<16xf32>
    %102 = vector.multi_reduction <add>, %99, %cst_44 [1] : vector<16x32xf32> to vector<16xf32>
    %103 = vector.shape_cast %102 : vector<16xf32> to vector<16x1xf32>
    %cst_45 = arith.constant 3.200000e+01 : f32
    %104 = vector.broadcast %cst_45 : f32 to vector<16x1xf32>
    %105 = arith.divf %103, %104 : vector<16x1xf32>
    %106 = vector.broadcast %105 : vector<16x1xf32> to vector<16x32xf32>
    %107 = arith.subf %99, %106 : vector<16x32xf32>
    %108 = vector.broadcast %105 : vector<16x1xf32> to vector<16x32xf32>
    %109 = arith.subf %99, %108 : vector<16x32xf32>
    %110 = arith.mulf %107, %109 : vector<16x32xf32>
    %cst_46 = arith.constant dense<0.000000e+00> : vector<16xf32>
    %111 = vector.multi_reduction <add>, %110, %cst_46 [1] : vector<16x32xf32> to vector<16xf32>
    %112 = vector.shape_cast %111 : vector<16xf32> to vector<16x1xf32>
    %cst_47 = arith.constant 3.200000e+01 : f32
    %113 = vector.broadcast %cst_47 : f32 to vector<16x1xf32>
    %114 = arith.divf %112, %113 : vector<16x1xf32>
    %115 = vector.broadcast %105 : vector<16x1xf32> to vector<16x32xf32>
    %116 = arith.subf %99, %115 : vector<16x32xf32>
    %cst_48 = arith.constant 9.99999974E-6 : f32
    %117 = vector.broadcast %cst_48 : f32 to vector<16x1xf32>
    %118 = arith.addf %114, %117 : vector<16x1xf32>
    %119 = math.rsqrt %118 : vector<16x1xf32>
    %120 = vector.broadcast %119 : vector<16x1xf32> to vector<16x32xf32>
    %121 = arith.mulf %116, %120 : vector<16x32xf32>
    %122 = vector.broadcast %100 : vector<1x32xf32> to vector<16x32xf32>
    %123 = arith.mulf %121, %122 : vector<16x32xf32>
    %124 = vector.broadcast %101 : vector<1x32xf32> to vector<16x32xf32>
    %125 = arith.addf %123, %124 : vector<16x32xf32>
    %c0_49 = arith.constant 0 : index
    %c0_50 = arith.constant 0 : index
    %126 = vector.load %arg26[%c0_49, %c0_50] : memref<32x32xf32, #tpu.memory_space<vmem>>, vector<32x32xf32>
    %c0_51 = arith.constant 0 : index
    %c0_52 = arith.constant 0 : index
    %c0_53 = arith.constant 0 : index
    %127 = vector.load %arg12[%c0_51, %c0_52, %c0_53] : memref<1x32x32xf32, #tpu.memory_space<vmem>>, vector<1x32x32xf32>
    %128 = vector.shape_cast %127 : vector<1x32x32xf32> to vector<32x32xf32>
    %cst_54 = arith.constant dense<0.000000e+00> : vector<16x32xf32>
    %129 = tpu.matmul %125, %128, %cst_54 {dimension_numbers = #tpu.dot_dimension_numbers<[1], [0], [0], [1], [0, 0, 1, 1], [], []>} : vector<16x32xf32>, vector<32x32xf32>, vector<16x32xf32> -> vector<16x32xf32>
    %c0_55 = arith.constant 0 : index
    %c0_56 = arith.constant 0 : index
    %c0_57 = arith.constant 0 : index
    %130 = vector.load %arg13[%c0_55, %c0_56, %c0_57] : memref<1x1x32xf32, #tpu.memory_space<vmem>>, vector<1x1x32xf32>
    %131 = vector.shape_cast %130 : vector<1x1x32xf32> to vector<1x32xf32>
    %132 = vector.broadcast %131 : vector<1x32xf32> to vector<16x32xf32>
    %133 = arith.addf %129, %132 : vector<16x32xf32>
    %134 = vector.shape_cast %133 : vector<16x32xf32> to vector<2x8x32xf32>
    %c0_58 = arith.constant 0 : index
    %c0_59 = arith.constant 0 : index
    %c0_60 = arith.constant 0 : index
    %135 = vector.load %arg14[%c0_58, %c0_59, %c0_60] : memref<1x32x64xf32, #tpu.memory_space<vmem>>, vector<1x32x64xf32>
    %136 = vector.shape_cast %135 : vector<1x32x64xf32> to vector<32x64xf32>
    %cst_61 = arith.constant dense<0.000000e+00> : vector<32x64xf32>
    %137 = tpu.matmul %126, %136, %cst_61 {dimension_numbers = #tpu.dot_dimension_numbers<[1], [0], [0], [1], [0, 0, 1, 1], [], []>} : vector<32x32xf32>, vector<32x64xf32>, vector<32x64xf32> -> vector<32x64xf32>
    %c0_62 = arith.constant 0 : index
    %c0_63 = arith.constant 0 : index
    %c0_64 = arith.constant 0 : index
    %138 = vector.load %arg15[%c0_62, %c0_63, %c0_64] : memref<1x1x64xf32, #tpu.memory_space<vmem>>, vector<1x1x64xf32>
    %139 = vector.shape_cast %138 : vector<1x1x64xf32> to vector<1x64xf32>
    %140 = vector.broadcast %139 : vector<1x64xf32> to vector<32x64xf32>
    %141 = arith.addf %137, %140 : vector<32x64xf32>
    %142 = vector.extract_strided_slice %141 {offsets = [0, 0], sizes = [32, 32], strides = [1, 1]} : vector<32x64xf32> to vector<32x32xf32>
    %143 = vector.shape_cast %142 : vector<32x32xf32> to vector<2x16x32xf32>
    %144 = vector.extract_strided_slice %141 {offsets = [0, 32], sizes = [32, 32], strides = [1, 1]} : vector<32x64xf32> to vector<32x32xf32>
    %145 = vector.shape_cast %144 : vector<32x32xf32> to vector<2x16x32xf32>
    %146 = vector.extract_strided_slice %134 {offsets = [0, 0, 0], sizes = [2, 8, 8], strides = [1, 1, 1]} : vector<2x8x32xf32> to vector<2x8x8xf32>
    %147 = vector.extract_strided_slice %143 {offsets = [0, 0, 0], sizes = [2, 16, 8], strides = [1, 1, 1]} : vector<2x16x32xf32> to vector<2x16x8xf32>
    %148 = vector.extract_strided_slice %145 {offsets = [0, 0, 0], sizes = [2, 16, 8], strides = [1, 1, 1]} : vector<2x16x32xf32> to vector<2x16x8xf32>
    "tpu.trace_start"() <{level = 10 : i32, message = "bqd,bkd->bqk"}> : () -> ()
    %cst_65 = arith.constant dense<0.000000e+00> : vector<2x8x16xf32>
    %149 = tpu.matmul %146, %147, %cst_65 {dimension_numbers = #tpu.dot_dimension_numbers<[2], [2], [1], [1], [0, 0, 0, 1, 1, 1], [0], [0]>} : vector<2x8x8xf32>, vector<2x16x8xf32>, vector<2x8x16xf32> -> vector<2x8x16xf32>
    "tpu.trace_stop"() : () -> ()
    %cst_66 = arith.constant 0.353553385 : f32
    %150 = vector.broadcast %cst_66 : f32 to vector<2x8x16xf32>
    %151 = arith.mulf %149, %150 : vector<2x8x16xf32>
    %cst_67 = arith.constant dense<0xFF800000> : vector<2x8xf32>
    %152 = vector.multi_reduction <maximumf>, %151, %cst_67 [2] : vector<2x8x16xf32> to vector<2x8xf32>
    %153 = vector.shape_cast %152 : vector<2x8xf32> to vector<2x8x1xf32>
    %154 = vector.broadcast %153 : vector<2x8x1xf32> to vector<2x8x16xf32>
    %155 = arith.subf %151, %154 : vector<2x8x16xf32>
    %156 = math.exp %155 : vector<2x8x16xf32>
    %cst_68 = arith.constant dense<0.000000e+00> : vector<2x8xf32>
    %157 = vector.multi_reduction <add>, %156, %cst_68 [2] : vector<2x8x16xf32> to vector<2x8xf32>
    %158 = vector.shape_cast %157 : vector<2x8xf32> to vector<2x8x1xf32>
    %159 = vector.broadcast %158 : vector<2x8x1xf32> to vector<2x8x16xf32>
    %160 = arith.divf %156, %159 : vector<2x8x16xf32>
    "tpu.trace_start"() <{level = 10 : i32, message = "bqk,bkd->bqd"}> : () -> ()
    %cst_69 = arith.constant dense<0.000000e+00> : vector<2x8x8xf32>
    %161 = tpu.matmul %160, %148, %cst_69 {dimension_numbers = #tpu.dot_dimension_numbers<[2], [1], [1], [2], [0, 0, 0, 1, 1, 2], [0], [0]>} : vector<2x8x16xf32>, vector<2x16x8xf32>, vector<2x8x8xf32> -> vector<2x8x8xf32>
    "tpu.trace_stop"() : () -> ()
    %162 = vector.extract_strided_slice %134 {offsets = [0, 0, 8], sizes = [2, 8, 8], strides = [1, 1, 1]} : vector<2x8x32xf32> to vector<2x8x8xf32>
    %163 = vector.extract_strided_slice %143 {offsets = [0, 0, 8], sizes = [2, 16, 8], strides = [1, 1, 1]} : vector<2x16x32xf32> to vector<2x16x8xf32>
    %164 = vector.extract_strided_slice %145 {offsets = [0, 0, 8], sizes = [2, 16, 8], strides = [1, 1, 1]} : vector<2x16x32xf32> to vector<2x16x8xf32>
    "tpu.trace_start"() <{level = 10 : i32, message = "bqd,bkd->bqk"}> : () -> ()
    %cst_70 = arith.constant dense<0.000000e+00> : vector<2x8x16xf32>
    %165 = tpu.matmul %162, %163, %cst_70 {dimension_numbers = #tpu.dot_dimension_numbers<[2], [2], [1], [1], [0, 0, 0, 1, 1, 1], [0], [0]>} : vector<2x8x8xf32>, vector<2x16x8xf32>, vector<2x8x16xf32> -> vector<2x8x16xf32>
    "tpu.trace_stop"() : () -> ()
    %cst_71 = arith.constant 0.353553385 : f32
    %166 = vector.broadcast %cst_71 : f32 to vector<2x8x16xf32>
    %167 = arith.mulf %165, %166 : vector<2x8x16xf32>
    %cst_72 = arith.constant dense<0xFF800000> : vector<2x8xf32>
    %168 = vector.multi_reduction <maximumf>, %167, %cst_72 [2] : vector<2x8x16xf32> to vector<2x8xf32>
    %169 = vector.shape_cast %168 : vector<2x8xf32> to vector<2x8x1xf32>
    %170 = vector.broadcast %169 : vector<2x8x1xf32> to vector<2x8x16xf32>
    %171 = arith.subf %167, %170 : vector<2x8x16xf32>
    %172 = math.exp %171 : vector<2x8x16xf32>
    %cst_73 = arith.constant dense<0.000000e+00> : vector<2x8xf32>
    %173 = vector.multi_reduction <add>, %172, %cst_73 [2] : vector<2x8x16xf32> to vector<2x8xf32>
    %174 = vector.shape_cast %173 : vector<2x8xf32> to vector<2x8x1xf32>
    %175 = vector.broadcast %174 : vector<2x8x1xf32> to vector<2x8x16xf32>
    %176 = arith.divf %172, %175 : vector<2x8x16xf32>
    "tpu.trace_start"() <{level = 10 : i32, message = "bqk,bkd->bqd"}> : () -> ()
    %cst_74 = arith.constant dense<0.000000e+00> : vector<2x8x8xf32>
    %177 = tpu.matmul %176, %164, %cst_74 {dimension_numbers = #tpu.dot_dimension_numbers<[2], [1], [1], [2], [0, 0, 0, 1, 1, 2], [0], [0]>} : vector<2x8x16xf32>, vector<2x16x8xf32>, vector<2x8x8xf32> -> vector<2x8x8xf32>
    "tpu.trace_stop"() : () -> ()
    %178 = vector.extract_strided_slice %134 {offsets = [0, 0, 16], sizes = [2, 8, 8], strides = [1, 1, 1]} : vector<2x8x32xf32> to vector<2x8x8xf32>
    %179 = vector.extract_strided_slice %143 {offsets = [0, 0, 16], sizes = [2, 16, 8], strides = [1, 1, 1]} : vector<2x16x32xf32> to vector<2x16x8xf32>
    %180 = vector.extract_strided_slice %145 {offsets = [0, 0, 16], sizes = [2, 16, 8], strides = [1, 1, 1]} : vector<2x16x32xf32> to vector<2x16x8xf32>
    "tpu.trace_start"() <{level = 10 : i32, message = "bqd,bkd->bqk"}> : () -> ()
    %cst_75 = arith.constant dense<0.000000e+00> : vector<2x8x16xf32>
    %181 = tpu.matmul %178, %179, %cst_75 {dimension_numbers = #tpu.dot_dimension_numbers<[2], [2], [1], [1], [0, 0, 0, 1, 1, 1], [0], [0]>} : vector<2x8x8xf32>, vector<2x16x8xf32>, vector<2x8x16xf32> -> vector<2x8x16xf32>
    "tpu.trace_stop"() : () -> ()
    %cst_76 = arith.constant 0.353553385 : f32
    %182 = vector.broadcast %cst_76 : f32 to vector<2x8x16xf32>
    %183 = arith.mulf %181, %182 : vector<2x8x16xf32>
    %cst_77 = arith.constant dense<0xFF800000> : vector<2x8xf32>
    %184 = vector.multi_reduction <maximumf>, %183, %cst_77 [2] : vector<2x8x16xf32> to vector<2x8xf32>
    %185 = vector.shape_cast %184 : vector<2x8xf32> to vector<2x8x1xf32>
    %186 = vector.broadcast %185 : vector<2x8x1xf32> to vector<2x8x16xf32>
    %187 = arith.subf %183, %186 : vector<2x8x16xf32>
    %188 = math.exp %187 : vector<2x8x16xf32>
    %cst_78 = arith.constant dense<0.000000e+00> : vector<2x8xf32>
    %189 = vector.multi_reduction <add>, %188, %cst_78 [2] : vector<2x8x16xf32> to vector<2x8xf32>
    %190 = vector.shape_cast %189 : vector<2x8xf32> to vector<2x8x1xf32>
    %191 = vector.broadcast %190 : vector<2x8x1xf32> to vector<2x8x16xf32>
    %192 = arith.divf %188, %191 : vector<2x8x16xf32>
    "tpu.trace_start"() <{level = 10 : i32, message = "bqk,bkd->bqd"}> : () -> ()
    %cst_79 = arith.constant dense<0.000000e+00> : vector<2x8x8xf32>
    %193 = tpu.matmul %192, %180, %cst_79 {dimension_numbers = #tpu.dot_dimension_numbers<[2], [1], [1], [2], [0, 0, 0, 1, 1, 2], [0], [0]>} : vector<2x8x16xf32>, vector<2x16x8xf32>, vector<2x8x8xf32> -> vector<2x8x8xf32>
    "tpu.trace_stop"() : () -> ()
    %194 = vector.extract_strided_slice %134 {offsets = [0, 0, 24], sizes = [2, 8, 8], strides = [1, 1, 1]} : vector<2x8x32xf32> to vector<2x8x8xf32>
    %195 = vector.extract_strided_slice %143 {offsets = [0, 0, 24], sizes = [2, 16, 8], strides = [1, 1, 1]} : vector<2x16x32xf32> to vector<2x16x8xf32>
    %196 = vector.extract_strided_slice %145 {offsets = [0, 0, 24], sizes = [2, 16, 8], strides = [1, 1, 1]} : vector<2x16x32xf32> to vector<2x16x8xf32>
    "tpu.trace_start"() <{level = 10 : i32, message = "bqd,bkd->bqk"}> : () -> ()
    %cst_80 = arith.constant dense<0.000000e+00> : vector<2x8x16xf32>
    %197 = tpu.matmul %194, %195, %cst_80 {dimension_numbers = #tpu.dot_dimension_numbers<[2], [2], [1], [1], [0, 0, 0, 1, 1, 1], [0], [0]>} : vector<2x8x8xf32>, vector<2x16x8xf32>, vector<2x8x16xf32> -> vector<2x8x16xf32>
    "tpu.trace_stop"() : () -> ()
    %cst_81 = arith.constant 0.353553385 : f32
    %198 = vector.broadcast %cst_81 : f32 to vector<2x8x16xf32>
    %199 = arith.mulf %197, %198 : vector<2x8x16xf32>
    %cst_82 = arith.constant dense<0xFF800000> : vector<2x8xf32>
    %200 = vector.multi_reduction <maximumf>, %199, %cst_82 [2] : vector<2x8x16xf32> to vector<2x8xf32>
    %201 = vector.shape_cast %200 : vector<2x8xf32> to vector<2x8x1xf32>
    %202 = vector.broadcast %201 : vector<2x8x1xf32> to vector<2x8x16xf32>
    %203 = arith.subf %199, %202 : vector<2x8x16xf32>
    %204 = math.exp %203 : vector<2x8x16xf32>
    %cst_83 = arith.constant dense<0.000000e+00> : vector<2x8xf32>
    %205 = vector.multi_reduction <add>, %204, %cst_83 [2] : vector<2x8x16xf32> to vector<2x8xf32>
    %206 = vector.shape_cast %205 : vector<2x8xf32> to vector<2x8x1xf32>
    %207 = vector.broadcast %206 : vector<2x8x1xf32> to vector<2x8x16xf32>
    %208 = arith.divf %204, %207 : vector<2x8x16xf32>
    "tpu.trace_start"() <{level = 10 : i32, message = "bqk,bkd->bqd"}> : () -> ()
    %cst_84 = arith.constant dense<0.000000e+00> : vector<2x8x8xf32>
    %209 = tpu.matmul %208, %196, %cst_84 {dimension_numbers = #tpu.dot_dimension_numbers<[2], [1], [1], [2], [0, 0, 0, 1, 1, 2], [0], [0]>} : vector<2x8x16xf32>, vector<2x16x8xf32>, vector<2x8x8xf32> -> vector<2x8x8xf32>
    "tpu.trace_stop"() : () -> ()
    %210 = tpu.concatenate %161, %177, %193, %209 in 2 : vector<2x8x8xf32>, vector<2x8x8xf32>, vector<2x8x8xf32>, vector<2x8x8xf32> -> vector<2x8x32xf32>
    %211 = vector.shape_cast %210 : vector<2x8x32xf32> to vector<16x32xf32>
    %c0_85 = arith.constant 0 : index
    %c0_86 = arith.constant 0 : index
    %c0_87 = arith.constant 0 : index
    %212 = vector.load %arg16[%c0_85, %c0_86, %c0_87] : memref<1x32x32xf32, #tpu.memory_space<vmem>>, vector<1x32x32xf32>
    %213 = vector.shape_cast %212 : vector<1x32x32xf32> to vector<32x32xf32>
    %cst_88 = arith.constant dense<0.000000e+00> : vector<16x32xf32>
    %214 = tpu.matmul %211, %213, %cst_88 {dimension_numbers = #tpu.dot_dimension_numbers<[1], [0], [0], [1], [0, 0, 1, 1], [], []>} : vector<16x32xf32>, vector<32x32xf32>, vector<16x32xf32> -> vector<16x32xf32>
    %c0_89 = arith.constant 0 : index
    %c0_90 = arith.constant 0 : index
    %c0_91 = arith.constant 0 : index
    %215 = vector.load %arg17[%c0_89, %c0_90, %c0_91] : memref<1x1x32xf32, #tpu.memory_space<vmem>>, vector<1x1x32xf32>
    %216 = vector.shape_cast %215 : vector<1x1x32xf32> to vector<1x32xf32>
    %217 = vector.broadcast %216 : vector<1x32xf32> to vector<16x32xf32>
    %218 = arith.addf %214, %217 : vector<16x32xf32>
    %219 = arith.addf %125, %218 : vector<16x32xf32>
    %220 = vector.extract_strided_slice %4 {offsets = [1, 0], sizes = [1, 32], strides = [1, 1]} : vector<3x32xf32> to vector<1x32xf32>
    %221 = vector.extract_strided_slice %6 {offsets = [1, 0], sizes = [1, 32], strides = [1, 1]} : vector<3x32xf32> to vector<1x32xf32>
    %cst_92 = arith.constant dense<0.000000e+00> : vector<16xf32>
    %222 = vector.multi_reduction <add>, %219, %cst_92 [1] : vector<16x32xf32> to vector<16xf32>
    %223 = vector.shape_cast %222 : vector<16xf32> to vector<16x1xf32>
    %cst_93 = arith.constant 3.200000e+01 : f32
    %224 = vector.broadcast %cst_93 : f32 to vector<16x1xf32>
    %225 = arith.divf %223, %224 : vector<16x1xf32>
    %226 = vector.broadcast %225 : vector<16x1xf32> to vector<16x32xf32>
    %227 = arith.subf %219, %226 : vector<16x32xf32>
    %228 = vector.broadcast %225 : vector<16x1xf32> to vector<16x32xf32>
    %229 = arith.subf %219, %228 : vector<16x32xf32>
    %230 = arith.mulf %227, %229 : vector<16x32xf32>
    %cst_94 = arith.constant dense<0.000000e+00> : vector<16xf32>
    %231 = vector.multi_reduction <add>, %230, %cst_94 [1] : vector<16x32xf32> to vector<16xf32>
    %232 = vector.shape_cast %231 : vector<16xf32> to vector<16x1xf32>
    %cst_95 = arith.constant 3.200000e+01 : f32
    %233 = vector.broadcast %cst_95 : f32 to vector<16x1xf32>
    %234 = arith.divf %232, %233 : vector<16x1xf32>
    %235 = vector.broadcast %225 : vector<16x1xf32> to vector<16x32xf32>
    %236 = arith.subf %219, %235 : vector<16x32xf32>
    %cst_96 = arith.constant 9.99999974E-6 : f32
    %237 = vector.broadcast %cst_96 : f32 to vector<16x1xf32>
    %238 = arith.addf %234, %237 : vector<16x1xf32>
    %239 = math.rsqrt %238 : vector<16x1xf32>
    %240 = vector.broadcast %239 : vector<16x1xf32> to vector<16x32xf32>
    %241 = arith.mulf %236, %240 : vector<16x32xf32>
    %242 = vector.broadcast %220 : vector<1x32xf32> to vector<16x32xf32>
    %243 = arith.mulf %241, %242 : vector<16x32xf32>
    %244 = vector.broadcast %221 : vector<1x32xf32> to vector<16x32xf32>
    %245 = arith.addf %243, %244 : vector<16x32xf32>
    %c0_97 = arith.constant 0 : index
    %c0_98 = arith.constant 0 : index
    %c0_99 = arith.constant 0 : index
    %246 = vector.load %arg18[%c0_97, %c0_98, %c0_99] : memref<1x32x64xf32, #tpu.memory_space<vmem>>, vector<1x32x64xf32>
    %247 = vector.shape_cast %246 : vector<1x32x64xf32> to vector<32x64xf32>
    %cst_100 = arith.constant dense<0.000000e+00> : vector<16x64xf32>
    %248 = tpu.matmul %245, %247, %cst_100 {dimension_numbers = #tpu.dot_dimension_numbers<[1], [0], [0], [1], [0, 0, 1, 1], [], []>} : vector<16x32xf32>, vector<32x64xf32>, vector<16x64xf32> -> vector<16x64xf32>
    %c0_101 = arith.constant 0 : index
    %c0_102 = arith.constant 0 : index
    %c0_103 = arith.constant 0 : index
    %249 = vector.load %arg19[%c0_101, %c0_102, %c0_103] : memref<1x1x64xf32, #tpu.memory_space<vmem>>, vector<1x1x64xf32>
    %250 = vector.shape_cast %249 : vector<1x1x64xf32> to vector<1x64xf32>
    %251 = vector.broadcast %250 : vector<1x64xf32> to vector<16x64xf32>
    %252 = arith.addf %248, %251 : vector<16x64xf32>
    %cst_104 = arith.constant 0.000000e+00 : f32
    %253 = vector.broadcast %cst_104 : f32 to vector<16x64xf32>
    %254 = arith.maximumf %252, %253 : vector<16x64xf32>
    %c0_105 = arith.constant 0 : index
    %c0_106 = arith.constant 0 : index
    %c0_107 = arith.constant 0 : index
    %255 = vector.load %arg20[%c0_105, %c0_106, %c0_107] : memref<1x64x32xf32, #tpu.memory_space<vmem>>, vector<1x64x32xf32>
    %256 = vector.shape_cast %255 : vector<1x64x32xf32> to vector<64x32xf32>
    %cst_108 = arith.constant dense<0.000000e+00> : vector<16x32xf32>
    %257 = tpu.matmul %254, %256, %cst_108 {dimension_numbers = #tpu.dot_dimension_numbers<[1], [0], [0], [1], [0, 0, 1, 1], [], []>} : vector<16x64xf32>, vector<64x32xf32>, vector<16x32xf32> -> vector<16x32xf32>
    %c0_109 = arith.constant 0 : index
    %c0_110 = arith.constant 0 : index
    %c0_111 = arith.constant 0 : index
    %258 = vector.load %arg21[%c0_109, %c0_110, %c0_111] : memref<1x1x32xf32, #tpu.memory_space<vmem>>, vector<1x1x32xf32>
    %259 = vector.shape_cast %258 : vector<1x1x32xf32> to vector<1x32xf32>
    %260 = vector.broadcast %259 : vector<1x32xf32> to vector<16x32xf32>
    %261 = arith.addf %257, %260 : vector<16x32xf32>
    %262 = arith.addf %245, %261 : vector<16x32xf32>
    %263 = vector.extract_strided_slice %4 {offsets = [2, 0], sizes = [1, 32], strides = [1, 1]} : vector<3x32xf32> to vector<1x32xf32>
    %264 = vector.extract_strided_slice %6 {offsets = [2, 0], sizes = [1, 32], strides = [1, 1]} : vector<3x32xf32> to vector<1x32xf32>
    %cst_112 = arith.constant dense<0.000000e+00> : vector<16xf32>
    %265 = vector.multi_reduction <add>, %262, %cst_112 [1] : vector<16x32xf32> to vector<16xf32>
    %266 = vector.shape_cast %265 : vector<16xf32> to vector<16x1xf32>
    %cst_113 = arith.constant 3.200000e+01 : f32
    %267 = vector.broadcast %cst_113 : f32 to vector<16x1xf32>
    %268 = arith.divf %266, %267 : vector<16x1xf32>
    %269 = vector.broadcast %268 : vector<16x1xf32> to vector<16x32xf32>
    %270 = arith.subf %262, %269 : vector<16x32xf32>
    %271 = vector.broadcast %268 : vector<16x1xf32> to vector<16x32xf32>
    %272 = arith.subf %262, %271 : vector<16x32xf32>
    %273 = arith.mulf %270, %272 : vector<16x32xf32>
    %cst_114 = arith.constant dense<0.000000e+00> : vector<16xf32>
    %274 = vector.multi_reduction <add>, %273, %cst_114 [1] : vector<16x32xf32> to vector<16xf32>
    %275 = vector.shape_cast %274 : vector<16xf32> to vector<16x1xf32>
    %cst_115 = arith.constant 3.200000e+01 : f32
    %276 = vector.broadcast %cst_115 : f32 to vector<16x1xf32>
    %277 = arith.divf %275, %276 : vector<16x1xf32>
    %278 = vector.broadcast %268 : vector<16x1xf32> to vector<16x32xf32>
    %279 = arith.subf %262, %278 : vector<16x32xf32>
    %cst_116 = arith.constant 9.99999974E-6 : f32
    %280 = vector.broadcast %cst_116 : f32 to vector<16x1xf32>
    %281 = arith.addf %277, %280 : vector<16x1xf32>
    %282 = math.rsqrt %281 : vector<16x1xf32>
    %283 = vector.broadcast %282 : vector<16x1xf32> to vector<16x32xf32>
    %284 = arith.mulf %279, %283 : vector<16x32xf32>
    %285 = vector.broadcast %263 : vector<1x32xf32> to vector<16x32xf32>
    %286 = arith.mulf %284, %285 : vector<16x32xf32>
    %287 = vector.broadcast %264 : vector<1x32xf32> to vector<16x32xf32>
    %288 = arith.addf %286, %287 : vector<16x32xf32>
    %c0_117 = arith.constant 0 : index
    %c0_118 = arith.constant 0 : index
    %289 = vector.load %arg25[%c0_117, %c0_118] : memref<16x32xf32, #tpu.memory_space<vmem>>, vector<16x32xf32>
    tpu.vector_store %arg25[%c0_117, %c0_118], %288 {strides = array<i32>} : memref<16x32xf32, #tpu.memory_space<vmem>>, vector<16x32xf32>,
    %c1_i32 = arith.constant 1 : i32
    %290 = arith.cmpi eq, %arg0, %c1_i32 : i32
    %291 = arith.extui %290 : i1 to i32
    %c0_i32_119 = arith.constant 0 : i32
    %292 = arith.cmpi ne, %291, %c0_i32_119 : i32
    scf.if %292 {
      %c0_120 = arith.constant 0 : index
      %c0_121 = arith.constant 0 : index
      %293 = vector.load %arg6[%c0_120, %c0_121] : memref<128x32xf32, #tpu.memory_space<vmem>>, vector<128x32xf32>
      %cst_122 = arith.constant dense<0.000000e+00> : vector<16x128xf32>
      %294 = tpu.matmul %288, %293, %cst_122 {dimension_numbers = #tpu.dot_dimension_numbers<[1], [1], [0], [0], [0, 0, 1, 0], [], []>} : vector<16x32xf32>, vector<128x32xf32>, vector<16x128xf32> -> vector<16x128xf32>
      %c0_123 = arith.constant 0 : index
      %c0_124 = arith.constant 0 : index
      %295 = vector.load %arg7[%c0_123, %c0_124] : memref<1x128xf32, #tpu.memory_space<vmem>>, vector<1x128xf32>
      %296 = vector.broadcast %295 : vector<1x128xf32> to vector<16x128xf32>
      %297 = arith.addf %294, %296 : vector<16x128xf32>
      %298 = tpu.iota {dimensions = array<i32: 1>} : vector<16x128xi32>
      %c21_i32 = arith.constant 21 : i32
      %299 = vector.broadcast %c21_i32 : i32 to vector<16x128xi32>
      %300 = arith.cmpi slt, %298, %299 : vector<16x128xi32>
      %cst_125 = arith.constant -1.000000e+30 : f32
      %301 = vector.broadcast %cst_125 : f32 to vector<16x128xf32>
      %302 = arith.select %300, %297, %301 : vector<16x128xi1>, vector<16x128xf32>
      %cst_126 = arith.constant dense<0xFF800000> : vector<16xf32>
      %303 = vector.multi_reduction <maximumf>, %302, %cst_126 [1] : vector<16x128xf32> to vector<16xf32>
      %304 = vector.shape_cast %303 : vector<16xf32> to vector<16x1xf32>
      %305 = vector.broadcast %304 : vector<16x1xf32> to vector<16x128xf32>
      %306 = arith.subf %302, %305 : vector<16x128xf32>
      %307 = math.exp %306 : vector<16x128xf32>
      %cst_127 = arith.constant dense<0.000000e+00> : vector<16xf32>
      %308 = vector.multi_reduction <add>, %307, %cst_127 [1] : vector<16x128xf32> to vector<16xf32>
      %309 = vector.shape_cast %308 : vector<16xf32> to vector<16x1xf32>
      %310 = math.log %309 : vector<16x1xf32>
      %311 = arith.addf %310, %304 : vector<16x1xf32>
      %312 = vector.broadcast %311 : vector<16x1xf32> to vector<16x128xf32>
      %313 = arith.subf %302, %312 : vector<16x128xf32>
      %314 = vector.shape_cast %313 : vector<16x128xf32> to vector<2x8x128xf32>
      %c0_128 = arith.constant 0 : index
      %c0_129 = arith.constant 0 : index
      %c0_130 = arith.constant 0 : index
      %315 = vector.load %arg24[%c0_128, %c0_129, %c0_130] : memref<2x8x128xf32, #tpu.memory_space<vmem>>, vector<2x8x128xf32>
      tpu.vector_store %arg24[%c0_128, %c0_129, %c0_130], %314 {strides = array<i32>} : memref<2x8x128xf32, #tpu.memory_space<vmem>>, vector<2x8x128xf32>,
    } else {
    }
    return
  }
  func.func @transform_0(%arg0: i32) -> (i32, i32, i32) {
    %c0_i32 = arith.constant 0 : i32
    %c0_i32_0 = arith.constant 0 : i32
    %c0_i32_1 = arith.constant 0 : i32
    %c0_i32_2 = arith.constant 0 : i32
    return %c0_i32, %c0_i32_0, %c0_i32_1 : i32, i32, i32
  }
  func.func @transform_1(%arg0: i32) -> (i32, i32, i32) {
    %c0_i32 = arith.constant 0 : i32
    %c0_i32_0 = arith.constant 0 : i32
    %c0_i32_1 = arith.constant 0 : i32
    %c0_i32_2 = arith.constant 0 : i32
    return %c0_i32, %c0_i32_0, %c0_i32_1 : i32, i32, i32
  }
  func.func @transform_2(%arg0: i32) -> (i32, i32) {
    %c0_i32 = arith.constant 0 : i32
    %c0_i32_0 = arith.constant 0 : i32
    %c0_i32_1 = arith.constant 0 : i32
    return %c0_i32, %c0_i32_0 : i32, i32
  }
  func.func @transform_3(%arg0: i32) -> (i32, i32) {
    %c0_i32 = arith.constant 0 : i32
    %c0_i32_0 = arith.constant 0 : i32
    %c0_i32_1 = arith.constant 0 : i32
    return %c0_i32, %c0_i32_0 : i32, i32
  }
  func.func @transform_4(%arg0: i32) -> (i32, i32, i32) {
    %c0_i32 = arith.constant 0 : i32
    %c0_i32_0 = arith.constant 0 : i32
    %c0_i32_1 = arith.constant 0 : i32
    %c0_i32_2 = arith.constant 0 : i32
    return %c0_i32, %c0_i32_0, %c0_i32_1 : i32, i32, i32
  }
  func.func @transform_5(%arg0: i32) -> (i32, i32) {
    %c0_i32 = arith.constant 0 : i32
    %c0_i32_0 = arith.constant 0 : i32
    %c0_i32_1 = arith.constant 0 : i32
    return %c0_i32, %c0_i32_0 : i32, i32
  }
  func.func @transform_6(%arg0: i32) -> (i32, i32) {
    %c0_i32 = arith.constant 0 : i32
    %c0_i32_0 = arith.constant 0 : i32
    %c0_i32_1 = arith.constant 0 : i32
    return %c0_i32, %c0_i32_0 : i32, i32
  }
  func.func @transform_7(%arg0: i32) -> (i32, i32, i32) {
    %c0_i32 = arith.constant 0 : i32
    %c0_i32_0 = arith.constant 0 : i32
    %c0_i32_1 = arith.constant 0 : i32
    return %arg0, %c0_i32, %c0_i32_0 : i32, i32, i32
  }
  func.func @transform_8(%arg0: i32) -> (i32, i32, i32) {
    %c0_i32 = arith.constant 0 : i32
    %c0_i32_0 = arith.constant 0 : i32
    %c0_i32_1 = arith.constant 0 : i32
    return %arg0, %c0_i32, %c0_i32_0 : i32, i32, i32
  }
  func.func @transform_9(%arg0: i32) -> (i32, i32, i32) {
    %c0_i32 = arith.constant 0 : i32
    %c0_i32_0 = arith.constant 0 : i32
    %c0_i32_1 = arith.constant 0 : i32
    return %arg0, %c0_i32, %c0_i32_0 : i32, i32, i32
  }
  func.func @transform_10(%arg0: i32) -> (i32, i32, i32) {
    %c0_i32 = arith.constant 0 : i32
    %c0_i32_0 = arith.constant 0 : i32
    %c0_i32_1 = arith.constant 0 : i32
    return %arg0, %c0_i32, %c0_i32_0 : i32, i32, i32
  }
  func.func @transform_11(%arg0: i32) -> (i32, i32, i32) {
    %c0_i32 = arith.constant 0 : i32
    %c0_i32_0 = arith.constant 0 : i32
    %c0_i32_1 = arith.constant 0 : i32
    return %arg0, %c0_i32, %c0_i32_0 : i32, i32, i32
  }
  func.func @transform_12(%arg0: i32) -> (i32, i32, i32) {
    %c0_i32 = arith.constant 0 : i32
    %c0_i32_0 = arith.constant 0 : i32
    %c0_i32_1 = arith.constant 0 : i32
    return %arg0, %c0_i32, %c0_i32_0 : i32, i32, i32
  }
  func.func @transform_13(%arg0: i32) -> (i32, i32, i32) {
    %c0_i32 = arith.constant 0 : i32
    %c0_i32_0 = arith.constant 0 : i32
    %c0_i32_1 = arith.constant 0 : i32
    return %arg0, %c0_i32, %c0_i32_0 : i32, i32, i32
  }
  func.func @transform_14(%arg0: i32) -> (i32, i32, i32) {
    %c0_i32 = arith.constant 0 : i32
    %c0_i32_0 = arith.constant 0 : i32
    %c0_i32_1 = arith.constant 0 : i32
    return %arg0, %c0_i32, %c0_i32_0 : i32, i32, i32
  }
  func.func @transform_15(%arg0: i32) -> (i32, i32, i32) {
    %c0_i32 = arith.constant 0 : i32
    %c0_i32_0 = arith.constant 0 : i32
    %c0_i32_1 = arith.constant 0 : i32
    return %arg0, %c0_i32, %c0_i32_0 : i32, i32, i32
  }
  func.func @transform_16(%arg0: i32) -> (i32, i32, i32) {
    %c0_i32 = arith.constant 0 : i32
    %c0_i32_0 = arith.constant 0 : i32
    %c0_i32_1 = arith.constant 0 : i32
    return %arg0, %c0_i32, %c0_i32_0 : i32, i32, i32
  }
  func.func @transform_17(%arg0: i32) -> (i32, i32, i32) {
    %c0_i32 = arith.constant 0 : i32
    %c0_i32_0 = arith.constant 0 : i32
    %c0_i32_1 = arith.constant 0 : i32
    return %arg0, %c0_i32, %c0_i32_0 : i32, i32, i32
  }
  func.func @transform_18(%arg0: i32) -> (i32, i32, i32) {
    %c0_i32 = arith.constant 0 : i32
    %c0_i32_0 = arith.constant 0 : i32
    %c0_i32_1 = arith.constant 0 : i32
    return %arg0, %c0_i32, %c0_i32_0 : i32, i32, i32
  }
  func.func @transform_19(%arg0: i32) -> (i32, i32, i32) {
    %c0_i32 = arith.constant 0 : i32
    %c0_i32_0 = arith.constant 0 : i32
    %c0_i32_1 = arith.constant 0 : i32
    return %arg0, %c0_i32, %c0_i32_0 : i32, i32, i32
  }
  func.func @transform_20(%arg0: i32) -> (i32, i32, i32) {
    %c0_i32 = arith.constant 0 : i32
    %c0_i32_0 = arith.constant 0 : i32
    %c0_i32_1 = arith.constant 0 : i32
    return %arg0, %c0_i32, %c0_i32_0 : i32, i32, i32
  }
  func.func @transform_21(%arg0: i32) -> (i32, i32, i32) {
    %c0_i32 = arith.constant 0 : i32
    %c0_i32_0 = arith.constant 0 : i32
    %c0_i32_1 = arith.constant 0 : i32
    return %arg0, %c0_i32, %c0_i32_0 : i32, i32, i32
  }
  func.func @transform_22(%arg0: i32) -> (i32, i32, i32) {
    %c0_i32 = arith.constant 0 : i32
    %c0_i32_0 = arith.constant 0 : i32
    %c0_i32_1 = arith.constant 0 : i32
    return %arg0, %c0_i32, %c0_i32_0 : i32, i32, i32
  }
  func.func @transform_23(%arg0: i32) -> (i32, i32, i32) {
    %c0_i32 = arith.constant 0 : i32
    %c0_i32_0 = arith.constant 0 : i32
    %c0_i32_1 = arith.constant 0 : i32
    %c0_i32_2 = arith.constant 0 : i32
    return %c0_i32, %c0_i32_0, %c0_i32_1 : i32, i32, i32
  }
}

</mosaic_0001>

<llo_original>
// kernel: forward.1
$region0: #{forward.1}
  #allocation0 [shape = 'u32[]', space=smem, size = 0x4, offset = 0x4, fixed_abs, tag = 'smem constant byte address 0x4 - core index']
  #allocation1 [shape = 'u32[72,128]{1,0:T(1,128)}', space=vmem, size = 0x9000, scoped, tag = 'internal scratch']
  #allocation2 [shape = 'f32[16,32]{1,0:T(8,128)}', space=vmem, size = 0x2000, scoped, tag = 'scratch operand']
  #allocation3 [shape = 'f32[32,32]{1,0:T(8,128)}', space=vmem, size = 0x4000, scoped, tag = 'scratch operand']
  %s0 = inlined_call_operand.vmem [shape: f32[2,8,32], index: 0, kind: input, shape index: {}]
  %s1 = inlined_call_operand.vmem [shape: f32[2,16,32], index: 1, kind: input, shape index: {}]
  %s2 = inlined_call_operand.vmem [shape: f32[32,32], index: 2, kind: input, shape index: {}]
  %s3 = inlined_call_operand.vmem [shape: f32[1,32], index: 3, kind: input, shape index: {}]
  %s4 = inlined_call_operand.vmem [shape: f32[2,8,8], index: 4, kind: input, shape index: {}]
  %s5 = inlined_call_operand.vmem [shape: f32[128,32], index: 5, kind: input, shape index: {}]
  %s6 = inlined_call_operand.vmem [shape: f32[1,128], index: 6, kind: input, shape index: {}]
  %s7 = inlined_call_operand.vmem [shape: f32[2,32,96], index: 7, kind: input, shape index: {}]
  %s8 = inlined_call_operand.vmem [shape: f32[2,1,96], index: 8, kind: input, shape index: {}]
  %s9 = inlined_call_operand.vmem [shape: f32[2,32,32], index: 9, kind: input, shape index: {}]
  %s10 = inlined_call_operand.vmem [shape: f32[2,1,32], index: 10, kind: input, shape index: {}]
  %s11 = inlined_call_operand.vmem [shape: f32[2,32,32], index: 11, kind: input, shape index: {}]
  %s12 = inlined_call_operand.vmem [shape: f32[2,1,32], index: 12, kind: input, shape index: {}]
  %s13 = inlined_call_operand.vmem [shape: f32[2,32,64], index: 13, kind: input, shape index: {}]
  %s14 = inlined_call_operand.vmem [shape: f32[2,1,64], index: 14, kind: input, shape index: {}]
  %s15 = inlined_call_operand.vmem [shape: f32[2,32,32], index: 15, kind: input, shape index: {}]
  %s16 = inlined_call_operand.vmem [shape: f32[2,1,32], index: 16, kind: input, shape index: {}]
  %s17 = inlined_call_operand.vmem [shape: f32[2,32,64], index: 17, kind: input, shape index: {}]
  %s18 = inlined_call_operand.vmem [shape: f32[2,1,64], index: 18, kind: input, shape index: {}]
  %s19 = inlined_call_operand.vmem [shape: f32[2,64,32], index: 19, kind: input, shape index: {}]
  %s20 = inlined_call_operand.vmem [shape: f32[2,1,32], index: 20, kind: input, shape index: {}]
  %s21 = inlined_call_operand.vmem [shape: f32[2,3,32], index: 21, kind: input, shape index: {}]
  %s22 = inlined_call_operand.vmem [shape: f32[2,3,32], index: 22, kind: input, shape index: {}]
  %s23 = inlined_call_operand.hbm [shape: f32[2,8,128], index: 23, kind: output, shape index: {}]
  %s24 = sld [smem:[#allocation0]]
  $region133: #{forward.1} parent=0
    _
  %s26 = ssub.s32 1, %s24
  %s27 = scalar_select 0, %s26, %s24
  $region1: #{forward.1} parent=0
    #allocation4 [shape = 'u8[8192]{0}', space=vmem, size = 0x2000, scoped, tag = 'output window, operand 0, single buffered']
    #allocation5 [shape = 's32[2]{0}', space=sflag, size = 0x8, scoped, tag = 'scoped memory for forward.1']
    %28 = vsyncpa [#allocation5], 0
    loop: start=0, step=1, limit=4
    $region2: #{forward.1} parent=1 // loop_pre_header
      _
    $region3: #{forward.1} parent=1 // loop_header
      %s30 = sphi 0, %s34
      %p31 = scmp.ge.s32.totalorder %s30, 4
      %s38 = sphi 0, %s38
      %s40 = sphi 0, %s38
      %s41 = sphi 0, %s40
      %s55 = sphi 0, %s41
      %s59 = sphi 0, %s59
      %s61 = sphi 0, %s59
      %s62 = sphi 0, %s61
      %s76 = sphi 0, %s62
      %s80 = sphi 0, %s80
      %s82 = sphi 0, %s80
      %s83 = sphi 0, %s82
      %s97 = sphi 0, %s83
      %s101 = sphi 0, %s101
      %s103 = sphi 0, %s101
      %s104 = sphi 0, %s103
      %s118 = sphi 0, %s104
      %s122 = sphi 0, %s122
      %s124 = sphi 0, %s122
      %s125 = sphi 0, %s124
      %s139 = sphi 0, %s125
      %s143 = sphi 0, %s143
      %s145 = sphi 0, %s143
      %s146 = sphi 0, %s145
      %s160 = sphi 0, %s146
      %s164 = sphi 0, %s164
      %s166 = sphi 0, %s164
      %s167 = sphi 0, %s166
      %s181 = sphi 0, %s167
      %s187 = sphi 0, %s189
      %s190 = sphi 0, %s187
      %s191 = sphi 0, %s190
      %s207 = sphi 0, %s191
      %s213 = sphi 0, %s215
      %s216 = sphi 0, %s213
      %s217 = sphi 0, %s216
      %s233 = sphi 0, %s217
      %s239 = sphi 0, %s241
      %s242 = sphi 0, %s239
      %s243 = sphi 0, %s242
      %s259 = sphi 0, %s243
      %s265 = sphi 0, %s267
      %s268 = sphi 0, %s265
      %s269 = sphi 0, %s268
      %s285 = sphi 0, %s269
      %s291 = sphi 0, %s293
      %s294 = sphi 0, %s291
      %s295 = sphi 0, %s294
      %s311 = sphi 0, %s295
      %s317 = sphi 0, %s319
      %s320 = sphi 0, %s317
      %s321 = sphi 0, %s320
      %s337 = sphi 0, %s321
      %s343 = sphi 0, %s345
      %s346 = sphi 0, %s343
      %s347 = sphi 0, %s346
      %s363 = sphi 0, %s347
      %s369 = sphi 0, %s371
      %s372 = sphi 0, %s369
      %s373 = sphi 0, %s372
      %s389 = sphi 0, %s373
      %s395 = sphi 0, %s397
      %s398 = sphi 0, %s395
      %s399 = sphi 0, %s398
      %s415 = sphi 0, %s399
      %s421 = sphi 0, %s423
      %s424 = sphi 0, %s421
      %s425 = sphi 0, %s424
      %s441 = sphi 0, %s425
      %s447 = sphi 0, %s449
      %s450 = sphi 0, %s447
      %s451 = sphi 0, %s450
      %s467 = sphi 0, %s451
      %s473 = sphi 0, %s475
      %s476 = sphi 0, %s473
      %s477 = sphi 0, %s476
      %s493 = sphi 0, %s477
      %s499 = sphi 0, %s501
      %s502 = sphi 0, %s499
      %s503 = sphi 0, %s502
      %s519 = sphi 0, %s503
      %s525 = sphi 0, %s527
      %s528 = sphi 0, %s525
      %s529 = sphi 0, %s528
      %s545 = sphi 0, %s529
      %s551 = sphi 0, %s553
      %s554 = sphi 0, %s551
      %s555 = sphi 0, %s554
      %s571 = sphi 0, %s555
      %s577 = sphi 0, %s579
      %s580 = sphi 0, %s577
      %s581 = sphi 0, %s580
      %s597 = sphi 0, %s581
      %s601 = sphi 0, %s601
      %s603 = sphi 0, %s601
      %s604 = sphi 0, %s603
      %s618 = sphi 0, %s604
    $region4: #{forward.1} parent=1 // loop_header_branch
      %33 = sbr.rel (%p31) target = $region8
    $region5: #{forward.1} parent=1 // loop_body
      %s35 = ssub.s32 %s30, 1
      %s36 = ssub.s32 %s30, 2
      %s37 = sadd.s32 %s30, 1
      %s39 = sadd.s32 %s38, 1
      %p42 = scmp.eq.s32.totalorder %s30, 1
      %p43 = scmp.ne.s32.totalorder %s38, %s40
      %p44 = scmp.eq.s32.totalorder %s30, 0
      %p45 = por %p43, %p44
      %p46 = scmp.ne.s32.totalorder %s38, %s40
      %p47 = scmp.eq.s32.totalorder %s35, 1
      %p48 = por %p46, %p47
      %p49 = scmp.ne.s32.totalorder %s40, %s41
      %p50 = scmp.eq.s32.totalorder %s35, 0
      %p51 = por %p49, %p50
      %p52 = scmp.ne.s32.totalorder %s40, %s41
      %p53 = scmp.eq.s32.totalorder %s36, 1
      %p54 = por %p52, %p53
      %p56 = scmp.ne.s32.totalorder %s41, %s55
      %p57 = scmp.eq.s32.totalorder %s36, 0
      %p58 = por %p56, %p57
      %s60 = sadd.s32 %s59, 1
      %p63 = scmp.eq.s32.totalorder %s30, 1
      %p64 = scmp.ne.s32.totalorder %s59, %s61
      %p65 = scmp.eq.s32.totalorder %s30, 0
      %p66 = por %p64, %p65
      %p67 = scmp.ne.s32.totalorder %s59, %s61
      %p68 = scmp.eq.s32.totalorder %s35, 1
      %p69 = por %p67, %p68
      %p70 = scmp.ne.s32.totalorder %s61, %s62
      %p71 = scmp.eq.s32.totalorder %s35, 0
      %p72 = por %p70, %p71
      %p73 = scmp.ne.s32.totalorder %s61, %s62
      %p74 = scmp.eq.s32.totalorder %s36, 1
      %p75 = por %p73, %p74
      %p77 = scmp.ne.s32.totalorder %s62, %s76
      %p78 = scmp.eq.s32.totalorder %s36, 0
      %p79 = por %p77, %p78
      %s81 = sadd.s32 %s80, 1
      %p84 = scmp.eq.s32.totalorder %s30, 1
      %p85 = scmp.ne.s32.totalorder %s80, %s82
      %p86 = scmp.eq.s32.totalorder %s30, 0
      %p87 = por %p85, %p86
      %p88 = scmp.ne.s32.totalorder %s80, %s82
      %p89 = scmp.eq.s32.totalorder %s35, 1
      %p90 = por %p88, %p89
      %p91 = scmp.ne.s32.totalorder %s82, %s83
      %p92 = scmp.eq.s32.totalorder %s35, 0
      %p93 = por %p91, %p92
      %p94 = scmp.ne.s32.totalorder %s82, %s83
      %p95 = scmp.eq.s32.totalorder %s36, 1
      %p96 = por %p94, %p95
      %p98 = scmp.ne.s32.totalorder %s83, %s97
      %p99 = scmp.eq.s32.totalorder %s36, 0
      %p100 = por %p98, %p99
      %s102 = sadd.s32 %s101, 1
      %p105 = scmp.eq.s32.totalorder %s30, 1
      %p106 = scmp.ne.s32.totalorder %s101, %s103
      %p107 = scmp.eq.s32.totalorder %s30, 0
      %p108 = por %p106, %p107
      %p109 = scmp.ne.s32.totalorder %s101, %s103
      %p110 = scmp.eq.s32.totalorder %s35, 1
      %p111 = por %p109, %p110
      %p112 = scmp.ne.s32.totalorder %s103, %s104
      %p113 = scmp.eq.s32.totalorder %s35, 0
      %p114 = por %p112, %p113
      %p115 = scmp.ne.s32.totalorder %s103, %s104
      %p116 = scmp.eq.s32.totalorder %s36, 1
      %p117 = por %p115, %p116
      %p119 = scmp.ne.s32.totalorder %s104, %s118
      %p120 = scmp.eq.s32.totalorder %s36, 0
      %p121 = por %p119, %p120
      %s123 = sadd.s32 %s122, 1
      %p126 = scmp.eq.s32.totalorder %s30, 1
      %p127 = scmp.ne.s32.totalorder %s122, %s124
      %p128 = scmp.eq.s32.totalorder %s30, 0
      %p129 = por %p127, %p128
      %p130 = scmp.ne.s32.totalorder %s122, %s124
      %p131 = scmp.eq.s32.totalorder %s35, 1
      %p132 = por %p130, %p131
      %p133 = scmp.ne.s32.totalorder %s124, %s125
      %p134 = scmp.eq.s32.totalorder %s35, 0
      %p135 = por %p133, %p134
      %p136 = scmp.ne.s32.totalorder %s124, %s125
      %p137 = scmp.eq.s32.totalorder %s36, 1
      %p138 = por %p136, %p137
      %p140 = scmp.ne.s32.totalorder %s125, %s139
      %p141 = scmp.eq.s32.totalorder %s36, 0
      %p142 = por %p140, %p141
      %s144 = sadd.s32 %s143, 1
      %p147 = scmp.eq.s32.totalorder %s30, 1
      %p148 = scmp.ne.s32.totalorder %s143, %s145
      %p149 = scmp.eq.s32.totalorder %s30, 0
      %p150 = por %p148, %p149
      %p151 = scmp.ne.s32.totalorder %s143, %s145
      %p152 = scmp.eq.s32.totalorder %s35, 1
      %p153 = por %p151, %p152
      %p154 = scmp.ne.s32.totalorder %s145, %s146
      %p155 = scmp.eq.s32.totalorder %s35, 0
      %p156 = por %p154, %p155
      %p157 = scmp.ne.s32.totalorder %s145, %s146
      %p158 = scmp.eq.s32.totalorder %s36, 1
      %p159 = por %p157, %p158
      %p161 = scmp.ne.s32.totalorder %s146, %s160
      %p162 = scmp.eq.s32.totalorder %s36, 0
      %p163 = por %p161, %p162
      %s165 = sadd.s32 %s164, 1
      %p168 = scmp.eq.s32.totalorder %s30, 1
      %p169 = scmp.ne.s32.totalorder %s164, %s166
      %p170 = scmp.eq.s32.totalorder %s30, 0
      %p171 = por %p169, %p170
      %p172 = scmp.ne.s32.totalorder %s164, %s166
      %p173 = scmp.eq.s32.totalorder %s35, 1
      %p174 = por %p172, %p173
      %p175 = scmp.ne.s32.totalorder %s166, %s167
      %p176 = scmp.eq.s32.totalorder %s35, 0
      %p177 = por %p175, %p176
      %p178 = scmp.ne.s32.totalorder %s166, %s167
      %p179 = scmp.eq.s32.totalorder %s36, 1
      %p180 = por %p178, %p179
      %p182 = scmp.ne.s32.totalorder %s167, %s181
      %p183 = scmp.eq.s32.totalorder %s36, 0
      %p184 = por %p182, %p183
      %s185 = ssub.s32 %s30, %s37
      %p186 = scmp.eq.s32.totalorder %s185, 0
      %s188 = sadd.s32 %s187, 1
      %s189 = scalar_select %p186, %s187, %s188
      %p192 = pneg %p186
      %p193 = scmp.eq.s32.totalorder %s30, 1
      %p194 = por %p192, %p193
      %p195 = scmp.ne.s32.totalorder %s187, %s190
      %p196 = scmp.eq.s32.totalorder %s30, 0
      %p197 = por %p195, %p196
      %p198 = scmp.ne.s32.totalorder %s187, %s190
      %p199 = scmp.eq.s32.totalorder %s35, 1
      %p200 = por %p198, %p199
      %p201 = scmp.ne.s32.totalorder %s190, %s191
      %p202 = scmp.eq.s32.totalorder %s35, 0
      %p203 = por %p201, %p202
      %p204 = scmp.ne.s32.totalorder %s190, %s191
      %p205 = scmp.eq.s32.totalorder %s36, 1
      %p206 = por %p204, %p205
      %p208 = scmp.ne.s32.totalorder %s191, %s207
      %p209 = scmp.eq.s32.totalorder %s36, 0
      %p210 = por %p208, %p209
      %s211 = ssub.s32 %s30, %s37
      %p212 = scmp.eq.s32.totalorder %s211, 0
      %s214 = sadd.s32 %s213, 1
      %s215 = scalar_select %p212, %s213, %s214
      %p218 = pneg %p212
      %p219 = scmp.eq.s32.totalorder %s30, 1
      %p220 = por %p218, %p219
      %p221 = scmp.ne.s32.totalorder %s213, %s216
      %p222 = scmp.eq.s32.totalorder %s30, 0
      %p223 = por %p221, %p222
      %p224 = scmp.ne.s32.totalorder %s213, %s216
      %p225 = scmp.eq.s32.totalorder %s35, 1
      %p226 = por %p224, %p225
      %p227 = scmp.ne.s32.totalorder %s216, %s217
      %p228 = scmp.eq.s32.totalorder %s35, 0
      %p229 = por %p227, %p228
      %p230 = scmp.ne.s32.totalorder %s216, %s217
      %p231 = scmp.eq.s32.totalorder %s36, 1
      %p232 = por %p230, %p231
      %p234 = scmp.ne.s32.totalorder %s217, %s233
      %p235 = scmp.eq.s32.totalorder %s36, 0
      %p236 = por %p234, %p235
      %s237 = ssub.s32 %s30, %s37
      %p238 = scmp.eq.s32.totalorder %s237, 0
      %s240 = sadd.s32 %s239, 1
      %s241 = scalar_select %p238, %s239, %s240
      %p244 = pneg %p238
      %p245 = scmp.eq.s32.totalorder %s30, 1
      %p246 = por %p244, %p245
      %p247 = scmp.ne.s32.totalorder %s239, %s242
      %p248 = scmp.eq.s32.totalorder %s30, 0
      %p249 = por %p247, %p248
      %p250 = scmp.ne.s32.totalorder %s239, %s242
      %p251 = scmp.eq.s32.totalorder %s35, 1
      %p252 = por %p250, %p251
      %p253 = scmp.ne.s32.totalorder %s242, %s243
      %p254 = scmp.eq.s32.totalorder %s35, 0
      %p255 = por %p253, %p254
      %p256 = scmp.ne.s32.totalorder %s242, %s243
      %p257 = scmp.eq.s32.totalorder %s36, 1
      %p258 = por %p256, %p257
      %p260 = scmp.ne.s32.totalorder %s243, %s259
      %p261 = scmp.eq.s32.totalorder %s36, 0
      %p262 = por %p260, %p261
      %s263 = ssub.s32 %s30, %s37
      %p264 = scmp.eq.s32.totalorder %s263, 0
      %s266 = sadd.s32 %s265, 1
      %s267 = scalar_select %p264, %s265, %s266
      %p270 = pneg %p264
      %p271 = scmp.eq.s32.totalorder %s30, 1
      %p272 = por %p270, %p271
      %p273 = scmp.ne.s32.totalorder %s265, %s268
      %p274 = scmp.eq.s32.totalorder %s30, 0
      %p275 = por %p273, %p274
      %p276 = scmp.ne.s32.totalorder %s265, %s268
      %p277 = scmp.eq.s32.totalorder %s35, 1
      %p278 = por %p276, %p277
      %p279 = scmp.ne.s32.totalorder %s268, %s269
      %p280 = scmp.eq.s32.totalorder %s35, 0
      %p281 = por %p279, %p280
      %p282 = scmp.ne.s32.totalorder %s268, %s269
      %p283 = scmp.eq.s32.totalorder %s36, 1
      %p284 = por %p282, %p283
      %p286 = scmp.ne.s32.totalorder %s269, %s285
      %p287 = scmp.eq.s32.totalorder %s36, 0
      %p288 = por %p286, %p287
      %s289 = ssub.s32 %s30, %s37
      %p290 = scmp.eq.s32.totalorder %s289, 0
      %s292 = sadd.s32 %s291, 1
      %s293 = scalar_select %p290, %s291, %s292
      %p296 = pneg %p290
      %p297 = scmp.eq.s32.totalorder %s30, 1
      %p298 = por %p296, %p297
      %p299 = scmp.ne.s32.totalorder %s291, %s294
      %p300 = scmp.eq.s32.totalorder %s30, 0
      %p301 = por %p299, %p300
      %p302 = scmp.ne.s32.totalorder %s291, %s294
      %p303 = scmp.eq.s32.totalorder %s35, 1
      %p304 = por %p302, %p303
      %p305 = scmp.ne.s32.totalorder %s294, %s295
      %p306 = scmp.eq.s32.totalorder %s35, 0
      %p307 = por %p305, %p306
      %p308 = scmp.ne.s32.totalorder %s294, %s295
      %p309 = scmp.eq.s32.totalorder %s36, 1
      %p310 = por %p308, %p309
      %p312 = scmp.ne.s32.totalorder %s295, %s311
      %p313 = scmp.eq.s32.totalorder %s36, 0
      %p314 = por %p312, %p313
      %s315 = ssub.s32 %s30, %s37
      %p316 = scmp.eq.s32.totalorder %s315, 0
      %s318 = sadd.s32 %s317, 1
      %s319 = scalar_select %p316, %s317, %s318
      %p322 = pneg %p316
      %p323 = scmp.eq.s32.totalorder %s30, 1
      %p324 = por %p322, %p323
      %p325 = scmp.ne.s32.totalorder %s317, %s320
      %p326 = scmp.eq.s32.totalorder %s30, 0
      %p327 = por %p325, %p326
      %p328 = scmp.ne.s32.totalorder %s317, %s320
      %p329 = scmp.eq.s32.totalorder %s35, 1
      %p330 = por %p328, %p329
      %p331 = scmp.ne.s32.totalorder %s320, %s321
      %p332 = scmp.eq.s32.totalorder %s35, 0
      %p333 = por %p331, %p332
      %p334 = scmp.ne.s32.totalorder %s320, %s321
      %p335 = scmp.eq.s32.totalorder %s36, 1
      %p336 = por %p334, %p335
      %p338 = scmp.ne.s32.totalorder %s321, %s337
      %p339 = scmp.eq.s32.totalorder %s36, 0
      %p340 = por %p338, %p339
      %s341 = ssub.s32 %s30, %s37
      %p342 = scmp.eq.s32.totalorder %s341, 0
      %s344 = sadd.s32 %s343, 1
      %s345 = scalar_select %p342, %s343, %s344
      %p348 = pneg %p342
      %p349 = scmp.eq.s32.totalorder %s30, 1
      %p350 = por %p348, %p349
      %p351 = scmp.ne.s32.totalorder %s343, %s346
      %p352 = scmp.eq.s32.totalorder %s30, 0
      %p353 = por %p351, %p352
      %p354 = scmp.ne.s32.totalorder %s343, %s346
      %p355 = scmp.eq.s32.totalorder %s35, 1
      %p356 = por %p354, %p355
      %p357 = scmp.ne.s32.totalorder %s346, %s347
      %p358 = scmp.eq.s32.totalorder %s35, 0
      %p359 = por %p357, %p358
      %p360 = scmp.ne.s32.totalorder %s346, %s347
      %p361 = scmp.eq.s32.totalorder %s36, 1
      %p362 = por %p360, %p361
      %p364 = scmp.ne.s32.totalorder %s347, %s363
      %p365 = scmp.eq.s32.totalorder %s36, 0
      %p366 = por %p364, %p365
      %s367 = ssub.s32 %s30, %s37
      %p368 = scmp.eq.s32.totalorder %s367, 0
      %s370 = sadd.s32 %s369, 1
      %s371 = scalar_select %p368, %s369, %s370
      %p374 = pneg %p368
      %p375 = scmp.eq.s32.totalorder %s30, 1
      %p376 = por %p374, %p375
      %p377 = scmp.ne.s32.totalorder %s369, %s372
      %p378 = scmp.eq.s32.totalorder %s30, 0
      %p379 = por %p377, %p378
      %p380 = scmp.ne.s32.totalorder %s369, %s372
      %p381 = scmp.eq.s32.totalorder %s35, 1
      %p382 = por %p380, %p381
      %p383 = scmp.ne.s32.totalorder %s372, %s373
      %p384 = scmp.eq.s32.totalorder %s35, 0
      %p385 = por %p383, %p384
      %p386 = scmp.ne.s32.totalorder %s372, %s373
      %p387 = scmp.eq.s32.totalorder %s36, 1
      %p388 = por %p386, %p387
      %p390 = scmp.ne.s32.totalorder %s373, %s389
      %p391 = scmp.eq.s32.totalorder %s36, 0
      %p392 = por %p390, %p391
      %s393 = ssub.s32 %s30, %s37
      %p394 = scmp.eq.s32.totalorder %s393, 0
      %s396 = sadd.s32 %s395, 1
      %s397 = scalar_select %p394, %s395, %s396
      %p400 = pneg %p394
      %p401 = scmp.eq.s32.totalorder %s30, 1
      %p402 = por %p400, %p401
      %p403 = scmp.ne.s32.totalorder %s395, %s398
      %p404 = scmp.eq.s32.totalorder %s30, 0
      %p405 = por %p403, %p404
      %p406 = scmp.ne.s32.totalorder %s395, %s398
      %p407 = scmp.eq.s32.totalorder %s35, 1
      %p408 = por %p406, %p407
      %p409 = scmp.ne.s32.totalorder %s398, %s399
      %p410 = scmp.eq.s32.totalorder %s35, 0
      %p411 = por %p409, %p410
      %p412 = scmp.ne.s32.totalorder %s398, %s399
      %p413 = scmp.eq.s32.totalorder %s36, 1
      %p414 = por %p412, %p413
      %p416 = scmp.ne.s32.totalorder %s399, %s415
      %p417 = scmp.eq.s32.totalorder %s36, 0
      %p418 = por %p416, %p417
      %s419 = ssub.s32 %s30, %s37
      %p420 = scmp.eq.s32.totalorder %s419, 0
      %s422 = sadd.s32 %s421, 1
      %s423 = scalar_select %p420, %s421, %s422
      %p426 = pneg %p420
      %p427 = scmp.eq.s32.totalorder %s30, 1
      %p428 = por %p426, %p427
      %p429 = scmp.ne.s32.totalorder %s421, %s424
      %p430 = scmp.eq.s32.totalorder %s30, 0
      %p431 = por %p429, %p430
      %p432 = scmp.ne.s32.totalorder %s421, %s424
      %p433 = scmp.eq.s32.totalorder %s35, 1
      %p434 = por %p432, %p433
      %p435 = scmp.ne.s32.totalorder %s424, %s425
      %p436 = scmp.eq.s32.totalorder %s35, 0
      %p437 = por %p435, %p436
      %p438 = scmp.ne.s32.totalorder %s424, %s425
      %p439 = scmp.eq.s32.totalorder %s36, 1
      %p440 = por %p438, %p439
      %p442 = scmp.ne.s32.totalorder %s425, %s441
      %p443 = scmp.eq.s32.totalorder %s36, 0
      %p444 = por %p442, %p443
      %s445 = ssub.s32 %s30, %s37
      %p446 = scmp.eq.s32.totalorder %s445, 0
      %s448 = sadd.s32 %s447, 1
      %s449 = scalar_select %p446, %s447, %s448
      %p452 = pneg %p446
      %p453 = scmp.eq.s32.totalorder %s30, 1
      %p454 = por %p452, %p453
      %p455 = scmp.ne.s32.totalorder %s447, %s450
      %p456 = scmp.eq.s32.totalorder %s30, 0
      %p457 = por %p455, %p456
      %p458 = scmp.ne.s32.totalorder %s447, %s450
      %p459 = scmp.eq.s32.totalorder %s35, 1
      %p460 = por %p458, %p459
      %p461 = scmp.ne.s32.totalorder %s450, %s451
      %p462 = scmp.eq.s32.totalorder %s35, 0
      %p463 = por %p461, %p462
      %p464 = scmp.ne.s32.totalorder %s450, %s451
      %p465 = scmp.eq.s32.totalorder %s36, 1
      %p466 = por %p464, %p465
      %p468 = scmp.ne.s32.totalorder %s451, %s467
      %p469 = scmp.eq.s32.totalorder %s36, 0
      %p470 = por %p468, %p469
      %s471 = ssub.s32 %s30, %s37
      %p472 = scmp.eq.s32.totalorder %s471, 0
      %s474 = sadd.s32 %s473, 1
      %s475 = scalar_select %p472, %s473, %s474
      %p478 = pneg %p472
      %p479 = scmp.eq.s32.totalorder %s30, 1
      %p480 = por %p478, %p479
      %p481 = scmp.ne.s32.totalorder %s473, %s476
      %p482 = scmp.eq.s32.totalorder %s30, 0
      %p483 = por %p481, %p482
      %p484 = scmp.ne.s32.totalorder %s473, %s476
      %p485 = scmp.eq.s32.totalorder %s35, 1
      %p486 = por %p484, %p485
      %p487 = scmp.ne.s32.totalorder %s476, %s477
      %p488 = scmp.eq.s32.totalorder %s35, 0
      %p489 = por %p487, %p488
      %p490 = scmp.ne.s32.totalorder %s476, %s477
      %p491 = scmp.eq.s32.totalorder %s36, 1
      %p492 = por %p490, %p491
      %p494 = scmp.ne.s32.totalorder %s477, %s493
      %p495 = scmp.eq.s32.totalorder %s36, 0
      %p496 = por %p494, %p495
      %s497 = ssub.s32 %s30, %s37
      %p498 = scmp.eq.s32.totalorder %s497, 0
      %s500 = sadd.s32 %s499, 1
      %s501 = scalar_select %p498, %s499, %s500
      %p504 = pneg %p498
      %p505 = scmp.eq.s32.totalorder %s30, 1
      %p506 = por %p504, %p505
      %p507 = scmp.ne.s32.totalorder %s499, %s502
      %p508 = scmp.eq.s32.totalorder %s30, 0
      %p509 = por %p507, %p508
      %p510 = scmp.ne.s32.totalorder %s499, %s502
      %p511 = scmp.eq.s32.totalorder %s35, 1
      %p512 = por %p510, %p511
      %p513 = scmp.ne.s32.totalorder %s502, %s503
      %p514 = scmp.eq.s32.totalorder %s35, 0
      %p515 = por %p513, %p514
      %p516 = scmp.ne.s32.totalorder %s502, %s503
      %p517 = scmp.eq.s32.totalorder %s36, 1
      %p518 = por %p516, %p517
      %p520 = scmp.ne.s32.totalorder %s503, %s519
      %p521 = scmp.eq.s32.totalorder %s36, 0
      %p522 = por %p520, %p521
      %s523 = ssub.s32 %s30, %s37
      %p524 = scmp.eq.s32.totalorder %s523, 0
      %s526 = sadd.s32 %s525, 1
      %s527 = scalar_select %p524, %s525, %s526
      %p530 = pneg %p524
      %p531 = scmp.eq.s32.totalorder %s30, 1
      %p532 = por %p530, %p531
      %p533 = scmp.ne.s32.totalorder %s525, %s528
      %p534 = scmp.eq.s32.totalorder %s30, 0
      %p535 = por %p533, %p534
      %p536 = scmp.ne.s32.totalorder %s525, %s528
      %p537 = scmp.eq.s32.totalorder %s35, 1
      %p538 = por %p536, %p537
      %p539 = scmp.ne.s32.totalorder %s528, %s529
      %p540 = scmp.eq.s32.totalorder %s35, 0
      %p541 = por %p539, %p540
      %p542 = scmp.ne.s32.totalorder %s528, %s529
      %p543 = scmp.eq.s32.totalorder %s36, 1
      %p544 = por %p542, %p543
      %p546 = scmp.ne.s32.totalorder %s529, %s545
      %p547 = scmp.eq.s32.totalorder %s36, 0
      %p548 = por %p546, %p547
      %s549 = ssub.s32 %s30, %s37
      %p550 = scmp.eq.s32.totalorder %s549, 0
      %s552 = sadd.s32 %s551, 1
      %s553 = scalar_select %p550, %s551, %s552
      %p556 = pneg %p550
      %p557 = scmp.eq.s32.totalorder %s30, 1
      %p558 = por %p556, %p557
      %p559 = scmp.ne.s32.totalorder %s551, %s554
      %p560 = scmp.eq.s32.totalorder %s30, 0
      %p561 = por %p559, %p560
      %p562 = scmp.ne.s32.totalorder %s551, %s554
      %p563 = scmp.eq.s32.totalorder %s35, 1
      %p564 = por %p562, %p563
      %p565 = scmp.ne.s32.totalorder %s554, %s555
      %p566 = scmp.eq.s32.totalorder %s35, 0
      %p567 = por %p565, %p566
      %p568 = scmp.ne.s32.totalorder %s554, %s555
      %p569 = scmp.eq.s32.totalorder %s36, 1
      %p570 = por %p568, %p569
      %p572 = scmp.ne.s32.totalorder %s555, %s571
      %p573 = scmp.eq.s32.totalorder %s36, 0
      %p574 = por %p572, %p573
      %s575 = ssub.s32 %s30, %s37
      %p576 = scmp.eq.s32.totalorder %s575, 0
      %s578 = sadd.s32 %s577, 1
      %s579 = scalar_select %p576, %s577, %s578
      %p582 = pneg %p576
      %p583 = scmp.eq.s32.totalorder %s30, 1
      %p584 = por %p582, %p583
      %p585 = scmp.ne.s32.totalorder %s577, %s580
      %p586 = scmp.eq.s32.totalorder %s30, 0
      %p587 = por %p585, %p586
      %p588 = scmp.ne.s32.totalorder %s577, %s580
      %p589 = scmp.eq.s32.totalorder %s35, 1
      %p590 = por %p588, %p589
      %p591 = scmp.ne.s32.totalorder %s580, %s581
      %p592 = scmp.eq.s32.totalorder %s35, 0
      %p593 = por %p591, %p592
      %p594 = scmp.ne.s32.totalorder %s580, %s581
      %p595 = scmp.eq.s32.totalorder %s36, 1
      %p596 = por %p594, %p595
      %p598 = scmp.ne.s32.totalorder %s581, %s597
      %p599 = scmp.eq.s32.totalorder %s36, 0
      %p600 = por %p598, %p599
      %s602 = sadd.s32 %s601, 1
      %p605 = scmp.eq.s32.totalorder %s30, 1
      %p606 = scmp.ne.s32.totalorder %s601, %s603
      %p607 = scmp.eq.s32.totalorder %s30, 0
      %p608 = por %p606, %p607
      %p609 = scmp.ne.s32.totalorder %s601, %s603
      %p610 = scmp.eq.s32.totalorder %s35, 1
      %p611 = por %p609, %p610
      %p612 = scmp.ne.s32.totalorder %s603, %s604
      %p613 = scmp.eq.s32.totalorder %s35, 0
      %p614 = por %p612, %p613
      %p615 = scmp.ne.s32.totalorder %s603, %s604
      %p616 = scmp.eq.s32.totalorder %s36, 1
      %p617 = por %p615, %p616
      %p619 = scmp.ne.s32.totalorder %s604, %s618
      %p620 = scmp.eq.s32.totalorder %s36, 0
      %p621 = por %p619, %p620
      %p622 = scmp.le.s32.totalorder 1, %s30
      %p623 = scmp.lt.s32.totalorder %s30, 3
      %p624 = pnand %p622, %p623
      %p625 = pneg %p624
      // Predicated region
      $region9: #{forward.1} parent=5 // pred_check
        _
      $region10: #{forward.1} parent=5 // pred_check_branch
        %627 = sbr.rel (%p624) target = $region12
      $region11: #{forward.1} parent=5 // pred_region
        %s628 = ssub.s32 %s30, 1
        // Predicated region
        $region13: #{forward.1} parent=11 // pred_check
          %p629 = pneg %p51
        $region14: #{forward.1} parent=11 // pred_check_branch
          %631 = sbr.rel (%p629) target = $region16
        $region15: #{forward.1} parent=11 // pred_region
          _
        $region16: #{forward.1} parent=11 // pred_fallthru
          _
        // Predicated region
        $region17: #{forward.1} parent=11 // pred_check
          %p632 = pneg %p72
        $region18: #{forward.1} parent=11 // pred_check_branch
          %634 = sbr.rel (%p632) target = $region20
        $region19: #{forward.1} parent=11 // pred_region
          _
        $region20: #{forward.1} parent=11 // pred_fallthru
          _
        // Predicated region
        $region21: #{forward.1} parent=11 // pred_check
          %p635 = pneg %p93
        $region22: #{forward.1} parent=11 // pred_check_branch
          %637 = sbr.rel (%p635) target = $region24
        $region23: #{forward.1} parent=11 // pred_region
          _
        $region24: #{forward.1} parent=11 // pred_fallthru
          _
        // Predicated region
        $region25: #{forward.1} parent=11 // pred_check
          %p638 = pneg %p114
        $region26: #{forward.1} parent=11 // pred_check_branch
          %640 = sbr.rel (%p638) target = $region28
        $region27: #{forward.1} parent=11 // pred_region
          _
        $region28: #{forward.1} parent=11 // pred_fallthru
          _
        // Predicated region
        $region29: #{forward.1} parent=11 // pred_check
          %p641 = pneg %p135
        $region30: #{forward.1} parent=11 // pred_check_branch
          %643 = sbr.rel (%p641) target = $region32
        $region31: #{forward.1} parent=11 // pred_region
          _
        $region32: #{forward.1} parent=11 // pred_fallthru
          _
        // Predicated region
        $region33: #{forward.1} parent=11 // pred_check
          %p644 = pneg %p156
        $region34: #{forward.1} parent=11 // pred_check_branch
          %646 = sbr.rel (%p644) target = $region36
        $region35: #{forward.1} parent=11 // pred_region
          _
        $region36: #{forward.1} parent=11 // pred_fallthru
          _
        // Predicated region
        $region37: #{forward.1} parent=11 // pred_check
          %p647 = pneg %p177
        $region38: #{forward.1} parent=11 // pred_check_branch
          %649 = sbr.rel (%p647) target = $region40
        $region39: #{forward.1} parent=11 // pred_region
          _
        $region40: #{forward.1} parent=11 // pred_fallthru
          _
      $region12: #{forward.1} parent=5 // pred_fallthru
        _
      %p650 = scmp.lt.s32.totalorder %s30, 2
      // Predicated region
      $region41: #{forward.1} parent=5 // pred_check
        %p651 = pneg %p650
      $region42: #{forward.1} parent=5 // pred_check_branch
        %653 = sbr.rel (%p651) target = $region44
      $region43: #{forward.1} parent=5 // pred_region
        // Predicated region
        $region45: #{forward.1} parent=43 // pred_check
          %p654 = pneg %p197
        $region46: #{forward.1} parent=43 // pred_check_branch
          %656 = sbr.rel (%p654) target = $region48
        $region47: #{forward.1} parent=43 // pred_region
          %p657 = scmp.lt.s32.totalorder %s30, 1
          %s658 = scalar_select %p657, %s30, 1
          %s659 = smul.addr %s658, 4
          %s660 = smul.addr %s659, 8
          %s661 = scalar_lea.vmem %s7, %s660
        $region48: #{forward.1} parent=43 // pred_fallthru
          _
        // Predicated region
        $region49: #{forward.1} parent=43 // pred_check
          %p662 = pneg %p223
        $region50: #{forward.1} parent=43 // pred_check_branch
          %664 = sbr.rel (%p662) target = $region52
        $region51: #{forward.1} parent=43 // pred_region
          %p665 = scmp.lt.s32.totalorder %s30, 1
          %s666 = scalar_select %p665, %s30, 1
          %s667 = scalar_lea.vmem %s8, %s666
        $region52: #{forward.1} parent=43 // pred_fallthru
          _
        // Predicated region
        $region53: #{forward.1} parent=43 // pred_check
          %p668 = pneg %p249
        $region54: #{forward.1} parent=43 // pred_check_branch
          %670 = sbr.rel (%p668) target = $region56
        $region55: #{forward.1} parent=43 // pred_region
          %p671 = scmp.lt.s32.totalorder %s30, 1
          %s672 = scalar_select %p671, %s30, 1
          %s673 = smul.addr %s672, 4
          %s674 = smul.addr %s673, 8
          %s675 = scalar_lea.vmem %s9, %s674
        $region56: #{forward.1} parent=43 // pred_fallthru
          _
        // Predicated region
        $region57: #{forward.1} parent=43 // pred_check
          %p676 = pneg %p275
        $region58: #{forward.1} parent=43 // pred_check_branch
          %678 = sbr.rel (%p676) target = $region60
        $region59: #{forward.1} parent=43 // pred_region
          %p679 = scmp.lt.s32.totalorder %s30, 1
          %s680 = scalar_select %p679, %s30, 1
          %s681 = scalar_lea.vmem %s10, %s680
        $region60: #{forward.1} parent=43 // pred_fallthru
          _
        // Predicated region
        $region61: #{forward.1} parent=43 // pred_check
          %p682 = pneg %p301
        $region62: #{forward.1} parent=43 // pred_check_branch
          %684 = sbr.rel (%p682) target = $region64
        $region63: #{forward.1} parent=43 // pred_region
          %p685 = scmp.lt.s32.totalorder %s30, 1
          %s686 = scalar_select %p685, %s30, 1
          %s687 = smul.addr %s686, 4
          %s688 = smul.addr %s687, 8
          %s689 = scalar_lea.vmem %s11, %s688
        $region64: #{forward.1} parent=43 // pred_fallthru
          _
        // Predicated region
        $region65: #{forward.1} parent=43 // pred_check
          %p690 = pneg %p327
        $region66: #{forward.1} parent=43 // pred_check_branch
          %692 = sbr.rel (%p690) target = $region68
        $region67: #{forward.1} parent=43 // pred_region
          %p693 = scmp.lt.s32.totalorder %s30, 1
          %s694 = scalar_select %p693, %s30, 1
          %s695 = scalar_lea.vmem %s12, %s694
        $region68: #{forward.1} parent=43 // pred_fallthru
          _
        // Predicated region
        $region69: #{forward.1} parent=43 // pred_check
          %p696 = pneg %p353
        $region70: #{forward.1} parent=43 // pred_check_branch
          %698 = sbr.rel (%p696) target = $region72
        $region71: #{forward.1} parent=43 // pred_region
          %p699 = scmp.lt.s32.totalorder %s30, 1
          %s700 = scalar_select %p699, %s30, 1
          %s701 = smul.addr %s700, 4
          %s702 = smul.addr %s701, 8
          %s703 = scalar_lea.vmem %s13, %s702
        $region72: #{forward.1} parent=43 // pred_fallthru
          _
        // Predicated region
        $region73: #{forward.1} parent=43 // pred_check
          %p704 = pneg %p379
        $region74: #{forward.1} parent=43 // pred_check_branch
          %706 = sbr.rel (%p704) target = $region76
        $region75: #{forward.1} parent=43 // pred_region
          %p707 = scmp.lt.s32.totalorder %s30, 1
          %s708 = scalar_select %p707, %s30, 1
          %s709 = scalar_lea.vmem %s14, %s708
        $region76: #{forward.1} parent=43 // pred_fallthru
          _
        // Predicated region
        $region77: #{forward.1} parent=43 // pred_check
          %p710 = pneg %p405
        $region78: #{forward.1} parent=43 // pred_check_branch
          %712 = sbr.rel (%p710) target = $region80
        $region79: #{forward.1} parent=43 // pred_region
          %p713 = scmp.lt.s32.totalorder %s30, 1
          %s714 = scalar_select %p713, %s30, 1
          %s715 = smul.addr %s714, 4
          %s716 = smul.addr %s715, 8
          %s717 = scalar_lea.vmem %s15, %s716
        $region80: #{forward.1} parent=43 // pred_fallthru
          _
        // Predicated region
        $region81: #{forward.1} parent=43 // pred_check
          %p718 = pneg %p431
        $region82: #{forward.1} parent=43 // pred_check_branch
          %720 = sbr.rel (%p718) target = $region84
        $region83: #{forward.1} parent=43 // pred_region
          %p721 = scmp.lt.s32.totalorder %s30, 1
          %s722 = scalar_select %p721, %s30, 1
          %s723 = scalar_lea.vmem %s16, %s722
        $region84: #{forward.1} parent=43 // pred_fallthru
          _
        // Predicated region
        $region85: #{forward.1} parent=43 // pred_check
          %p724 = pneg %p457
        $region86: #{forward.1} parent=43 // pred_check_branch
          %726 = sbr.rel (%p724) target = $region88
        $region87: #{forward.1} parent=43 // pred_region
          %p727 = scmp.lt.s32.totalorder %s30, 1
          %s728 = scalar_select %p727, %s30, 1
          %s729 = smul.addr %s728, 4
          %s730 = smul.addr %s729, 8
          %s731 = scalar_lea.vmem %s17, %s730
        $region88: #{forward.1} parent=43 // pred_fallthru
          _
        // Predicated region
        $region89: #{forward.1} parent=43 // pred_check
          %p732 = pneg %p483
        $region90: #{forward.1} parent=43 // pred_check_branch
          %734 = sbr.rel (%p732) target = $region92
        $region91: #{forward.1} parent=43 // pred_region
          %p735 = scmp.lt.s32.totalorder %s30, 1
          %s736 = scalar_select %p735, %s30, 1
          %s737 = scalar_lea.vmem %s18, %s736
        $region92: #{forward.1} parent=43 // pred_fallthru
          _
        // Predicated region
        $region93: #{forward.1} parent=43 // pred_check
          %p738 = pneg %p509
        $region94: #{forward.1} parent=43 // pred_check_branch
          %740 = sbr.rel (%p738) target = $region96
        $region95: #{forward.1} parent=43 // pred_region
          %p741 = scmp.lt.s32.totalorder %s30, 1
          %s742 = scalar_select %p741, %s30, 1
          %s743 = smul.addr %s742, 8
          %s744 = smul.addr %s743, 8
          %s745 = scalar_lea.vmem %s19, %s744
        $region96: #{forward.1} parent=43 // pred_fallthru
          _
        // Predicated region
        $region97: #{forward.1} parent=43 // pred_check
          %p746 = pneg %p535
        $region98: #{forward.1} parent=43 // pred_check_branch
          %748 = sbr.rel (%p746) target = $region100
        $region99: #{forward.1} parent=43 // pred_region
          %p749 = scmp.lt.s32.totalorder %s30, 1
          %s750 = scalar_select %p749, %s30, 1
          %s751 = scalar_lea.vmem %s20, %s750
        $region100: #{forward.1} parent=43 // pred_fallthru
          _
        // Predicated region
        $region101: #{forward.1} parent=43 // pred_check
          %p752 = pneg %p561
        $region102: #{forward.1} parent=43 // pred_check_branch
          %754 = sbr.rel (%p752) target = $region104
        $region103: #{forward.1} parent=43 // pred_region
          %p755 = scmp.lt.s32.totalorder %s30, 1
          %s756 = scalar_select %p755, %s30, 1
          %s757 = smul.addr %s756, 4
          %s758 = scalar_lea.vmem %s21, %s757
        $region104: #{forward.1} parent=43 // pred_fallthru
          _
        // Predicated region
        $region105: #{forward.1} parent=43 // pred_check
          %p759 = pneg %p587
        $region106: #{forward.1} parent=43 // pred_check_branch
          %761 = sbr.rel (%p759) target = $region108
        $region107: #{forward.1} parent=43 // pred_region
          %p762 = scmp.lt.s32.totalorder %s30, 1
          %s763 = scalar_select %p762, %s30, 1
          %s764 = smul.addr %s763, 4
          %s765 = scalar_lea.vmem %s22, %s764
        $region108: #{forward.1} parent=43 // pred_fallthru
          _
      $region44: #{forward.1} parent=5 // pred_fallthru
        _
      %p766 = scmp.le.s32.totalorder 1, %s30
      %p767 = scmp.lt.s32.totalorder %s30, 3
      %p768 = pnand %p766, %p767
      %p769 = pneg %p768
      // Predicated region
      $region109: #{forward.1} parent=5 // pred_check
        _
      $region110: #{forward.1} parent=5 // pred_check_branch
        %771 = sbr.rel (%p768) target = $region112
      $region111: #{forward.1} parent=5 // pred_region
        %s772 = ssub.s32 %s30, 1
        %p773 = pneg %p51
        %p774 = pneg %p48
        %p775 = pneg %p72
        %p776 = pneg %p69
        %p777 = pneg %p93
        %p778 = pneg %p90
        %p779 = pneg %p114
        %p780 = pneg %p111
        %p781 = pneg %p135
        %p782 = pneg %p132
        %p783 = pneg %p156
        %p784 = pneg %p153
        %p785 = pneg %p177
        %p786 = pneg %p174
        %p787 = scmp.lt.s32.totalorder %s35, 1
        %s788 = scalar_select %p787, %s35, 1
        %s789 = smul.addr %s788, 4
        %s790 = smul.addr %s789, 8
        %s791 = scalar_lea.vmem %s7, %s790
        %p792 = pneg %p203
        %p793 = pneg %p200
        %p794 = scmp.lt.s32.totalorder %s35, 1
        %s795 = scalar_select %p794, %s35, 1
        %s796 = scalar_lea.vmem %s8, %s795
        %p797 = pneg %p229
        %p798 = pneg %p226
        %p799 = scmp.lt.s32.totalorder %s35, 1
        %s800 = scalar_select %p799, %s35, 1
        %s801 = smul.addr %s800, 4
        %s802 = smul.addr %s801, 8
        %s803 = scalar_lea.vmem %s9, %s802
        %p804 = pneg %p255
        %p805 = pneg %p252
        %p806 = scmp.lt.s32.totalorder %s35, 1
        %s807 = scalar_select %p806, %s35, 1
        %s808 = scalar_lea.vmem %s10, %s807
        %p809 = pneg %p281
        %p810 = pneg %p278
        %p811 = scmp.lt.s32.totalorder %s35, 1
        %s812 = scalar_select %p811, %s35, 1
        %s813 = smul.addr %s812, 4
        %s814 = smul.addr %s813, 8
        %s815 = scalar_lea.vmem %s11, %s814
        %p816 = pneg %p307
        %p817 = pneg %p304
        %p818 = scmp.lt.s32.totalorder %s35, 1
        %s819 = scalar_select %p818, %s35, 1
        %s820 = scalar_lea.vmem %s12, %s819
        %p821 = pneg %p333
        %p822 = pneg %p330
        %p823 = scmp.lt.s32.totalorder %s35, 1
        %s824 = scalar_select %p823, %s35, 1
        %s825 = smul.addr %s824, 4
        %s826 = smul.addr %s825, 8
        %s827 = scalar_lea.vmem %s13, %s826
        %p828 = pneg %p359
        %p829 = pneg %p356
        %p830 = scmp.lt.s32.totalorder %s35, 1
        %s831 = scalar_select %p830, %s35, 1
        %s832 = scalar_lea.vmem %s14, %s831
        %p833 = pneg %p385
        %p834 = pneg %p382
        %p835 = scmp.lt.s32.totalorder %s35, 1
        %s836 = scalar_select %p835, %s35, 1
        %s837 = smul.addr %s836, 4
        %s838 = smul.addr %s837, 8
        %s839 = scalar_lea.vmem %s15, %s838
        %p840 = pneg %p411
        %p841 = pneg %p408
        %p842 = scmp.lt.s32.totalorder %s35, 1
        %s843 = scalar_select %p842, %s35, 1
        %s844 = scalar_lea.vmem %s16, %s843
        %p845 = pneg %p437
        %p846 = pneg %p434
        %p847 = scmp.lt.s32.totalorder %s35, 1
        %s848 = scalar_select %p847, %s35, 1
        %s849 = smul.addr %s848, 4
        %s850 = smul.addr %s849, 8
        %s851 = scalar_lea.vmem %s17, %s850
        %p852 = pneg %p463
        %p853 = pneg %p460
        %p854 = scmp.lt.s32.totalorder %s35, 1
        %s855 = scalar_select %p854, %s35, 1
        %s856 = scalar_lea.vmem %s18, %s855
        %p857 = pneg %p489
        %p858 = pneg %p486
        %p859 = scmp.lt.s32.totalorder %s35, 1
        %s860 = scalar_select %p859, %s35, 1
        %s861 = smul.addr %s860, 8
        %s862 = smul.addr %s861, 8
        %s863 = scalar_lea.vmem %s19, %s862
        %p864 = pneg %p515
        %p865 = pneg %p512
        %p866 = scmp.lt.s32.totalorder %s35, 1
        %s867 = scalar_select %p866, %s35, 1
        %s868 = scalar_lea.vmem %s20, %s867
        %p869 = pneg %p541
        %p870 = pneg %p538
        %p871 = scmp.lt.s32.totalorder %s35, 1
        %s872 = scalar_select %p871, %s35, 1
        %s873 = smul.addr %s872, 4
        %s874 = scalar_lea.vmem %s21, %s873
        %p875 = pneg %p567
        %p876 = pneg %p564
        %p877 = scmp.lt.s32.totalorder %s35, 1
        %s878 = scalar_select %p877, %s35, 1
        %s879 = smul.addr %s878, 4
        %s880 = scalar_lea.vmem %s22, %s879
        %p881 = pneg %p593
        %p882 = pneg %p590
        %p883 = pneg %p614
        %p884 = pneg %p611
        %p885 = scmp.lt.s32.totalorder %s35, 1
        %s886 = scalar_select %p885, %s35, 1
        %s887 = smul.addr %s886, 4
        %s888 = smul.addr %s887, 8
        %s889 = scalar_lea.vmem %s7, %s888
        %p890 = scmp.lt.s32.totalorder %s35, 1
        %s891 = scalar_select %p890, %s35, 1
        %s892 = scalar_lea.vmem %s8, %s891
        %p893 = scmp.lt.s32.totalorder %s35, 1
        %s894 = scalar_select %p893, %s35, 1
        %s895 = smul.addr %s894, 4
        %s896 = smul.addr %s895, 8
        %s897 = scalar_lea.vmem %s9, %s896
        %p898 = scmp.lt.s32.totalorder %s35, 1
        %s899 = scalar_select %p898, %s35, 1
        %s900 = scalar_lea.vmem %s10, %s899
        %p901 = scmp.lt.s32.totalorder %s35, 1
        %s902 = scalar_select %p901, %s35, 1
        %s903 = smul.addr %s902, 4
        %s904 = smul.addr %s903, 8
        %s905 = scalar_lea.vmem %s11, %s904
        %p906 = scmp.lt.s32.totalorder %s35, 1
        %s907 = scalar_select %p906, %s35, 1
        %s908 = scalar_lea.vmem %s12, %s907
        %p909 = scmp.lt.s32.totalorder %s35, 1
        %s910 = scalar_select %p909, %s35, 1
        %s911 = smul.addr %s910, 4
        %s912 = smul.addr %s911, 8
        %s913 = scalar_lea.vmem %s13, %s912
        %p914 = scmp.lt.s32.totalorder %s35, 1
        %s915 = scalar_select %p914, %s35, 1
        %s916 = scalar_lea.vmem %s14, %s915
        %p917 = scmp.lt.s32.totalorder %s35, 1
        %s918 = scalar_select %p917, %s35, 1
        %s919 = smul.addr %s918, 4
        %s920 = smul.addr %s919, 8
        %s921 = scalar_lea.vmem %s15, %s920
        %p922 = scmp.lt.s32.totalorder %s35, 1
        %s923 = scalar_select %p922, %s35, 1
        %s924 = scalar_lea.vmem %s16, %s923
        %p925 = scmp.lt.s32.totalorder %s35, 1
        %s926 = scalar_select %p925, %s35, 1
        %s927 = smul.addr %s926, 4
        %s928 = smul.addr %s927, 8
        %s929 = scalar_lea.vmem %s17, %s928
        %p930 = scmp.lt.s32.totalorder %s35, 1
        %s931 = scalar_select %p930, %s35, 1
        %s932 = scalar_lea.vmem %s18, %s931
        %p933 = scmp.lt.s32.totalorder %s35, 1
        %s934 = scalar_select %p933, %s35, 1
        %s935 = smul.addr %s934, 8
        %s936 = smul.addr %s935, 8
        %s937 = scalar_lea.vmem %s19, %s936
        %p938 = scmp.lt.s32.totalorder %s35, 1
        %s939 = scalar_select %p938, %s35, 1
        %s940 = scalar_lea.vmem %s20, %s939
        %p941 = scmp.lt.s32.totalorder %s35, 1
        %s942 = scalar_select %p941, %s35, 1
        %s943 = smul.addr %s942, 4
        %s944 = scalar_lea.vmem %s21, %s943
        %p945 = scmp.lt.s32.totalorder %s35, 1
        %s946 = scalar_select %p945, %s35, 1
        %s947 = smul.addr %s946, 4
        %s948 = scalar_lea.vmem %s22, %s947
        %p949 = scmp.eq.s32.totalorder %s35, 0
        // Predicated region
        $region113: #{forward.1} parent=111 // pred_check
          %p950 = pneg %p949
        $region114: #{forward.1} parent=111 // pred_check_branch
          %952 = sbr.rel (%p950) target = $region116
        $region115: #{forward.1} parent=111 // pred_region
          %v953 = vld [vmem:[%s1] sm:$0xff]
          %v954 = vld [vmem:[%s1 + $0x8] sm:$0xff]
          %v955 = vld [vmem:[%s1 + $0x10] sm:$0xff]
          %v956 = vld [vmem:[%s1 + $0x18] sm:$0xff]
          %v957 = vld [vmem:[%s2] sm:$0xff]
          %v958 = vld [vmem:[%s2 + $0x8] sm:$0xff]
          %v959 = vld [vmem:[%s2 + $0x10] sm:$0xff]
          %v960 = vld [vmem:[%s2 + $0x18] sm:$0xff]
          %v961 = vld [vmem:[%s3] sm:$0x1]
          %v963 = vperm.slane %v961, 0
          %vm965 = vcmask 261120
          %v967 = vsel %vm965, %v953, 0
          %v970 = vsel %vm965, %v954, 0
          %v973 = vsel %vm965, %v955, 0
          %v976 = vsel %vm965, %v956, 0
          %978 = vmatpush.msra.mxu0 0.0
          %979 = vmatpush.msra.mxu0 0.0
          %980 = vmatpush.msra.mxu0 0.0
          %981 = vmatpush.msra.mxu0 0.0
          %982 = vmatpush.msra.mxu0 0.0
          %983 = vmatpush.msra.mxu0 0.0
          %984 = vmatpush.msra.mxu0 0.0
          %985 = vmatpush.msra.mxu0 0.0
          %986 = vmatpush.msra.mxu0 0.0
          %987 = vmatpush.msra.mxu0 0.0
          %988 = vmatpush.msra.mxu0 0.0
          %989 = vmatpush.msra.mxu0 0.0
          %990 = vmatpush.msra.mxu0 %v960
          %991 = vmatpush.msra.mxu0 %v959
          %992 = vmatpush.msra.mxu0 %v958
          %993 = vmatpush.msra.mxu0 %v957
          %994 = vmatmul.f32.gmra.mxu0 %v967
          %v995 = vpop.f32.mrf.mxu0
          %v996 = vadd.f32 %v963, %v995
          %997 = vmatmul.f32.gmra.mxu0 %v970
          %v998 = vpop.f32.mrf.mxu0
          %v999 = vadd.f32 %v963, %v998
          %1000 = vmatmul.f32.gmra.mxu0 %v973
          %v1001 = vpop.f32.mrf.mxu0
          %v1002 = vadd.f32 %v963, %v1001
          %1003 = vmatmul.f32.gmra.mxu0 %v976
          %v1004 = vpop.f32.mrf.mxu0
          %v1005 = vadd.f32 %v963, %v1004
          %1006 = vdwg.mxu0
          %v1007 = vmax.f32 %v996, 0.0
          %v1008 = vmax.f32 %v999, 0.0
          %v1009 = vmax.f32 %v1002, 0.0
          %v1010 = vmax.f32 %v1005, 0.0
          %1011 = vst.msk [vmem:[#allocation3] sm:$0xff] %vm965, %v1007
          %1012 = vst.msk [vmem:[#allocation3 + $0x8] sm:$0xff] %vm965, %v1008
          %1013 = vst.msk [vmem:[#allocation3 + $0x10] sm:$0xff] %vm965, %v1009
          %1014 = vst.msk [vmem:[#allocation3 + $0x18] sm:$0xff] %vm965, %v1010
          %v1015 = vld [vmem:[%s0] sm:$0xff]
          %v1016 = vld [vmem:[%s0 + $0x8] sm:$0xff]
          %1017 = vst.msk [vmem:[#allocation2] sm:$0xff] %vm965, %v1015
          %1018 = vst.msk [vmem:[#allocation2 + $0x8] sm:$0xff] %vm965, %v1016
        $region116: #{forward.1} parent=111 // pred_fallthru
          _
        %v1019 = vld [vmem:[%s944] sm:$0x7]
        %v1020 = vld [vmem:[%s948] sm:$0x7]
        %v1021 = vld [vmem:[#allocation2] sm:$0xff]
        %v1022 = vld [vmem:[#allocation2 + $0x8] sm:$0xff]
        %v1023 = vld [vmem:[%s889] sm:$0xff]
        %v1024 = vld [vmem:[%s889 + $0x8] sm:$0xff]
        %v1025 = vld [vmem:[%s889 + $0x10] sm:$0xff]
        %v1026 = vld [vmem:[%s889 + $0x18] sm:$0xff]
        %v1027 = vld [vmem:[%s892] sm:$0x1]
        %v1029 = vperm.slane %v1027, 0
        %vm1031 = vcmask 261120
        %v1033 = vsel %vm1031, %v1021, 0
        %v1036 = vsel %vm1031, %v1022, 0
        %1038 = vmatpush.msra.mxu0 0.0
        %1039 = vmatpush.msra.mxu0 0.0
        %1040 = vmatpush.msra.mxu0 0.0
        %1041 = vmatpush.msra.mxu0 0.0
        %1042 = vmatpush.msra.mxu0 0.0
        %1043 = vmatpush.msra.mxu0 0.0
        %1044 = vmatpush.msra.mxu0 0.0
        %1045 = vmatpush.msra.mxu0 0.0
        %1046 = vmatpush.msra.mxu0 0.0
        %1047 = vmatpush.msra.mxu0 0.0
        %1048 = vmatpush.msra.mxu0 0.0
        %1049 = vmatpush.msra.mxu0 0.0
        %1050 = vmatpush.msra.mxu0 %v1026
        %1051 = vmatpush.msra.mxu0 %v1025
        %1052 = vmatpush.msra.mxu0 %v1024
        %1053 = vmatpush.msra.mxu0 %v1023
        %1054 = vmatmul.f32.gmra.mxu0 %v1033
        %v1055 = vpop.f32.mrf.mxu0
        %v1056 = vadd.f32 %v1029, %v1055
        %1057 = vmatmul.f32.gmra.mxu0 %v1036
        %v1058 = vpop.f32.mrf.mxu0
        %v1059 = vadd.f32 %v1029, %v1058
        %1060 = vdwg.mxu0
        %v1061 = vld [vmem:[%s4] sm:$0xff]
        %v1062 = vld [vmem:[%s4 + $0x8] sm:$0xff]
        %1064 = vrot.lane.b32.xlu0 %v1056, 96
        %v1065 = vpop.permute.xlu0 %1064
        %vm1066 = vcmask 64512
        %v1067 = vsel %vm1066, %v1056, 0
        %v1069 = vsel %vm1066, %v1065, 0
        %1071 = vmatpush.xpose.msra.mxu0 0.0
        %1072 = vmatpush.xpose.msra.mxu0 0.0
        %1073 = vmatpush.xpose.msra.mxu0 0.0
        %1074 = vmatpush.xpose.msra.mxu0 0.0
        %1075 = vmatpush.xpose.msra.mxu0 0.0
        %1076 = vmatpush.xpose.msra.mxu0 0.0
        %1077 = vmatpush.xpose.msra.mxu0 0.0
        %1078 = vmatpush.xpose.msra.mxu0 0.0
        %1079 = vmatpush.xpose.msra.mxu0 0.0
        %1080 = vmatpush.xpose.msra.mxu0 0.0
        %1081 = vmatpush.xpose.msra.mxu0 0.0
        %1082 = vmatpush.xpose.msra.mxu0 0.0
        %1083 = vmatpush.xpose.msra.mxu0 0.0
        %1084 = vmatpush.xpose.msra.mxu0 0.0
        %1085 = vmatpush.xpose.msra.mxu0 0.0
        %1086 = vmatpush.xpose.msra.mxu0 %v1069
        %1087 = vmatmul.f32.gmra.mxu0 %v1067
        %v1088 = vpop.f32.mrf.mxu0
        %v1089 = vadd.f32 0.0, %v1088
        %1090 = vdwg.mxu0
        %1092 = vrot.lane.b32.xlu0 %v1059, 96
        %v1093 = vpop.permute.xlu0 %1092
        %v1094 = vsel %vm1066, %v1059, 0
        %v1096 = vsel %vm1066, %v1093, 0
        %1098 = vmatpush.xpose.msra.mxu0 0.0
        %1099 = vmatpush.xpose.msra.mxu0 0.0
        %1100 = vmatpush.xpose.msra.mxu0 0.0
        %1101 = vmatpush.xpose.msra.mxu0 0.0
        %1102 = vmatpush.xpose.msra.mxu0 0.0
        %1103 = vmatpush.xpose.msra.mxu0 0.0
        %1104 = vmatpush.xpose.msra.mxu0 0.0
        %1105 = vmatpush.xpose.msra.mxu0 0.0
        %1106 = vmatpush.xpose.msra.mxu0 0.0
        %1107 = vmatpush.xpose.msra.mxu0 0.0
        %1108 = vmatpush.xpose.msra.mxu0 0.0
        %1109 = vmatpush.xpose.msra.mxu0 0.0
        %1110 = vmatpush.xpose.msra.mxu0 0.0
        %1111 = vmatpush.xpose.msra.mxu0 0.0
        %1112 = vmatpush.xpose.msra.mxu0 0.0
        %1113 = vmatpush.xpose.msra.mxu0 %v1096
        %1114 = vmatmul.f32.gmra.mxu0 %v1094
        %v1115 = vpop.f32.mrf.mxu0
        %v1116 = vadd.f32 0.0, %v1115
        %1117 = vdwg.mxu0
        %v1118 = vmul.f32 %v1089, 0.35355338
        %v1119 = vmul.f32 %v1116, 0.35355338
        %v1120 = vadd.f32 %v1118, %v1061
        %v1121 = vadd.f32 %v1119, %v1062
        %v1122 = vsel %vm1066, %v1120, -inf
        %1123 = vmax.xlane.f32.xlu0 %v1122
        %v1124 = vpop.xlane.xlu0 %1123
        %v1125 = vsel %vm1066, %v1121, -inf
        %1126 = vmax.xlane.f32.xlu0 %v1125
        %v1127 = vpop.xlane.xlu0 %1126
        %v1128 = vsub.f32 %v1120, %v1124
        %v1129 = vsub.f32 %v1121, %v1127
        %v1130 = vmul.f32 %v1128, 1.442695
        %v1131 = vpow.pop %v1130
        %v1132 = vmul.f32 %v1129, 1.442695
        %v1133 = vpow.pop %v1132
        %v1134 = vsel %vm1066, %v1131, 0.0
        %1135 = vadd.xlane.f32.xlu0 %v1134
        %v1136 = vpop.xlane.xlu0 %1135
        %v1137 = vsel %vm1066, %v1133, 0.0
        %1138 = vadd.xlane.f32.xlu0 %v1137
        %v1139 = vpop.xlane.xlu0 %1138
        %v1140 = vrcp.pop %v1136
        %v1141 = vmul.f32 %v1136, %v1140
        %v1142 = vsub.f32 1.0, %v1141
        %v1143 = vmul.f32 %v1140, %v1142
        %v1144 = vadd.f32 %v1140, %v1143
        %vm1145 = vweird.f32 %v1136
        %vm1146 = vweird.f32 %v1140
        %vm1147 = vmor %vm1145, %vm1146
        %v1148 = vsel %vm1147, %v1140, %v1144
        %v1149 = vand.u32 2147483647, %v1136
        %vm1150 = vcmp.eq.f32.partialorder %v1149, 8.507059e+37
        %v1151 = vand.u32 %v1136, 2147483648
        %v1152 = vor.u32 1.1754944e-38, %v1151
        %v1153 = vsel %vm1150, %v1152, %v1148
        %v1154 = vmul.f32 %v1131, %v1153
        %v1155 = vrcp.pop %v1139
        %v1156 = vmul.f32 %v1139, %v1155
        %v1157 = vsub.f32 1.0, %v1156
        %v1158 = vmul.f32 %v1155, %v1157
        %v1159 = vadd.f32 %v1155, %v1158
        %vm1160 = vweird.f32 %v1139
        %vm1161 = vweird.f32 %v1155
        %vm1162 = vmor %vm1160, %vm1161
        %v1163 = vsel %vm1162, %v1155, %v1159
        %v1164 = vand.u32 2147483647, %v1139
        %vm1165 = vcmp.eq.f32.partialorder %v1164, 8.507059e+37
        %v1166 = vand.u32 %v1139, 2147483648
        %v1167 = vor.u32 1.1754944e-38, %v1166
        %v1168 = vsel %vm1165, %v1167, %v1163
        %v1169 = vmul.f32 %v1133, %v1168
        %1170 = vrot.lane.b32.xlu0 %v1056, 64
        %v1171 = vpop.permute.xlu0 %1170
        %v1174 = vsel %vm1066, %v1154, 0
        %1176 = vmatpush.msra.mxu0 0.0
        %1177 = vmatpush.msra.mxu0 0.0
        %1178 = vmatpush.msra.mxu0 0.0
        %1179 = vmatpush.msra.mxu0 0.0
        %1180 = vmatpush.msra.mxu0 0.0
        %1181 = vmatpush.msra.mxu0 0.0
        %1182 = vmatpush.msra.mxu0 0.0
        %1183 = vmatpush.msra.mxu0 0.0
        %1184 = vmatpush.msra.mxu0 0.0
        %1185 = vmatpush.msra.mxu0 0.0
        %1186 = vmatpush.msra.mxu0 0.0
        %1187 = vmatpush.msra.mxu0 0.0
        %1188 = vmatpush.msra.mxu0 0.0
        %1189 = vmatpush.msra.mxu0 0.0
        %1190 = vmatpush.msra.mxu0 0.0
        %1191 = vmatpush.msra.mxu0 %v1171
        %1192 = vmatmul.f32.gmra.mxu0 %v1174
        %v1193 = vpop.f32.mrf.mxu0
        %v1194 = vadd.f32 0.0, %v1193
        %1195 = vdwg.mxu0
        %1196 = vrot.lane.b32.xlu0 %v1059, 64
        %v1197 = vpop.permute.xlu0 %1196
        %v1200 = vsel %vm1066, %v1169, 0
        %1202 = vmatpush.msra.mxu0 0.0
        %1203 = vmatpush.msra.mxu0 0.0
        %1204 = vmatpush.msra.mxu0 0.0
        %1205 = vmatpush.msra.mxu0 0.0
        %1206 = vmatpush.msra.mxu0 0.0
        %1207 = vmatpush.msra.mxu0 0.0
        %1208 = vmatpush.msra.mxu0 0.0
        %1209 = vmatpush.msra.mxu0 0.0
        %1210 = vmatpush.msra.mxu0 0.0
        %1211 = vmatpush.msra.mxu0 0.0
        %1212 = vmatpush.msra.mxu0 0.0
        %1213 = vmatpush.msra.mxu0 0.0
        %1214 = vmatpush.msra.mxu0 0.0
        %1215 = vmatpush.msra.mxu0 0.0
        %1216 = vmatpush.msra.mxu0 0.0
        %1217 = vmatpush.msra.mxu0 %v1197
        %1218 = vmatmul.f32.gmra.mxu0 %v1200
        %v1219 = vpop.f32.mrf.mxu0
        %v1220 = vadd.f32 0.0, %v1219
        %1221 = vdwg.mxu0
        %1222 = vrot.lane.b32.xlu0 %v1056, 120
        %v1223 = vpop.permute.xlu0 %1222
        %1224 = vrot.lane.b32.xlu0 %v1056, 88
        %v1225 = vpop.permute.xlu0 %1224
        %v1226 = vsel %vm1066, %v1223, 0
        %v1228 = vsel %vm1066, %v1225, 0
        %1230 = vmatpush.xpose.msra.mxu0 0.0
        %1231 = vmatpush.xpose.msra.mxu0 0.0
        %1232 = vmatpush.xpose.msra.mxu0 0.0
        %1233 = vmatpush.xpose.msra.mxu0 0.0
        %1234 = vmatpush.xpose.msra.mxu0 0.0
        %1235 = vmatpush.xpose.msra.mxu0 0.0
        %1236 = vmatpush.xpose.msra.mxu0 0.0
        %1237 = vmatpush.xpose.msra.mxu0 0.0
        %1238 = vmatpush.xpose.msra.mxu0 0.0
        %1239 = vmatpush.xpose.msra.mxu0 0.0
        %1240 = vmatpush.xpose.msra.mxu0 0.0
        %1241 = vmatpush.xpose.msra.mxu0 0.0
        %1242 = vmatpush.xpose.msra.mxu0 0.0
        %1243 = vmatpush.xpose.msra.mxu0 0.0
        %1244 = vmatpush.xpose.msra.mxu0 0.0
        %1245 = vmatpush.xpose.msra.mxu0 %v1228
        %1246 = vmatmul.f32.gmra.mxu0 %v1226
        %v1247 = vpop.f32.mrf.mxu0
        %v1248 = vadd.f32 0.0, %v1247
        %1249 = vdwg.mxu0
        %1250 = vrot.lane.b32.xlu0 %v1059, 120
        %v1251 = vpop.permute.xlu0 %1250
        %1252 = vrot.lane.b32.xlu0 %v1059, 88
        %v1253 = vpop.permute.xlu0 %1252
        %v1254 = vsel %vm1066, %v1251, 0
        %v1256 = vsel %vm1066, %v1253, 0
        %1258 = vmatpush.xpose.msra.mxu0 0.0
        %1259 = vmatpush.xpose.msra.mxu0 0.0
        %1260 = vmatpush.xpose.msra.mxu0 0.0
        %1261 = vmatpush.xpose.msra.mxu0 0.0
        %1262 = vmatpush.xpose.msra.mxu0 0.0
        %1263 = vmatpush.xpose.msra.mxu0 0.0
        %1264 = vmatpush.xpose.msra.mxu0 0.0
        %1265 = vmatpush.xpose.msra.mxu0 0.0
        %1266 = vmatpush.xpose.msra.mxu0 0.0
        %1267 = vmatpush.xpose.msra.mxu0 0.0
        %1268 = vmatpush.xpose.msra.mxu0 0.0
        %1269 = vmatpush.xpose.msra.mxu0 0.0
        %1270 = vmatpush.xpose.msra.mxu0 0.0
        %1271 = vmatpush.xpose.msra.mxu0 0.0
        %1272 = vmatpush.xpose.msra.mxu0 0.0
        %1273 = vmatpush.xpose.msra.mxu0 %v1256
        %1274 = vmatmul.f32.gmra.mxu0 %v1254
        %v1275 = vpop.f32.mrf.mxu0
        %v1276 = vadd.f32 0.0, %v1275
        %1277 = vdwg.mxu0
        %v1278 = vmul.f32 %v1248, 0.35355338
        %v1279 = vmul.f32 %v1276, 0.35355338
        %v1280 = vadd.f32 %v1278, %v1061
        %v1281 = vadd.f32 %v1279, %v1062
        %v1282 = vsel %vm1066, %v1280, -inf
        %1283 = vmax.xlane.f32.xlu0 %v1282
        %v1284 = vpop.xlane.xlu0 %1283
        %v1285 = vsel %vm1066, %v1281, -inf
        %1286 = vmax.xlane.f32.xlu0 %v1285
        %v1287 = vpop.xlane.xlu0 %1286
        %v1288 = vsub.f32 %v1280, %v1284
        %v1289 = vsub.f32 %v1281, %v1287
        %v1290 = vmul.f32 %v1288, 1.442695
        %v1291 = vpow.pop %v1290
        %v1292 = vmul.f32 %v1289, 1.442695
        %v1293 = vpow.pop %v1292
        %v1294 = vsel %vm1066, %v1291, 0.0
        %1295 = vadd.xlane.f32.xlu0 %v1294
        %v1296 = vpop.xlane.xlu0 %1295
        %v1297 = vsel %vm1066, %v1293, 0.0
        %1298 = vadd.xlane.f32.xlu0 %v1297
        %v1299 = vpop.xlane.xlu0 %1298
        %v1300 = vrcp.pop %v1296
        %v1301 = vmul.f32 %v1296, %v1300
        %v1302 = vsub.f32 1.0, %v1301
        %v1303 = vmul.f32 %v1300, %v1302
        %v1304 = vadd.f32 %v1300, %v1303
        %vm1305 = vweird.f32 %v1296
        %vm1306 = vweird.f32 %v1300
        %vm1307 = vmor %vm1305, %vm1306
        %v1308 = vsel %vm1307, %v1300, %v1304
        %v1309 = vand.u32 2147483647, %v1296
        %vm1310 = vcmp.eq.f32.partialorder %v1309, 8.507059e+37
        %v1311 = vand.u32 %v1296, 2147483648
        %v1312 = vor.u32 1.1754944e-38, %v1311
        %v1313 = vsel %vm1310, %v1312, %v1308
        %v1314 = vmul.f32 %v1291, %v1313
        %v1315 = vrcp.pop %v1299
        %v1316 = vmul.f32 %v1299, %v1315
        %v1317 = vsub.f32 1.0, %v1316
        %v1318 = vmul.f32 %v1315, %v1317
        %v1319 = vadd.f32 %v1315, %v1318
        %vm1320 = vweird.f32 %v1299
        %vm1321 = vweird.f32 %v1315
        %vm1322 = vmor %vm1320, %vm1321
        %v1323 = vsel %vm1322, %v1315, %v1319
        %v1324 = vand.u32 2147483647, %v1299
        %vm1325 = vcmp.eq.f32.partialorder %v1324, 8.507059e+37
        %v1326 = vand.u32 %v1299, 2147483648
        %v1327 = vor.u32 1.1754944e-38, %v1326
        %v1328 = vsel %vm1325, %v1327, %v1323
        %v1329 = vmul.f32 %v1293, %v1328
        %1330 = vrot.lane.b32.xlu0 %v1056, 56
        %v1331 = vpop.permute.xlu0 %1330
        %v1334 = vsel %vm1066, %v1314, 0
        %1336 = vmatpush.msra.mxu0 0.0
        %1337 = vmatpush.msra.mxu0 0.0
        %1338 = vmatpush.msra.mxu0 0.0
        %1339 = vmatpush.msra.mxu0 0.0
        %1340 = vmatpush.msra.mxu0 0.0
        %1341 = vmatpush.msra.mxu0 0.0
        %1342 = vmatpush.msra.mxu0 0.0
        %1343 = vmatpush.msra.mxu0 0.0
        %1344 = vmatpush.msra.mxu0 0.0
        %1345 = vmatpush.msra.mxu0 0.0
        %1346 = vmatpush.msra.mxu0 0.0
        %1347 = vmatpush.msra.mxu0 0.0
        %1348 = vmatpush.msra.mxu0 0.0
        %1349 = vmatpush.msra.mxu0 0.0
        %1350 = vmatpush.msra.mxu0 0.0
        %1351 = vmatpush.msra.mxu0 %v1331
        %1352 = vmatmul.f32.gmra.mxu0 %v1334
        %v1353 = vpop.f32.mrf.mxu0
        %v1354 = vadd.f32 0.0, %v1353
        %1355 = vdwg.mxu0
        %1356 = vrot.lane.b32.xlu0 %v1059, 56
        %v1357 = vpop.permute.xlu0 %1356
        %v1360 = vsel %vm1066, %v1329, 0
        %1362 = vmatpush.msra.mxu0 0.0
        %1363 = vmatpush.msra.mxu0 0.0
        %1364 = vmatpush.msra.mxu0 0.0
        %1365 = vmatpush.msra.mxu0 0.0
        %1366 = vmatpush.msra.mxu0 0.0
        %1367 = vmatpush.msra.mxu0 0.0
        %1368 = vmatpush.msra.mxu0 0.0
        %1369 = vmatpush.msra.mxu0 0.0
        %1370 = vmatpush.msra.mxu0 0.0
        %1371 = vmatpush.msra.mxu0 0.0
        %1372 = vmatpush.msra.mxu0 0.0
        %1373 = vmatpush.msra.mxu0 0.0
        %1374 = vmatpush.msra.mxu0 0.0
        %1375 = vmatpush.msra.mxu0 0.0
        %1376 = vmatpush.msra.mxu0 0.0
        %1377 = vmatpush.msra.mxu0 %v1357
        %1378 = vmatmul.f32.gmra.mxu0 %v1360
        %v1379 = vpop.f32.mrf.mxu0
        %v1380 = vadd.f32 0.0, %v1379
        %1381 = vdwg.mxu0
        %1382 = vrot.lane.b32.xlu0 %v1056, 112
        %v1383 = vpop.permute.xlu0 %1382
        %1384 = vrot.lane.b32.xlu0 %v1056, 80
        %v1385 = vpop.permute.xlu0 %1384
        %v1386 = vsel %vm1066, %v1383, 0
        %v1388 = vsel %vm1066, %v1385, 0
        %1390 = vmatpush.xpose.msra.mxu0 0.0
        %1391 = vmatpush.xpose.msra.mxu0 0.0
        %1392 = vmatpush.xpose.msra.mxu0 0.0
        %1393 = vmatpush.xpose.msra.mxu0 0.0
        %1394 = vmatpush.xpose.msra.mxu0 0.0
        %1395 = vmatpush.xpose.msra.mxu0 0.0
        %1396 = vmatpush.xpose.msra.mxu0 0.0
        %1397 = vmatpush.xpose.msra.mxu0 0.0
        %1398 = vmatpush.xpose.msra.mxu0 0.0
        %1399 = vmatpush.xpose.msra.mxu0 0.0
        %1400 = vmatpush.xpose.msra.mxu0 0.0
        %1401 = vmatpush.xpose.msra.mxu0 0.0
        %1402 = vmatpush.xpose.msra.mxu0 0.0
        %1403 = vmatpush.xpose.msra.mxu0 0.0
        %1404 = vmatpush.xpose.msra.mxu0 0.0
        %1405 = vmatpush.xpose.msra.mxu0 %v1388
        %1406 = vmatmul.f32.gmra.mxu0 %v1386
        %v1407 = vpop.f32.mrf.mxu0
        %v1408 = vadd.f32 0.0, %v1407
        %1409 = vdwg.mxu0
        %1410 = vrot.lane.b32.xlu0 %v1059, 112
        %v1411 = vpop.permute.xlu0 %1410
        %1412 = vrot.lane.b32.xlu0 %v1059, 80
        %v1413 = vpop.permute.xlu0 %1412
        %v1414 = vsel %vm1066, %v1411, 0
        %v1416 = vsel %vm1066, %v1413, 0
        %1418 = vmatpush.xpose.msra.mxu0 0.0
        %1419 = vmatpush.xpose.msra.mxu0 0.0
        %1420 = vmatpush.xpose.msra.mxu0 0.0
        %1421 = vmatpush.xpose.msra.mxu0 0.0
        %1422 = vmatpush.xpose.msra.mxu0 0.0
        %1423 = vmatpush.xpose.msra.mxu0 0.0
        %1424 = vmatpush.xpose.msra.mxu0 0.0
        %1425 = vmatpush.xpose.msra.mxu0 0.0
        %1426 = vmatpush.xpose.msra.mxu0 0.0
        %1427 = vmatpush.xpose.msra.mxu0 0.0
        %1428 = vmatpush.xpose.msra.mxu0 0.0
        %1429 = vmatpush.xpose.msra.mxu0 0.0
        %1430 = vmatpush.xpose.msra.mxu0 0.0
        %1431 = vmatpush.xpose.msra.mxu0 0.0
        %1432 = vmatpush.xpose.msra.mxu0 0.0
        %1433 = vmatpush.xpose.msra.mxu0 %v1416
        %1434 = vmatmul.f32.gmra.mxu0 %v1414
        %v1435 = vpop.f32.mrf.mxu0
        %v1436 = vadd.f32 0.0, %v1435
        %1437 = vdwg.mxu0
        %v1438 = vmul.f32 %v1408, 0.35355338
        %v1439 = vmul.f32 %v1436, 0.35355338
        %v1440 = vadd.f32 %v1438, %v1061
        %v1441 = vadd.f32 %v1439, %v1062
        %v1442 = vsel %vm1066, %v1440, -inf
        %1443 = vmax.xlane.f32.xlu0 %v1442
        %v1444 = vpop.xlane.xlu0 %1443
        %v1445 = vsel %vm1066, %v1441, -inf
        %1446 = vmax.xlane.f32.xlu0 %v1445
        %v1447 = vpop.xlane.xlu0 %1446
        %v1448 = vsub.f32 %v1440, %v1444
        %v1449 = vsub.f32 %v1441, %v1447
        %v1450 = vmul.f32 %v1448, 1.442695
        %v1451 = vpow.pop %v1450
        %v1452 = vmul.f32 %v1449, 1.442695
        %v1453 = vpow.pop %v1452
        %v1454 = vsel %vm1066, %v1451, 0.0
        %1455 = vadd.xlane.f32.xlu0 %v1454
        %v1456 = vpop.xlane.xlu0 %1455
        %v1457 = vsel %vm1066, %v1453, 0.0
        %1458 = vadd.xlane.f32.xlu0 %v1457
        %v1459 = vpop.xlane.xlu0 %1458
        %v1460 = vrcp.pop %v1456
        %v1461 = vmul.f32 %v1456, %v1460
        %v1462 = vsub.f32 1.0, %v1461
        %v1463 = vmul.f32 %v1460, %v1462
        %v1464 = vadd.f32 %v1460, %v1463
        %vm1465 = vweird.f32 %v1456
        %vm1466 = vweird.f32 %v1460
        %vm1467 = vmor %vm1465, %vm1466
        %v1468 = vsel %vm1467, %v1460, %v1464
        %v1469 = vand.u32 2147483647, %v1456
        %vm1470 = vcmp.eq.f32.partialorder %v1469, 8.507059e+37
        %v1471 = vand.u32 %v1456, 2147483648
        %v1472 = vor.u32 1.1754944e-38, %v1471
        %v1473 = vsel %vm1470, %v1472, %v1468
        %v1474 = vmul.f32 %v1451, %v1473
        %v1475 = vrcp.pop %v1459
        %v1476 = vmul.f32 %v1459, %v1475
        %v1477 = vsub.f32 1.0, %v1476
        %v1478 = vmul.f32 %v1475, %v1477
        %v1479 = vadd.f32 %v1475, %v1478
        %vm1480 = vweird.f32 %v1459
        %vm1481 = vweird.f32 %v1475
        %vm1482 = vmor %vm1480, %vm1481
        %v1483 = vsel %vm1482, %v1475, %v1479
        %v1484 = vand.u32 2147483647, %v1459
        %vm1485 = vcmp.eq.f32.partialorder %v1484, 8.507059e+37
        %v1486 = vand.u32 %v1459, 2147483648
        %v1487 = vor.u32 1.1754944e-38, %v1486
        %v1488 = vsel %vm1485, %v1487, %v1483
        %v1489 = vmul.f32 %v1453, %v1488
        %1490 = vrot.lane.b32.xlu0 %v1056, 48
        %v1491 = vpop.permute.xlu0 %1490
        %v1494 = vsel %vm1066, %v1474, 0
        %1496 = vmatpush.msra.mxu0 0.0
        %1497 = vmatpush.msra.mxu0 0.0
        %1498 = vmatpush.msra.mxu0 0.0
        %1499 = vmatpush.msra.mxu0 0.0
        %1500 = vmatpush.msra.mxu0 0.0
        %1501 = vmatpush.msra.mxu0 0.0
        %1502 = vmatpush.msra.mxu0 0.0
        %1503 = vmatpush.msra.mxu0 0.0
        %1504 = vmatpush.msra.mxu0 0.0
        %1505 = vmatpush.msra.mxu0 0.0
        %1506 = vmatpush.msra.mxu0 0.0
        %1507 = vmatpush.msra.mxu0 0.0
        %1508 = vmatpush.msra.mxu0 0.0
        %1509 = vmatpush.msra.mxu0 0.0
        %1510 = vmatpush.msra.mxu0 0.0
        %1511 = vmatpush.msra.mxu0 %v1491
        %1512 = vmatmul.f32.gmra.mxu0 %v1494
        %v1513 = vpop.f32.mrf.mxu0
        %v1514 = vadd.f32 0.0, %v1513
        %1515 = vdwg.mxu0
        %1516 = vrot.lane.b32.xlu0 %v1059, 48
        %v1517 = vpop.permute.xlu0 %1516
        %v1520 = vsel %vm1066, %v1489, 0
        %1522 = vmatpush.msra.mxu0 0.0
        %1523 = vmatpush.msra.mxu0 0.0
        %1524 = vmatpush.msra.mxu0 0.0
        %1525 = vmatpush.msra.mxu0 0.0
        %1526 = vmatpush.msra.mxu0 0.0
        %1527 = vmatpush.msra.mxu0 0.0
        %1528 = vmatpush.msra.mxu0 0.0
        %1529 = vmatpush.msra.mxu0 0.0
        %1530 = vmatpush.msra.mxu0 0.0
        %1531 = vmatpush.msra.mxu0 0.0
        %1532 = vmatpush.msra.mxu0 0.0
        %1533 = vmatpush.msra.mxu0 0.0
        %1534 = vmatpush.msra.mxu0 0.0
        %1535 = vmatpush.msra.mxu0 0.0
        %1536 = vmatpush.msra.mxu0 0.0
        %1537 = vmatpush.msra.mxu0 %v1517
        %1538 = vmatmul.f32.gmra.mxu0 %v1520
        %v1539 = vpop.f32.mrf.mxu0
        %v1540 = vadd.f32 0.0, %v1539
        %1541 = vdwg.mxu0
        %1542 = vrot.lane.b32.xlu0 %v1056, 104
        %v1543 = vpop.permute.xlu0 %1542
        %1544 = vrot.lane.b32.xlu0 %v1056, 72
        %v1545 = vpop.permute.xlu0 %1544
        %v1546 = vsel %vm1066, %v1543, 0
        %v1548 = vsel %vm1066, %v1545, 0
        %1550 = vmatpush.xpose.msra.mxu0 0.0
        %1551 = vmatpush.xpose.msra.mxu0 0.0
        %1552 = vmatpush.xpose.msra.mxu0 0.0
        %1553 = vmatpush.xpose.msra.mxu0 0.0
        %1554 = vmatpush.xpose.msra.mxu0 0.0
        %1555 = vmatpush.xpose.msra.mxu0 0.0
        %1556 = vmatpush.xpose.msra.mxu0 0.0
        %1557 = vmatpush.xpose.msra.mxu0 0.0
        %1558 = vmatpush.xpose.msra.mxu0 0.0
        %1559 = vmatpush.xpose.msra.mxu0 0.0
        %1560 = vmatpush.xpose.msra.mxu0 0.0
        %1561 = vmatpush.xpose.msra.mxu0 0.0
        %1562 = vmatpush.xpose.msra.mxu0 0.0
        %1563 = vmatpush.xpose.msra.mxu0 0.0
        %1564 = vmatpush.xpose.msra.mxu0 0.0
        %1565 = vmatpush.xpose.msra.mxu0 %v1548
        %1566 = vmatmul.f32.gmra.mxu0 %v1546
        %v1567 = vpop.f32.mrf.mxu0
        %v1568 = vadd.f32 0.0, %v1567
        %1569 = vdwg.mxu0
        %1570 = vrot.lane.b32.xlu0 %v1059, 104
        %v1571 = vpop.permute.xlu0 %1570
        %1572 = vrot.lane.b32.xlu0 %v1059, 72
        %v1573 = vpop.permute.xlu0 %1572
        %v1574 = vsel %vm1066, %v1571, 0
        %v1576 = vsel %vm1066, %v1573, 0
        %1578 = vmatpush.xpose.msra.mxu0 0.0
        %1579 = vmatpush.xpose.msra.mxu0 0.0
        %1580 = vmatpush.xpose.msra.mxu0 0.0
        %1581 = vmatpush.xpose.msra.mxu0 0.0
        %1582 = vmatpush.xpose.msra.mxu0 0.0
        %1583 = vmatpush.xpose.msra.mxu0 0.0
        %1584 = vmatpush.xpose.msra.mxu0 0.0
        %1585 = vmatpush.xpose.msra.mxu0 0.0
        %1586 = vmatpush.xpose.msra.mxu0 0.0
        %1587 = vmatpush.xpose.msra.mxu0 0.0
        %1588 = vmatpush.xpose.msra.mxu0 0.0
        %1589 = vmatpush.xpose.msra.mxu0 0.0
        %1590 = vmatpush.xpose.msra.mxu0 0.0
        %1591 = vmatpush.xpose.msra.mxu0 0.0
        %1592 = vmatpush.xpose.msra.mxu0 0.0
        %1593 = vmatpush.xpose.msra.mxu0 %v1576
        %1594 = vmatmul.f32.gmra.mxu0 %v1574
        %v1595 = vpop.f32.mrf.mxu0
        %v1596 = vadd.f32 0.0, %v1595
        %1597 = vdwg.mxu0
        %v1598 = vmul.f32 %v1568, 0.35355338
        %v1599 = vmul.f32 %v1596, 0.35355338
        %v1600 = vadd.f32 %v1598, %v1061
        %v1601 = vadd.f32 %v1599, %v1062
        %v1602 = vsel %vm1066, %v1600, -inf
        %1603 = vmax.xlane.f32.xlu0 %v1602
        %v1604 = vpop.xlane.xlu0 %1603
        %v1605 = vsel %vm1066, %v1601, -inf
        %1606 = vmax.xlane.f32.xlu0 %v1605
        %v1607 = vpop.xlane.xlu0 %1606
        %v1608 = vsub.f32 %v1600, %v1604
        %v1609 = vsub.f32 %v1601, %v1607
        %v1610 = vmul.f32 %v1608, 1.442695
        %v1611 = vpow.pop %v1610
        %v1612 = vmul.f32 %v1609, 1.442695
        %v1613 = vpow.pop %v1612
        %v1614 = vsel %vm1066, %v1611, 0.0
        %1615 = vadd.xlane.f32.xlu0 %v1614
        %v1616 = vpop.xlane.xlu0 %1615
        %v1617 = vsel %vm1066, %v1613, 0.0
        %1618 = vadd.xlane.f32.xlu0 %v1617
        %v1619 = vpop.xlane.xlu0 %1618
        %v1620 = vrcp.pop %v1616
        %v1621 = vmul.f32 %v1616, %v1620
        %v1622 = vsub.f32 1.0, %v1621
        %v1623 = vmul.f32 %v1620, %v1622
        %v1624 = vadd.f32 %v1620, %v1623
        %vm1625 = vweird.f32 %v1616
        %vm1626 = vweird.f32 %v1620
        %vm1627 = vmor %vm1625, %vm1626
        %v1628 = vsel %vm1627, %v1620, %v1624
        %v1629 = vand.u32 2147483647, %v1616
        %vm1630 = vcmp.eq.f32.partialorder %v1629, 8.507059e+37
        %v1631 = vand.u32 %v1616, 2147483648
        %v1632 = vor.u32 1.1754944e-38, %v1631
        %v1633 = vsel %vm1630, %v1632, %v1628
        %v1634 = vmul.f32 %v1611, %v1633
        %v1635 = vrcp.pop %v1619
        %v1636 = vmul.f32 %v1619, %v1635
        %v1637 = vsub.f32 1.0, %v1636
        %v1638 = vmul.f32 %v1635, %v1637
        %v1639 = vadd.f32 %v1635, %v1638
        %vm1640 = vweird.f32 %v1619
        %vm1641 = vweird.f32 %v1635
        %vm1642 = vmor %vm1640, %vm1641
        %v1643 = vsel %vm1642, %v1635, %v1639
        %v1644 = vand.u32 2147483647, %v1619
        %vm1645 = vcmp.eq.f32.partialorder %v1644, 8.507059e+37
        %v1646 = vand.u32 %v1619, 2147483648
        %v1647 = vor.u32 1.1754944e-38, %v1646
        %v1648 = vsel %vm1645, %v1647, %v1643
        %v1649 = vmul.f32 %v1613, %v1648
        %1650 = vrot.lane.b32.xlu0 %v1056, 40
        %v1651 = vpop.permute.xlu0 %1650
        %v1654 = vsel %vm1066, %v1634, 0
        %1656 = vmatpush.msra.mxu0 0.0
        %1657 = vmatpush.msra.mxu0 0.0
        %1658 = vmatpush.msra.mxu0 0.0
        %1659 = vmatpush.msra.mxu0 0.0
        %1660 = vmatpush.msra.mxu0 0.0
        %1661 = vmatpush.msra.mxu0 0.0
        %1662 = vmatpush.msra.mxu0 0.0
        %1663 = vmatpush.msra.mxu0 0.0
        %1664 = vmatpush.msra.mxu0 0.0
        %1665 = vmatpush.msra.mxu0 0.0
        %1666 = vmatpush.msra.mxu0 0.0
        %1667 = vmatpush.msra.mxu0 0.0
        %1668 = vmatpush.msra.mxu0 0.0
        %1669 = vmatpush.msra.mxu0 0.0
        %1670 = vmatpush.msra.mxu0 0.0
        %1671 = vmatpush.msra.mxu0 %v1651
        %1672 = vmatmul.f32.gmra.mxu0 %v1654
        %v1673 = vpop.f32.mrf.mxu0
        %v1674 = vadd.f32 0.0, %v1673
        %1675 = vdwg.mxu0
        %1676 = vrot.lane.b32.xlu0 %v1059, 40
        %v1677 = vpop.permute.xlu0 %1676
        %v1680 = vsel %vm1066, %v1649, 0
        %1682 = vmatpush.msra.mxu0 0.0
        %1683 = vmatpush.msra.mxu0 0.0
        %1684 = vmatpush.msra.mxu0 0.0
        %1685 = vmatpush.msra.mxu0 0.0
        %1686 = vmatpush.msra.mxu0 0.0
        %1687 = vmatpush.msra.mxu0 0.0
        %1688 = vmatpush.msra.mxu0 0.0
        %1689 = vmatpush.msra.mxu0 0.0
        %1690 = vmatpush.msra.mxu0 0.0
        %1691 = vmatpush.msra.mxu0 0.0
        %1692 = vmatpush.msra.mxu0 0.0
        %1693 = vmatpush.msra.mxu0 0.0
        %1694 = vmatpush.msra.mxu0 0.0
        %1695 = vmatpush.msra.mxu0 0.0
        %1696 = vmatpush.msra.mxu0 0.0
        %1697 = vmatpush.msra.mxu0 %v1677
        %1698 = vmatmul.f32.gmra.mxu0 %v1680
        %v1699 = vpop.f32.mrf.mxu0
        %v1700 = vadd.f32 0.0, %v1699
        %1701 = vdwg.mxu0
        %1704 = vrot.lane.b32.xlu0 %v1354, 8
        %v1705 = vpop.permute.xlu0 %1704
        %1706 = vrot.lane.b32.xlu0 %v1380, 8
        %v1707 = vpop.permute.xlu0 %1706
        %1712 = vrot.lane.b32.xlu0 %v1514, 16
        %v1713 = vpop.permute.xlu0 %1712
        %1714 = vrot.lane.b32.xlu0 %v1540, 16
        %v1715 = vpop.permute.xlu0 %1714
        %1720 = vrot.lane.b32.xlu0 %v1674, 24
        %v1721 = vpop.permute.xlu0 %1720
        %1722 = vrot.lane.b32.xlu0 %v1700, 24
        %v1723 = vpop.permute.xlu0 %1722
        %v1726 = vsel %vm1066, %v1194, %v1705
        %v1727 = vsel %vm1066, %v1220, %v1707
        %vm1728 = vcmask 130048
        %v1729 = vsel %vm1728, %v1726, %v1713
        %v1730 = vsel %vm1728, %v1727, %v1715
        %vm1731 = vcmask 195584
        %v1732 = vsel %vm1731, %v1729, %v1721
        %v1733 = vsel %vm1731, %v1730, %v1723
        %v1734 = vld [vmem:[%s897] sm:$0xff]
        %v1735 = vld [vmem:[%s897 + $0x8] sm:$0xff]
        %v1736 = vld [vmem:[%s897 + $0x10] sm:$0xff]
        %v1737 = vld [vmem:[%s897 + $0x18] sm:$0xff]
        %v1738 = vld [vmem:[%s900] sm:$0x1]
        %v1740 = vperm.slane %v1738, 0
        %v1743 = vsel %vm1031, %v1732, 0
        %v1746 = vsel %vm1031, %v1733, 0
        %1748 = vmatpush.msra.mxu0 0.0
        %1749 = vmatpush.msra.mxu0 0.0
        %1750 = vmatpush.msra.mxu0 0.0
        %1751 = vmatpush.msra.mxu0 0.0
        %1752 = vmatpush.msra.mxu0 0.0
        %1753 = vmatpush.msra.mxu0 0.0
        %1754 = vmatpush.msra.mxu0 0.0
        %1755 = vmatpush.msra.mxu0 0.0
        %1756 = vmatpush.msra.mxu0 0.0
        %1757 = vmatpush.msra.mxu0 0.0
        %1758 = vmatpush.msra.mxu0 0.0
        %1759 = vmatpush.msra.mxu0 0.0
        %1760 = vmatpush.msra.mxu0 %v1737
        %1761 = vmatpush.msra.mxu0 %v1736
        %1762 = vmatpush.msra.mxu0 %v1735
        %1763 = vmatpush.msra.mxu0 %v1734
        %1764 = vmatmul.f32.gmra.mxu0 %v1743
        %v1765 = vpop.f32.mrf.mxu0
        %v1766 = vadd.f32 %v1740, %v1765
        %1767 = vmatmul.f32.gmra.mxu0 %v1746
        %v1768 = vpop.f32.mrf.mxu0
        %v1769 = vadd.f32 %v1740, %v1768
        %1770 = vdwg.mxu0
        %v1771 = vadd.f32 %v1021, %v1766
        %v1772 = vadd.f32 %v1022, %v1769
        %v1773 = vsel %vm1031, %v1771, 0.0
        %1774 = vadd.xlane.f32.xlu0 %v1773
        %v1775 = vpop.xlane.xlu0 %1774
        %v1776 = vsel %vm1031, %v1772, 0.0
        %1777 = vadd.xlane.f32.xlu0 %v1776
        %v1778 = vpop.xlane.xlu0 %1777
        %v1779 = vrcp.pop 32.0
        %v1780 = vmul.f32 32.0, %v1779
        %v1781 = vsub.f32 1.0, %v1780
        %v1782 = vmul.f32 %v1779, %v1781
        %v1783 = vadd.f32 %v1779, %v1782
        %vm1784 = vweird.f32 %v1779
        %v1785 = vsel %vm1784, %v1779, %v1783
        %v1786 = vmul.f32 %v1775, %v1785
        %v1787 = vmul.f32 %v1778, %v1785
        %v1788 = vsub.f32 %v1771, %v1786
        %v1789 = vsub.f32 %v1772, %v1787
        %v1790 = vmul.f32 %v1788, %v1788
        %v1791 = vmul.f32 %v1789, %v1789
        %v1792 = vsel %vm1031, %v1790, 0.0
        %1793 = vadd.xlane.f32.xlu0 %v1792
        %v1794 = vpop.xlane.xlu0 %1793
        %v1795 = vsel %vm1031, %v1791, 0.0
        %1796 = vadd.xlane.f32.xlu0 %v1795
        %v1797 = vpop.xlane.xlu0 %1796
        %v1798 = vmul.f32 %v1794, %v1785
        %v1799 = vmul.f32 %v1797, %v1785
        %v1800 = vadd.f32 %v1798, 1e-05
        %v1801 = vadd.f32 %v1799, 1e-05
        %v1802 = vrsqrt.pop %v1800
        %v1803 = vmul.f32 %v1802, %v1800
        %v1804 = vmul.f32 %v1803, %v1802
        %v1805 = vmul.f32 0.5, %v1804
        %v1806 = vsub.f32 1.5, %v1805
        %v1807 = vmul.f32 %v1802, %v1806
        %vm1808 = vweird.f32 %v1800
        %vm1809 = vweird.f32 %v1802
        %vm1810 = vmor %vm1808, %vm1809
        %v1811 = vsel %vm1810, %v1802, %v1807
        %v1812 = vrsqrt.pop %v1801
        %v1813 = vmul.f32 %v1812, %v1801
        %v1814 = vmul.f32 %v1813, %v1812
        %v1815 = vmul.f32 0.5, %v1814
        %v1816 = vsub.f32 1.5, %v1815
        %v1817 = vmul.f32 %v1812, %v1816
        %vm1818 = vweird.f32 %v1801
        %vm1819 = vweird.f32 %v1812
        %vm1820 = vmor %vm1818, %vm1819
        %v1821 = vsel %vm1820, %v1812, %v1817
        %v1822 = vmul.f32 %v1788, %v1811
        %v1823 = vmul.f32 %v1789, %v1821
        %v1824 = vperm.slane %v1019, 0
        %v1825 = vmul.f32 %v1822, %v1824
        %v1826 = vmul.f32 %v1823, %v1824
        %v1827 = vperm.slane %v1020, 0
        %v1828 = vadd.f32 %v1825, %v1827
        %v1829 = vadd.f32 %v1826, %v1827
        %v1830 = vld [vmem:[#allocation3] sm:$0xff]
        %v1831 = vld [vmem:[#allocation3 + $0x8] sm:$0xff]
        %v1832 = vld [vmem:[#allocation3 + $0x10] sm:$0xff]
        %v1833 = vld [vmem:[#allocation3 + $0x18] sm:$0xff]
        %v1834 = vld [vmem:[%s905] sm:$0xff]
        %v1835 = vld [vmem:[%s905 + $0x8] sm:$0xff]
        %v1836 = vld [vmem:[%s905 + $0x10] sm:$0xff]
        %v1837 = vld [vmem:[%s905 + $0x18] sm:$0xff]
        %v1838 = vld [vmem:[%s908] sm:$0x1]
        %v1840 = vperm.slane %v1838, 0
        %v1843 = vsel %vm1031, %v1828, 0
        %v1846 = vsel %vm1031, %v1829, 0
        %1848 = vmatpush.msra.mxu0 0.0
        %1849 = vmatpush.msra.mxu0 0.0
        %1850 = vmatpush.msra.mxu0 0.0
        %1851 = vmatpush.msra.mxu0 0.0
        %1852 = vmatpush.msra.mxu0 0.0
        %1853 = vmatpush.msra.mxu0 0.0
        %1854 = vmatpush.msra.mxu0 0.0
        %1855 = vmatpush.msra.mxu0 0.0
        %1856 = vmatpush.msra.mxu0 0.0
        %1857 = vmatpush.msra.mxu0 0.0
        %1858 = vmatpush.msra.mxu0 0.0
        %1859 = vmatpush.msra.mxu0 0.0
        %1860 = vmatpush.msra.mxu0 %v1837
        %1861 = vmatpush.msra.mxu0 %v1836
        %1862 = vmatpush.msra.mxu0 %v1835
        %1863 = vmatpush.msra.mxu0 %v1834
        %1864 = vmatmul.f32.gmra.mxu0 %v1843
        %v1865 = vpop.f32.mrf.mxu0
        %v1866 = vadd.f32 %v1840, %v1865
        %1867 = vmatmul.f32.gmra.mxu0 %v1846
        %v1868 = vpop.f32.mrf.mxu0
        %v1869 = vadd.f32 %v1840, %v1868
        %1870 = vdwg.mxu0
        %v1871 = vld [vmem:[%s913] sm:$0xff]
        %v1872 = vld [vmem:[%s913 + $0x8] sm:$0xff]
        %v1873 = vld [vmem:[%s913 + $0x10] sm:$0xff]
        %v1874 = vld [vmem:[%s913 + $0x18] sm:$0xff]
        %v1875 = vld [vmem:[%s916] sm:$0x1]
        %v1877 = vperm.slane %v1875, 0
        %v1880 = vsel %vm1031, %v1830, 0
        %v1883 = vsel %vm1031, %v1831, 0
        %v1886 = vsel %vm1031, %v1832, 0
        %v1889 = vsel %vm1031, %v1833, 0
        %1891 = vmatpush.msra.mxu0 0.0
        %1892 = vmatpush.msra.mxu0 0.0
        %1893 = vmatpush.msra.mxu0 0.0
        %1894 = vmatpush.msra.mxu0 0.0
        %1895 = vmatpush.msra.mxu0 0.0
        %1896 = vmatpush.msra.mxu0 0.0
        %1897 = vmatpush.msra.mxu0 0.0
        %1898 = vmatpush.msra.mxu0 0.0
        %1899 = vmatpush.msra.mxu0 0.0
        %1900 = vmatpush.msra.mxu0 0.0
        %1901 = vmatpush.msra.mxu0 0.0
        %1902 = vmatpush.msra.mxu0 0.0
        %1903 = vmatpush.msra.mxu0 %v1874
        %1904 = vmatpush.msra.mxu0 %v1873
        %1905 = vmatpush.msra.mxu0 %v1872
        %1906 = vmatpush.msra.mxu0 %v1871
        %1907 = vmatmul.f32.gmra.mxu0 %v1880
        %v1908 = vpop.f32.mrf.mxu0
        %v1909 = vadd.f32 %v1877, %v1908
        %1910 = vmatmul.f32.gmra.mxu0 %v1883
        %v1911 = vpop.f32.mrf.mxu0
        %v1912 = vadd.f32 %v1877, %v1911
        %1913 = vmatmul.f32.gmra.mxu0 %v1886
        %v1914 = vpop.f32.mrf.mxu0
        %v1915 = vadd.f32 %v1877, %v1914
        %1916 = vmatmul.f32.gmra.mxu0 %v1889
        %v1917 = vpop.f32.mrf.mxu0
        %v1918 = vadd.f32 %v1877, %v1917
        %1919 = vdwg.mxu0
        %v1921 = vsel %vm1066, %v1866, 0
        %v1924 = vsel %vm1066, %v1909, 0
        %v1927 = vsel %vm1066, %v1912, 0
        %1929 = vmatpush.xpose.msra.mxu0 0.0
        %1930 = vmatpush.xpose.msra.mxu0 0.0
        %1931 = vmatpush.xpose.msra.mxu0 0.0
        %1932 = vmatpush.xpose.msra.mxu0 0.0
        %1933 = vmatpush.xpose.msra.mxu0 0.0
        %1934 = vmatpush.xpose.msra.mxu0 0.0
        %1935 = vmatpush.xpose.msra.mxu0 0.0
        %1936 = vmatpush.xpose.msra.mxu0 0.0
        %1937 = vmatpush.xpose.msra.mxu0 0.0
        %1938 = vmatpush.xpose.msra.mxu0 0.0
        %1939 = vmatpush.xpose.msra.mxu0 0.0
        %1940 = vmatpush.xpose.msra.mxu0 0.0
        %1941 = vmatpush.xpose.msra.mxu0 0.0
        %1942 = vmatpush.xpose.msra.mxu0 0.0
        %1943 = vmatpush.xpose.msra.mxu0 %v1927
        %1944 = vmatpush.xpose.msra.mxu0 %v1924
        %1945 = vmatmul.f32.gmra.mxu0 %v1921
        %v1946 = vpop.f32.mrf.mxu0
        %v1947 = vadd.f32 0.0, %v1946
        %1948 = vdwg.mxu0
        %v1950 = vsel %vm1066, %v1869, 0
        %v1953 = vsel %vm1066, %v1915, 0
        %v1956 = vsel %vm1066, %v1918, 0
        %1958 = vmatpush.xpose.msra.mxu0 0.0
        %1959 = vmatpush.xpose.msra.mxu0 0.0
        %1960 = vmatpush.xpose.msra.mxu0 0.0
        %1961 = vmatpush.xpose.msra.mxu0 0.0
        %1962 = vmatpush.xpose.msra.mxu0 0.0
        %1963 = vmatpush.xpose.msra.mxu0 0.0
        %1964 = vmatpush.xpose.msra.mxu0 0.0
        %1965 = vmatpush.xpose.msra.mxu0 0.0
        %1966 = vmatpush.xpose.msra.mxu0 0.0
        %1967 = vmatpush.xpose.msra.mxu0 0.0
        %1968 = vmatpush.xpose.msra.mxu0 0.0
        %1969 = vmatpush.xpose.msra.mxu0 0.0
        %1970 = vmatpush.xpose.msra.mxu0 0.0
        %1971 = vmatpush.xpose.msra.mxu0 0.0
        %1972 = vmatpush.xpose.msra.mxu0 %v1956
        %1973 = vmatpush.xpose.msra.mxu0 %v1953
        %1974 = vmatmul.f32.gmra.mxu0 %v1950
        %v1975 = vpop.f32.mrf.mxu0
        %v1976 = vadd.f32 0.0, %v1975
        %1977 = vdwg.mxu0
        %v1978 = vmul.f32 %v1947, 0.35355338
        %v1979 = vmul.f32 %v1976, 0.35355338
        %v1980 = vsel %vm1728, %v1978, -inf
        %1981 = vmax.xlane.f32.xlu0 %v1980
        %v1982 = vpop.xlane.xlu0 %1981
        %v1983 = vsel %vm1728, %v1979, -inf
        %1984 = vmax.xlane.f32.xlu0 %v1983
        %v1985 = vpop.xlane.xlu0 %1984
        %v1986 = vsub.f32 %v1978, %v1982
        %v1987 = vsub.f32 %v1979, %v1985
        %v1988 = vmul.f32 %v1986, 1.442695
        %v1989 = vpow.pop %v1988
        %v1990 = vmul.f32 %v1987, 1.442695
        %v1991 = vpow.pop %v1990
        %v1992 = vsel %vm1728, %v1989, 0.0
        %1993 = vadd.xlane.f32.xlu0 %v1992
        %v1994 = vpop.xlane.xlu0 %1993
        %v1995 = vsel %vm1728, %v1991, 0.0
        %1996 = vadd.xlane.f32.xlu0 %v1995
        %v1997 = vpop.xlane.xlu0 %1996
        %v1998 = vrcp.pop %v1994
        %v1999 = vmul.f32 %v1994, %v1998
        %v2000 = vsub.f32 1.0, %v1999
        %v2001 = vmul.f32 %v1998, %v2000
        %v2002 = vadd.f32 %v1998, %v2001
        %vm2003 = vweird.f32 %v1994
        %vm2004 = vweird.f32 %v1998
        %vm2005 = vmor %vm2003, %vm2004
        %v2006 = vsel %vm2005, %v1998, %v2002
        %v2007 = vand.u32 2147483647, %v1994
        %vm2008 = vcmp.eq.f32.partialorder %v2007, 8.507059e+37
        %v2009 = vand.u32 %v1994, 2147483648
        %v2010 = vor.u32 1.1754944e-38, %v2009
        %v2011 = vsel %vm2008, %v2010, %v2006
        %v2012 = vmul.f32 %v1989, %v2011
        %v2013 = vrcp.pop %v1997
        %v2014 = vmul.f32 %v1997, %v2013
        %v2015 = vsub.f32 1.0, %v2014
        %v2016 = vmul.f32 %v2013, %v2015
        %v2017 = vadd.f32 %v2013, %v2016
        %vm2018 = vweird.f32 %v1997
        %vm2019 = vweird.f32 %v2013
        %vm2020 = vmor %vm2018, %vm2019
        %v2021 = vsel %vm2020, %v2013, %v2017
        %v2022 = vand.u32 2147483647, %v1997
        %vm2023 = vcmp.eq.f32.partialorder %v2022, 8.507059e+37
        %v2024 = vand.u32 %v1997, 2147483648
        %v2025 = vor.u32 1.1754944e-38, %v2024
        %v2026 = vsel %vm2023, %v2025, %v2021
        %v2027 = vmul.f32 %v1991, %v2026
        %2028 = vrot.lane.b32.xlu0 %v1909, 96
        %v2029 = vpop.permute.xlu0 %2028
        %2030 = vrot.lane.b32.xlu0 %v1912, 96
        %v2031 = vpop.permute.xlu0 %2030
        %v2035 = vsel %vm1728, %v2012, 0
        %2037 = vmatpush.msra.mxu0 0.0
        %2038 = vmatpush.msra.mxu0 0.0
        %2039 = vmatpush.msra.mxu0 0.0
        %2040 = vmatpush.msra.mxu0 0.0
        %2041 = vmatpush.msra.mxu0 0.0
        %2042 = vmatpush.msra.mxu0 0.0
        %2043 = vmatpush.msra.mxu0 0.0
        %2044 = vmatpush.msra.mxu0 0.0
        %2045 = vmatpush.msra.mxu0 0.0
        %2046 = vmatpush.msra.mxu0 0.0
        %2047 = vmatpush.msra.mxu0 0.0
        %2048 = vmatpush.msra.mxu0 0.0
        %2049 = vmatpush.msra.mxu0 0.0
        %2050 = vmatpush.msra.mxu0 0.0
        %2051 = vmatpush.msra.mxu0 %v2031
        %2052 = vmatpush.msra.mxu0 %v2029
        %2053 = vmatmul.f32.gmra.mxu0 %v2035
        %v2054 = vpop.f32.mrf.mxu0
        %v2055 = vadd.f32 0.0, %v2054
        %2056 = vdwg.mxu0
        %2057 = vrot.lane.b32.xlu0 %v1915, 96
        %v2058 = vpop.permute.xlu0 %2057
        %2059 = vrot.lane.b32.xlu0 %v1918, 96
        %v2060 = vpop.permute.xlu0 %2059
        %v2064 = vsel %vm1728, %v2027, 0
        %2066 = vmatpush.msra.mxu0 0.0
        %2067 = vmatpush.msra.mxu0 0.0
        %2068 = vmatpush.msra.mxu0 0.0
        %2069 = vmatpush.msra.mxu0 0.0
        %2070 = vmatpush.msra.mxu0 0.0
        %2071 = vmatpush.msra.mxu0 0.0
        %2072 = vmatpush.msra.mxu0 0.0
        %2073 = vmatpush.msra.mxu0 0.0
        %2074 = vmatpush.msra.mxu0 0.0
        %2075 = vmatpush.msra.mxu0 0.0
        %2076 = vmatpush.msra.mxu0 0.0
        %2077 = vmatpush.msra.mxu0 0.0
        %2078 = vmatpush.msra.mxu0 0.0
        %2079 = vmatpush.msra.mxu0 0.0
        %2080 = vmatpush.msra.mxu0 %v2060
        %2081 = vmatpush.msra.mxu0 %v2058
        %2082 = vmatmul.f32.gmra.mxu0 %v2064
        %v2083 = vpop.f32.mrf.mxu0
        %v2084 = vadd.f32 0.0, %v2083
        %2085 = vdwg.mxu0
        %2086 = vrot.lane.b32.xlu0 %v1866, 120
        %v2087 = vpop.permute.xlu0 %2086
        %2088 = vrot.lane.b32.xlu0 %v1909, 120
        %v2089 = vpop.permute.xlu0 %2088
        %2090 = vrot.lane.b32.xlu0 %v1912, 120
        %v2091 = vpop.permute.xlu0 %2090
        %v2092 = vsel %vm1066, %v2087, 0
        %v2094 = vsel %vm1066, %v2089, 0
        %v2096 = vsel %vm1066, %v2091, 0
        %2098 = vmatpush.xpose.msra.mxu0 0.0
        %2099 = vmatpush.xpose.msra.mxu0 0.0
        %2100 = vmatpush.xpose.msra.mxu0 0.0
        %2101 = vmatpush.xpose.msra.mxu0 0.0
        %2102 = vmatpush.xpose.msra.mxu0 0.0
        %2103 = vmatpush.xpose.msra.mxu0 0.0
        %2104 = vmatpush.xpose.msra.mxu0 0.0
        %2105 = vmatpush.xpose.msra.mxu0 0.0
        %2106 = vmatpush.xpose.msra.mxu0 0.0
        %2107 = vmatpush.xpose.msra.mxu0 0.0
        %2108 = vmatpush.xpose.msra.mxu0 0.0
        %2109 = vmatpush.xpose.msra.mxu0 0.0
        %2110 = vmatpush.xpose.msra.mxu0 0.0
        %2111 = vmatpush.xpose.msra.mxu0 0.0
        %2112 = vmatpush.xpose.msra.mxu0 %v2096
        %2113 = vmatpush.xpose.msra.mxu0 %v2094
        %2114 = vmatmul.f32.gmra.mxu0 %v2092
        %v2115 = vpop.f32.mrf.mxu0
        %v2116 = vadd.f32 0.0, %v2115
        %2117 = vdwg.mxu0
        %2118 = vrot.lane.b32.xlu0 %v1869, 120
        %v2119 = vpop.permute.xlu0 %2118
        %2120 = vrot.lane.b32.xlu0 %v1915, 120
        %v2121 = vpop.permute.xlu0 %2120
        %2122 = vrot.lane.b32.xlu0 %v1918, 120
        %v2123 = vpop.permute.xlu0 %2122
        %v2124 = vsel %vm1066, %v2119, 0
        %v2126 = vsel %vm1066, %v2121, 0
        %v2128 = vsel %vm1066, %v2123, 0
        %2130 = vmatpush.xpose.msra.mxu0 0.0
        %2131 = vmatpush.xpose.msra.mxu0 0.0
        %2132 = vmatpush.xpose.msra.mxu0 0.0
        %2133 = vmatpush.xpose.msra.mxu0 0.0
        %2134 = vmatpush.xpose.msra.mxu0 0.0
        %2135 = vmatpush.xpose.msra.mxu0 0.0
        %2136 = vmatpush.xpose.msra.mxu0 0.0
        %2137 = vmatpush.xpose.msra.mxu0 0.0
        %2138 = vmatpush.xpose.msra.mxu0 0.0
        %2139 = vmatpush.xpose.msra.mxu0 0.0
        %2140 = vmatpush.xpose.msra.mxu0 0.0
        %2141 = vmatpush.xpose.msra.mxu0 0.0
        %2142 = vmatpush.xpose.msra.mxu0 0.0
        %2143 = vmatpush.xpose.msra.mxu0 0.0
        %2144 = vmatpush.xpose.msra.mxu0 %v2128
        %2145 = vmatpush.xpose.msra.mxu0 %v2126
        %2146 = vmatmul.f32.gmra.mxu0 %v2124
        %v2147 = vpop.f32.mrf.mxu0
        %v2148 = vadd.f32 0.0, %v2147
        %2149 = vdwg.mxu0
        %v2150 = vmul.f32 %v2116, 0.35355338
        %v2151 = vmul.f32 %v2148, 0.35355338
        %v2152 = vsel %vm1728, %v2150, -inf
        %2153 = vmax.xlane.f32.xlu0 %v2152
        %v2154 = vpop.xlane.xlu0 %2153
        %v2155 = vsel %vm1728, %v2151, -inf
        %2156 = vmax.xlane.f32.xlu0 %v2155
        %v2157 = vpop.xlane.xlu0 %2156
        %v2158 = vsub.f32 %v2150, %v2154
        %v2159 = vsub.f32 %v2151, %v2157
        %v2160 = vmul.f32 %v2158, 1.442695
        %v2161 = vpow.pop %v2160
        %v2162 = vmul.f32 %v2159, 1.442695
        %v2163 = vpow.pop %v2162
        %v2164 = vsel %vm1728, %v2161, 0.0
        %2165 = vadd.xlane.f32.xlu0 %v2164
        %v2166 = vpop.xlane.xlu0 %2165
        %v2167 = vsel %vm1728, %v2163, 0.0
        %2168 = vadd.xlane.f32.xlu0 %v2167
        %v2169 = vpop.xlane.xlu0 %2168
        %v2170 = vrcp.pop %v2166
        %v2171 = vmul.f32 %v2166, %v2170
        %v2172 = vsub.f32 1.0, %v2171
        %v2173 = vmul.f32 %v2170, %v2172
        %v2174 = vadd.f32 %v2170, %v2173
        %vm2175 = vweird.f32 %v2166
        %vm2176 = vweird.f32 %v2170
        %vm2177 = vmor %vm2175, %vm2176
        %v2178 = vsel %vm2177, %v2170, %v2174
        %v2179 = vand.u32 2147483647, %v2166
        %vm2180 = vcmp.eq.f32.partialorder %v2179, 8.507059e+37
        %v2181 = vand.u32 %v2166, 2147483648
        %v2182 = vor.u32 1.1754944e-38, %v2181
        %v2183 = vsel %vm2180, %v2182, %v2178
        %v2184 = vmul.f32 %v2161, %v2183
        %v2185 = vrcp.pop %v2169
        %v2186 = vmul.f32 %v2169, %v2185
        %v2187 = vsub.f32 1.0, %v2186
        %v2188 = vmul.f32 %v2185, %v2187
        %v2189 = vadd.f32 %v2185, %v2188
        %vm2190 = vweird.f32 %v2169
        %vm2191 = vweird.f32 %v2185
        %vm2192 = vmor %vm2190, %vm2191
        %v2193 = vsel %vm2192, %v2185, %v2189
        %v2194 = vand.u32 2147483647, %v2169
        %vm2195 = vcmp.eq.f32.partialorder %v2194, 8.507059e+37
        %v2196 = vand.u32 %v2169, 2147483648
        %v2197 = vor.u32 1.1754944e-38, %v2196
        %v2198 = vsel %vm2195, %v2197, %v2193
        %v2199 = vmul.f32 %v2163, %v2198
        %2200 = vrot.lane.b32.xlu0 %v1909, 88
        %v2201 = vpop.permute.xlu0 %2200
        %2202 = vrot.lane.b32.xlu0 %v1912, 88
        %v2203 = vpop.permute.xlu0 %2202
        %v2207 = vsel %vm1728, %v2184, 0
        %2209 = vmatpush.msra.mxu0 0.0
        %2210 = vmatpush.msra.mxu0 0.0
        %2211 = vmatpush.msra.mxu0 0.0
        %2212 = vmatpush.msra.mxu0 0.0
        %2213 = vmatpush.msra.mxu0 0.0
        %2214 = vmatpush.msra.mxu0 0.0
        %2215 = vmatpush.msra.mxu0 0.0
        %2216 = vmatpush.msra.mxu0 0.0
        %2217 = vmatpush.msra.mxu0 0.0
        %2218 = vmatpush.msra.mxu0 0.0
        %2219 = vmatpush.msra.mxu0 0.0
        %2220 = vmatpush.msra.mxu0 0.0
        %2221 = vmatpush.msra.mxu0 0.0
        %2222 = vmatpush.msra.mxu0 0.0
        %2223 = vmatpush.msra.mxu0 %v2203
        %2224 = vmatpush.msra.mxu0 %v2201
        %2225 = vmatmul.f32.gmra.mxu0 %v2207
        %v2226 = vpop.f32.mrf.mxu0
        %v2227 = vadd.f32 0.0, %v2226
        %2228 = vdwg.mxu0
        %2229 = vrot.lane.b32.xlu0 %v1915, 88
        %v2230 = vpop.permute.xlu0 %2229
        %2231 = vrot.lane.b32.xlu0 %v1918, 88
        %v2232 = vpop.permute.xlu0 %2231
        %v2236 = vsel %vm1728, %v2199, 0
        %2238 = vmatpush.msra.mxu0 0.0
        %2239 = vmatpush.msra.mxu0 0.0
        %2240 = vmatpush.msra.mxu0 0.0
        %2241 = vmatpush.msra.mxu0 0.0
        %2242 = vmatpush.msra.mxu0 0.0
        %2243 = vmatpush.msra.mxu0 0.0
        %2244 = vmatpush.msra.mxu0 0.0
        %2245 = vmatpush.msra.mxu0 0.0
        %2246 = vmatpush.msra.mxu0 0.0
        %2247 = vmatpush.msra.mxu0 0.0
        %2248 = vmatpush.msra.mxu0 0.0
        %2249 = vmatpush.msra.mxu0 0.0
        %2250 = vmatpush.msra.mxu0 0.0
        %2251 = vmatpush.msra.mxu0 0.0
        %2252 = vmatpush.msra.mxu0 %v2232
        %2253 = vmatpush.msra.mxu0 %v2230
        %2254 = vmatmul.f32.gmra.mxu0 %v2236
        %v2255 = vpop.f32.mrf.mxu0
        %v2256 = vadd.f32 0.0, %v2255
        %2257 = vdwg.mxu0
        %2258 = vrot.lane.b32.xlu0 %v1866, 112
        %v2259 = vpop.permute.xlu0 %2258
        %2260 = vrot.lane.b32.xlu0 %v1909, 112
        %v2261 = vpop.permute.xlu0 %2260
        %2262 = vrot.lane.b32.xlu0 %v1912, 112
        %v2263 = vpop.permute.xlu0 %2262
        %v2264 = vsel %vm1066, %v2259, 0
        %v2266 = vsel %vm1066, %v2261, 0
        %v2268 = vsel %vm1066, %v2263, 0
        %2270 = vmatpush.xpose.msra.mxu0 0.0
        %2271 = vmatpush.xpose.msra.mxu0 0.0
        %2272 = vmatpush.xpose.msra.mxu0 0.0
        %2273 = vmatpush.xpose.msra.mxu0 0.0
        %2274 = vmatpush.xpose.msra.mxu0 0.0
        %2275 = vmatpush.xpose.msra.mxu0 0.0
        %2276 = vmatpush.xpose.msra.mxu0 0.0
        %2277 = vmatpush.xpose.msra.mxu0 0.0
        %2278 = vmatpush.xpose.msra.mxu0 0.0
        %2279 = vmatpush.xpose.msra.mxu0 0.0
        %2280 = vmatpush.xpose.msra.mxu0 0.0
        %2281 = vmatpush.xpose.msra.mxu0 0.0
        %2282 = vmatpush.xpose.msra.mxu0 0.0
        %2283 = vmatpush.xpose.msra.mxu0 0.0
        %2284 = vmatpush.xpose.msra.mxu0 %v2268
        %2285 = vmatpush.xpose.msra.mxu0 %v2266
        %2286 = vmatmul.f32.gmra.mxu0 %v2264
        %v2287 = vpop.f32.mrf.mxu0
        %v2288 = vadd.f32 0.0, %v2287
        %2289 = vdwg.mxu0
        %2290 = vrot.lane.b32.xlu0 %v1869, 112
        %v2291 = vpop.permute.xlu0 %2290
        %2292 = vrot.lane.b32.xlu0 %v1915, 112
        %v2293 = vpop.permute.xlu0 %2292
        %2294 = vrot.lane.b32.xlu0 %v1918, 112
        %v2295 = vpop.permute.xlu0 %2294
        %v2296 = vsel %vm1066, %v2291, 0
        %v2298 = vsel %vm1066, %v2293, 0
        %v2300 = vsel %vm1066, %v2295, 0
        %2302 = vmatpush.xpose.msra.mxu0 0.0
        %2303 = vmatpush.xpose.msra.mxu0 0.0
        %2304 = vmatpush.xpose.msra.mxu0 0.0
        %2305 = vmatpush.xpose.msra.mxu0 0.0
        %2306 = vmatpush.xpose.msra.mxu0 0.0
        %2307 = vmatpush.xpose.msra.mxu0 0.0
        %2308 = vmatpush.xpose.msra.mxu0 0.0
        %2309 = vmatpush.xpose.msra.mxu0 0.0
        %2310 = vmatpush.xpose.msra.mxu0 0.0
        %2311 = vmatpush.xpose.msra.mxu0 0.0
        %2312 = vmatpush.xpose.msra.mxu0 0.0
        %2313 = vmatpush.xpose.msra.mxu0 0.0
        %2314 = vmatpush.xpose.msra.mxu0 0.0
        %2315 = vmatpush.xpose.msra.mxu0 0.0
        %2316 = vmatpush.xpose.msra.mxu0 %v2300
        %2317 = vmatpush.xpose.msra.mxu0 %v2298
        %2318 = vmatmul.f32.gmra.mxu0 %v2296
        %v2319 = vpop.f32.mrf.mxu0
        %v2320 = vadd.f32 0.0, %v2319
        %2321 = vdwg.mxu0
        %v2322 = vmul.f32 %v2288, 0.35355338
        %v2323 = vmul.f32 %v2320, 0.35355338
        %v2324 = vsel %vm1728, %v2322, -inf
        %2325 = vmax.xlane.f32.xlu0 %v2324
        %v2326 = vpop.xlane.xlu0 %2325
        %v2327 = vsel %vm1728, %v2323, -inf
        %2328 = vmax.xlane.f32.xlu0 %v2327
        %v2329 = vpop.xlane.xlu0 %2328
        %v2330 = vsub.f32 %v2322, %v2326
        %v2331 = vsub.f32 %v2323, %v2329
        %v2332 = vmul.f32 %v2330, 1.442695
        %v2333 = vpow.pop %v2332
        %v2334 = vmul.f32 %v2331, 1.442695
        %v2335 = vpow.pop %v2334
        %v2336 = vsel %vm1728, %v2333, 0.0
        %2337 = vadd.xlane.f32.xlu0 %v2336
        %v2338 = vpop.xlane.xlu0 %2337
        %v2339 = vsel %vm1728, %v2335, 0.0
        %2340 = vadd.xlane.f32.xlu0 %v2339
        %v2341 = vpop.xlane.xlu0 %2340
        %v2342 = vrcp.pop %v2338
        %v2343 = vmul.f32 %v2338, %v2342
        %v2344 = vsub.f32 1.0, %v2343
        %v2345 = vmul.f32 %v2342, %v2344
        %v2346 = vadd.f32 %v2342, %v2345
        %vm2347 = vweird.f32 %v2338
        %vm2348 = vweird.f32 %v2342
        %vm2349 = vmor %vm2347, %vm2348
        %v2350 = vsel %vm2349, %v2342, %v2346
        %v2351 = vand.u32 2147483647, %v2338
        %vm2352 = vcmp.eq.f32.partialorder %v2351, 8.507059e+37
        %v2353 = vand.u32 %v2338, 2147483648
        %v2354 = vor.u32 1.1754944e-38, %v2353
        %v2355 = vsel %vm2352, %v2354, %v2350
        %v2356 = vmul.f32 %v2333, %v2355
        %v2357 = vrcp.pop %v2341
        %v2358 = vmul.f32 %v2341, %v2357
        %v2359 = vsub.f32 1.0, %v2358
        %v2360 = vmul.f32 %v2357, %v2359
        %v2361 = vadd.f32 %v2357, %v2360
        %vm2362 = vweird.f32 %v2341
        %vm2363 = vweird.f32 %v2357
        %vm2364 = vmor %vm2362, %vm2363
        %v2365 = vsel %vm2364, %v2357, %v2361
        %v2366 = vand.u32 2147483647, %v2341
        %vm2367 = vcmp.eq.f32.partialorder %v2366, 8.507059e+37
        %v2368 = vand.u32 %v2341, 2147483648
        %v2369 = vor.u32 1.1754944e-38, %v2368
        %v2370 = vsel %vm2367, %v2369, %v2365
        %v2371 = vmul.f32 %v2335, %v2370
        %2372 = vrot.lane.b32.xlu0 %v1909, 80
        %v2373 = vpop.permute.xlu0 %2372
        %2374 = vrot.lane.b32.xlu0 %v1912, 80
        %v2375 = vpop.permute.xlu0 %2374
        %v2379 = vsel %vm1728, %v2356, 0
        %2381 = vmatpush.msra.mxu0 0.0
        %2382 = vmatpush.msra.mxu0 0.0
        %2383 = vmatpush.msra.mxu0 0.0
        %2384 = vmatpush.msra.mxu0 0.0
        %2385 = vmatpush.msra.mxu0 0.0
        %2386 = vmatpush.msra.mxu0 0.0
        %2387 = vmatpush.msra.mxu0 0.0
        %2388 = vmatpush.msra.mxu0 0.0
        %2389 = vmatpush.msra.mxu0 0.0
        %2390 = vmatpush.msra.mxu0 0.0
        %2391 = vmatpush.msra.mxu0 0.0
        %2392 = vmatpush.msra.mxu0 0.0
        %2393 = vmatpush.msra.mxu0 0.0
        %2394 = vmatpush.msra.mxu0 0.0
        %2395 = vmatpush.msra.mxu0 %v2375
        %2396 = vmatpush.msra.mxu0 %v2373
        %2397 = vmatmul.f32.gmra.mxu0 %v2379
        %v2398 = vpop.f32.mrf.mxu0
        %v2399 = vadd.f32 0.0, %v2398
        %2400 = vdwg.mxu0
        %2401 = vrot.lane.b32.xlu0 %v1915, 80
        %v2402 = vpop.permute.xlu0 %2401
        %2403 = vrot.lane.b32.xlu0 %v1918, 80
        %v2404 = vpop.permute.xlu0 %2403
        %v2408 = vsel %vm1728, %v2371, 0
        %2410 = vmatpush.msra.mxu0 0.0
        %2411 = vmatpush.msra.mxu0 0.0
        %2412 = vmatpush.msra.mxu0 0.0
        %2413 = vmatpush.msra.mxu0 0.0
        %2414 = vmatpush.msra.mxu0 0.0
        %2415 = vmatpush.msra.mxu0 0.0
        %2416 = vmatpush.msra.mxu0 0.0
        %2417 = vmatpush.msra.mxu0 0.0
        %2418 = vmatpush.msra.mxu0 0.0
        %2419 = vmatpush.msra.mxu0 0.0
        %2420 = vmatpush.msra.mxu0 0.0
        %2421 = vmatpush.msra.mxu0 0.0
        %2422 = vmatpush.msra.mxu0 0.0
        %2423 = vmatpush.msra.mxu0 0.0
        %2424 = vmatpush.msra.mxu0 %v2404
        %2425 = vmatpush.msra.mxu0 %v2402
        %2426 = vmatmul.f32.gmra.mxu0 %v2408
        %v2427 = vpop.f32.mrf.mxu0
        %v2428 = vadd.f32 0.0, %v2427
        %2429 = vdwg.mxu0
        %2430 = vrot.lane.b32.xlu0 %v1866, 104
        %v2431 = vpop.permute.xlu0 %2430
        %2432 = vrot.lane.b32.xlu0 %v1909, 104
        %v2433 = vpop.permute.xlu0 %2432
        %2434 = vrot.lane.b32.xlu0 %v1912, 104
        %v2435 = vpop.permute.xlu0 %2434
        %v2436 = vsel %vm1066, %v2431, 0
        %v2438 = vsel %vm1066, %v2433, 0
        %v2440 = vsel %vm1066, %v2435, 0
        %2442 = vmatpush.xpose.msra.mxu0 0.0
        %2443 = vmatpush.xpose.msra.mxu0 0.0
        %2444 = vmatpush.xpose.msra.mxu0 0.0
        %2445 = vmatpush.xpose.msra.mxu0 0.0
        %2446 = vmatpush.xpose.msra.mxu0 0.0
        %2447 = vmatpush.xpose.msra.mxu0 0.0
        %2448 = vmatpush.xpose.msra.mxu0 0.0
        %2449 = vmatpush.xpose.msra.mxu0 0.0
        %2450 = vmatpush.xpose.msra.mxu0 0.0
        %2451 = vmatpush.xpose.msra.mxu0 0.0
        %2452 = vmatpush.xpose.msra.mxu0 0.0
        %2453 = vmatpush.xpose.msra.mxu0 0.0
        %2454 = vmatpush.xpose.msra.mxu0 0.0
        %2455 = vmatpush.xpose.msra.mxu0 0.0
        %2456 = vmatpush.xpose.msra.mxu0 %v2440
        %2457 = vmatpush.xpose.msra.mxu0 %v2438
        %2458 = vmatmul.f32.gmra.mxu0 %v2436
        %v2459 = vpop.f32.mrf.mxu0
        %v2460 = vadd.f32 0.0, %v2459
        %2461 = vdwg.mxu0
        %2462 = vrot.lane.b32.xlu0 %v1869, 104
        %v2463 = vpop.permute.xlu0 %2462
        %2464 = vrot.lane.b32.xlu0 %v1915, 104
        %v2465 = vpop.permute.xlu0 %2464
        %2466 = vrot.lane.b32.xlu0 %v1918, 104
        %v2467 = vpop.permute.xlu0 %2466
        %v2468 = vsel %vm1066, %v2463, 0
        %v2470 = vsel %vm1066, %v2465, 0
        %v2472 = vsel %vm1066, %v2467, 0
        %2474 = vmatpush.xpose.msra.mxu0 0.0
        %2475 = vmatpush.xpose.msra.mxu0 0.0
        %2476 = vmatpush.xpose.msra.mxu0 0.0
        %2477 = vmatpush.xpose.msra.mxu0 0.0
        %2478 = vmatpush.xpose.msra.mxu0 0.0
        %2479 = vmatpush.xpose.msra.mxu0 0.0
        %2480 = vmatpush.xpose.msra.mxu0 0.0
        %2481 = vmatpush.xpose.msra.mxu0 0.0
        %2482 = vmatpush.xpose.msra.mxu0 0.0
        %2483 = vmatpush.xpose.msra.mxu0 0.0
        %2484 = vmatpush.xpose.msra.mxu0 0.0
        %2485 = vmatpush.xpose.msra.mxu0 0.0
        %2486 = vmatpush.xpose.msra.mxu0 0.0
        %2487 = vmatpush.xpose.msra.mxu0 0.0
        %2488 = vmatpush.xpose.msra.mxu0 %v2472
        %2489 = vmatpush.xpose.msra.mxu0 %v2470
        %2490 = vmatmul.f32.gmra.mxu0 %v2468
        %v2491 = vpop.f32.mrf.mxu0
        %v2492 = vadd.f32 0.0, %v2491
        %2493 = vdwg.mxu0
        %v2494 = vmul.f32 %v2460, 0.35355338
        %v2495 = vmul.f32 %v2492, 0.35355338
        %v2496 = vsel %vm1728, %v2494, -inf
        %2497 = vmax.xlane.f32.xlu0 %v2496
        %v2498 = vpop.xlane.xlu0 %2497
        %v2499 = vsel %vm1728, %v2495, -inf
        %2500 = vmax.xlane.f32.xlu0 %v2499
        %v2501 = vpop.xlane.xlu0 %2500
        %v2502 = vsub.f32 %v2494, %v2498
        %v2503 = vsub.f32 %v2495, %v2501
        %v2504 = vmul.f32 %v2502, 1.442695
        %v2505 = vpow.pop %v2504
        %v2506 = vmul.f32 %v2503, 1.442695
        %v2507 = vpow.pop %v2506
        %v2508 = vsel %vm1728, %v2505, 0.0
        %2509 = vadd.xlane.f32.xlu0 %v2508
        %v2510 = vpop.xlane.xlu0 %2509
        %v2511 = vsel %vm1728, %v2507, 0.0
        %2512 = vadd.xlane.f32.xlu0 %v2511
        %v2513 = vpop.xlane.xlu0 %2512
        %v2514 = vrcp.pop %v2510
        %v2515 = vmul.f32 %v2510, %v2514
        %v2516 = vsub.f32 1.0, %v2515
        %v2517 = vmul.f32 %v2514, %v2516
        %v2518 = vadd.f32 %v2514, %v2517
        %vm2519 = vweird.f32 %v2510
        %vm2520 = vweird.f32 %v2514
        %vm2521 = vmor %vm2519, %vm2520
        %v2522 = vsel %vm2521, %v2514, %v2518
        %v2523 = vand.u32 2147483647, %v2510
        %vm2524 = vcmp.eq.f32.partialorder %v2523, 8.507059e+37
        %v2525 = vand.u32 %v2510, 2147483648
        %v2526 = vor.u32 1.1754944e-38, %v2525
        %v2527 = vsel %vm2524, %v2526, %v2522
        %v2528 = vmul.f32 %v2505, %v2527
        %v2529 = vrcp.pop %v2513
        %v2530 = vmul.f32 %v2513, %v2529
        %v2531 = vsub.f32 1.0, %v2530
        %v2532 = vmul.f32 %v2529, %v2531
        %v2533 = vadd.f32 %v2529, %v2532
        %vm2534 = vweird.f32 %v2513
        %vm2535 = vweird.f32 %v2529
        %vm2536 = vmor %vm2534, %vm2535
        %v2537 = vsel %vm2536, %v2529, %v2533
        %v2538 = vand.u32 2147483647, %v2513
        %vm2539 = vcmp.eq.f32.partialorder %v2538, 8.507059e+37
        %v2540 = vand.u32 %v2513, 2147483648
        %v2541 = vor.u32 1.1754944e-38, %v2540
        %v2542 = vsel %vm2539, %v2541, %v2537
        %v2543 = vmul.f32 %v2507, %v2542
        %2544 = vrot.lane.b32.xlu0 %v1909, 72
        %v2545 = vpop.permute.xlu0 %2544
        %2546 = vrot.lane.b32.xlu0 %v1912, 72
        %v2547 = vpop.permute.xlu0 %2546
        %v2551 = vsel %vm1728, %v2528, 0
        %2553 = vmatpush.msra.mxu0 0.0
        %2554 = vmatpush.msra.mxu0 0.0
        %2555 = vmatpush.msra.mxu0 0.0
        %2556 = vmatpush.msra.mxu0 0.0
        %2557 = vmatpush.msra.mxu0 0.0
        %2558 = vmatpush.msra.mxu0 0.0
        %2559 = vmatpush.msra.mxu0 0.0
        %2560 = vmatpush.msra.mxu0 0.0
        %2561 = vmatpush.msra.mxu0 0.0
        %2562 = vmatpush.msra.mxu0 0.0
        %2563 = vmatpush.msra.mxu0 0.0
        %2564 = vmatpush.msra.mxu0 0.0
        %2565 = vmatpush.msra.mxu0 0.0
        %2566 = vmatpush.msra.mxu0 0.0
        %2567 = vmatpush.msra.mxu0 %v2547
        %2568 = vmatpush.msra.mxu0 %v2545
        %2569 = vmatmul.f32.gmra.mxu0 %v2551
        %v2570 = vpop.f32.mrf.mxu0
        %v2571 = vadd.f32 0.0, %v2570
        %2572 = vdwg.mxu0
        %2573 = vrot.lane.b32.xlu0 %v1915, 72
        %v2574 = vpop.permute.xlu0 %2573
        %2575 = vrot.lane.b32.xlu0 %v1918, 72
        %v2576 = vpop.permute.xlu0 %2575
        %v2580 = vsel %vm1728, %v2543, 0
        %2582 = vmatpush.msra.mxu0 0.0
        %2583 = vmatpush.msra.mxu0 0.0
        %2584 = vmatpush.msra.mxu0 0.0
        %2585 = vmatpush.msra.mxu0 0.0
        %2586 = vmatpush.msra.mxu0 0.0
        %2587 = vmatpush.msra.mxu0 0.0
        %2588 = vmatpush.msra.mxu0 0.0
        %2589 = vmatpush.msra.mxu0 0.0
        %2590 = vmatpush.msra.mxu0 0.0
        %2591 = vmatpush.msra.mxu0 0.0
        %2592 = vmatpush.msra.mxu0 0.0
        %2593 = vmatpush.msra.mxu0 0.0
        %2594 = vmatpush.msra.mxu0 0.0
        %2595 = vmatpush.msra.mxu0 0.0
        %2596 = vmatpush.msra.mxu0 %v2576
        %2597 = vmatpush.msra.mxu0 %v2574
        %2598 = vmatmul.f32.gmra.mxu0 %v2580
        %v2599 = vpop.f32.mrf.mxu0
        %v2600 = vadd.f32 0.0, %v2599
        %2601 = vdwg.mxu0
        %2604 = vrot.lane.b32.xlu0 %v2227, 8
        %v2605 = vpop.permute.xlu0 %2604
        %2606 = vrot.lane.b32.xlu0 %v2256, 8
        %v2607 = vpop.permute.xlu0 %2606
        %2612 = vrot.lane.b32.xlu0 %v2399, 16
        %v2613 = vpop.permute.xlu0 %2612
        %2614 = vrot.lane.b32.xlu0 %v2428, 16
        %v2615 = vpop.permute.xlu0 %2614
        %2620 = vrot.lane.b32.xlu0 %v2571, 24
        %v2621 = vpop.permute.xlu0 %2620
        %2622 = vrot.lane.b32.xlu0 %v2600, 24
        %v2623 = vpop.permute.xlu0 %2622
        %v2626 = vsel %vm1066, %v2055, %v2605
        %v2627 = vsel %vm1066, %v2084, %v2607
        %v2628 = vsel %vm1728, %v2626, %v2613
        %v2629 = vsel %vm1728, %v2627, %v2615
        %v2630 = vsel %vm1731, %v2628, %v2621
        %v2631 = vsel %vm1731, %v2629, %v2623
        %v2632 = vld [vmem:[%s921] sm:$0xff]
        %v2633 = vld [vmem:[%s921 + $0x8] sm:$0xff]
        %v2634 = vld [vmem:[%s921 + $0x10] sm:$0xff]
        %v2635 = vld [vmem:[%s921 + $0x18] sm:$0xff]
        %v2636 = vld [vmem:[%s924] sm:$0x1]
        %v2638 = vperm.slane %v2636, 0
        %v2641 = vsel %vm1031, %v2630, 0
        %v2644 = vsel %vm1031, %v2631, 0
        %2646 = vmatpush.msra.mxu0 0.0
        %2647 = vmatpush.msra.mxu0 0.0
        %2648 = vmatpush.msra.mxu0 0.0
        %2649 = vmatpush.msra.mxu0 0.0
        %2650 = vmatpush.msra.mxu0 0.0
        %2651 = vmatpush.msra.mxu0 0.0
        %2652 = vmatpush.msra.mxu0 0.0
        %2653 = vmatpush.msra.mxu0 0.0
        %2654 = vmatpush.msra.mxu0 0.0
        %2655 = vmatpush.msra.mxu0 0.0
        %2656 = vmatpush.msra.mxu0 0.0
        %2657 = vmatpush.msra.mxu0 0.0
        %2658 = vmatpush.msra.mxu0 %v2635
        %2659 = vmatpush.msra.mxu0 %v2634
        %2660 = vmatpush.msra.mxu0 %v2633
        %2661 = vmatpush.msra.mxu0 %v2632
        %2662 = vmatmul.f32.gmra.mxu0 %v2641
        %v2663 = vpop.f32.mrf.mxu0
        %v2664 = vadd.f32 %v2638, %v2663
        %2665 = vmatmul.f32.gmra.mxu0 %v2644
        %v2666 = vpop.f32.mrf.mxu0
        %v2667 = vadd.f32 %v2638, %v2666
        %2668 = vdwg.mxu0
        %v2669 = vadd.f32 %v1828, %v2664
        %v2670 = vadd.f32 %v1829, %v2667
        %v2671 = vsel %vm1031, %v2669, 0.0
        %2672 = vadd.xlane.f32.xlu0 %v2671
        %v2673 = vpop.xlane.xlu0 %2672
        %v2674 = vsel %vm1031, %v2670, 0.0
        %2675 = vadd.xlane.f32.xlu0 %v2674
        %v2676 = vpop.xlane.xlu0 %2675
        %v2677 = vmul.f32 %v2673, %v1785
        %v2678 = vmul.f32 %v2676, %v1785
        %v2679 = vsub.f32 %v2669, %v2677
        %v2680 = vsub.f32 %v2670, %v2678
        %v2681 = vmul.f32 %v2679, %v2679
        %v2682 = vmul.f32 %v2680, %v2680
        %v2683 = vsel %vm1031, %v2681, 0.0
        %2684 = vadd.xlane.f32.xlu0 %v2683
        %v2685 = vpop.xlane.xlu0 %2684
        %v2686 = vsel %vm1031, %v2682, 0.0
        %2687 = vadd.xlane.f32.xlu0 %v2686
        %v2688 = vpop.xlane.xlu0 %2687
        %v2689 = vmul.f32 %v2685, %v1785
        %v2690 = vmul.f32 %v2688, %v1785
        %v2691 = vadd.f32 %v2689, 1e-05
        %v2692 = vadd.f32 %v2690, 1e-05
        %v2693 = vrsqrt.pop %v2691
        %v2694 = vmul.f32 %v2693, %v2691
        %v2695 = vmul.f32 %v2694, %v2693
        %v2696 = vmul.f32 0.5, %v2695
        %v2697 = vsub.f32 1.5, %v2696
        %v2698 = vmul.f32 %v2693, %v2697
        %vm2699 = vweird.f32 %v2691
        %vm2700 = vweird.f32 %v2693
        %vm2701 = vmor %vm2699, %vm2700
        %v2702 = vsel %vm2701, %v2693, %v2698
        %v2703 = vrsqrt.pop %v2692
        %v2704 = vmul.f32 %v2703, %v2692
        %v2705 = vmul.f32 %v2704, %v2703
        %v2706 = vmul.f32 0.5, %v2705
        %v2707 = vsub.f32 1.5, %v2706
        %v2708 = vmul.f32 %v2703, %v2707
        %vm2709 = vweird.f32 %v2692
        %vm2710 = vweird.f32 %v2703
        %vm2711 = vmor %vm2709, %vm2710
        %v2712 = vsel %vm2711, %v2703, %v2708
        %v2713 = vmul.f32 %v2679, %v2702
        %v2714 = vmul.f32 %v2680, %v2712
        %v2715 = vperm.slane %v1019, 1
        %v2716 = vmul.f32 %v2713, %v2715
        %v2717 = vmul.f32 %v2714, %v2715
        %v2718 = vperm.slane %v1020, 1
        %v2719 = vadd.f32 %v2716, %v2718
        %v2720 = vadd.f32 %v2717, %v2718
        %v2721 = vld [vmem:[%s929] sm:$0xff]
        %v2722 = vld [vmem:[%s929 + $0x8] sm:$0xff]
        %v2723 = vld [vmem:[%s929 + $0x10] sm:$0xff]
        %v2724 = vld [vmem:[%s929 + $0x18] sm:$0xff]
        %v2725 = vld [vmem:[%s932] sm:$0x1]
        %v2727 = vperm.slane %v2725, 0
        %v2730 = vsel %vm1031, %v2719, 0
        %v2733 = vsel %vm1031, %v2720, 0
        %2735 = vmatpush.msra.mxu0 0.0
        %2736 = vmatpush.msra.mxu0 0.0
        %2737 = vmatpush.msra.mxu0 0.0
        %2738 = vmatpush.msra.mxu0 0.0
        %2739 = vmatpush.msra.mxu0 0.0
        %2740 = vmatpush.msra.mxu0 0.0
        %2741 = vmatpush.msra.mxu0 0.0
        %2742 = vmatpush.msra.mxu0 0.0
        %2743 = vmatpush.msra.mxu0 0.0
        %2744 = vmatpush.msra.mxu0 0.0
        %2745 = vmatpush.msra.mxu0 0.0
        %2746 = vmatpush.msra.mxu0 0.0
        %2747 = vmatpush.msra.mxu0 %v2724
        %2748 = vmatpush.msra.mxu0 %v2723
        %2749 = vmatpush.msra.mxu0 %v2722
        %2750 = vmatpush.msra.mxu0 %v2721
        %2751 = vmatmul.f32.gmra.mxu0 %v2730
        %v2752 = vpop.f32.mrf.mxu0
        %v2753 = vadd.f32 %v2727, %v2752
        %2754 = vmatmul.f32.gmra.mxu0 %v2733
        %v2755 = vpop.f32.mrf.mxu0
        %v2756 = vadd.f32 %v2727, %v2755
        %2757 = vdwg.mxu0
        %v2758 = vmax.f32 %v2753, 0.0
        %v2759 = vmax.f32 %v2756, 0.0
        %v2760 = vld [vmem:[%s937] sm:$0xff]
        %v2761 = vld [vmem:[%s937 + $0x8] sm:$0xff]
        %v2762 = vld [vmem:[%s937 + $0x10] sm:$0xff]
        %v2763 = vld [vmem:[%s937 + $0x18] sm:$0xff]
        %v2764 = vld [vmem:[%s937 + $0x20] sm:$0xff]
        %v2765 = vld [vmem:[%s937 + $0x28] sm:$0xff]
        %v2766 = vld [vmem:[%s937 + $0x30] sm:$0xff]
        %v2767 = vld [vmem:[%s937 + $0x38] sm:$0xff]
        %v2768 = vld [vmem:[%s940] sm:$0x1]
        %v2770 = vperm.slane %v2768, 0
        %vm2772 = vcmask 523264
        %v2774 = vsel %vm2772, %v2758, 0
        %v2777 = vsel %vm2772, %v2759, 0
        %2779 = vmatpush.msra.mxu0 0.0
        %2780 = vmatpush.msra.mxu0 0.0
        %2781 = vmatpush.msra.mxu0 0.0
        %2782 = vmatpush.msra.mxu0 0.0
        %2783 = vmatpush.msra.mxu0 0.0
        %2784 = vmatpush.msra.mxu0 0.0
        %2785 = vmatpush.msra.mxu0 0.0
        %2786 = vmatpush.msra.mxu0 0.0
        %2787 = vmatpush.msra.mxu0 %v2767
        %2788 = vmatpush.msra.mxu0 %v2766
        %2789 = vmatpush.msra.mxu0 %v2765
        %2790 = vmatpush.msra.mxu0 %v2764
        %2791 = vmatpush.msra.mxu0 %v2763
        %2792 = vmatpush.msra.mxu0 %v2762
        %2793 = vmatpush.msra.mxu0 %v2761
        %2794 = vmatpush.msra.mxu0 %v2760
        %2795 = vmatmul.f32.gmra.mxu0 %v2774
        %v2796 = vpop.f32.mrf.mxu0
        %v2797 = vadd.f32 %v2770, %v2796
        %2798 = vmatmul.f32.gmra.mxu0 %v2777
        %v2799 = vpop.f32.mrf.mxu0
        %v2800 = vadd.f32 %v2770, %v2799
        %2801 = vdwg.mxu0
        %v2802 = vadd.f32 %v2719, %v2797
        %v2803 = vadd.f32 %v2720, %v2800
        %v2804 = vsel %vm1031, %v2802, 0.0
        %2805 = vadd.xlane.f32.xlu0 %v2804
        %v2806 = vpop.xlane.xlu0 %2805
        %v2807 = vsel %vm1031, %v2803, 0.0
        %2808 = vadd.xlane.f32.xlu0 %v2807
        %v2809 = vpop.xlane.xlu0 %2808
        %v2810 = vmul.f32 %v2806, %v1785
        %v2811 = vmul.f32 %v2809, %v1785
        %v2812 = vsub.f32 %v2802, %v2810
        %v2813 = vsub.f32 %v2803, %v2811
        %v2814 = vmul.f32 %v2812, %v2812
        %v2815 = vmul.f32 %v2813, %v2813
        %v2816 = vsel %vm1031, %v2814, 0.0
        %2817 = vadd.xlane.f32.xlu0 %v2816
        %v2818 = vpop.xlane.xlu0 %2817
        %v2819 = vsel %vm1031, %v2815, 0.0
        %2820 = vadd.xlane.f32.xlu0 %v2819
        %v2821 = vpop.xlane.xlu0 %2820
        %v2822 = vmul.f32 %v2818, %v1785
        %v2823 = vmul.f32 %v2821, %v1785
        %v2824 = vadd.f32 %v2822, 1e-05
        %v2825 = vadd.f32 %v2823, 1e-05
        %v2826 = vrsqrt.pop %v2824
        %v2827 = vmul.f32 %v2826, %v2824
        %v2828 = vmul.f32 %v2827, %v2826
        %v2829 = vmul.f32 0.5, %v2828
        %v2830 = vsub.f32 1.5, %v2829
        %v2831 = vmul.f32 %v2826, %v2830
        %vm2832 = vweird.f32 %v2824
        %vm2833 = vweird.f32 %v2826
        %vm2834 = vmor %vm2832, %vm2833
        %v2835 = vsel %vm2834, %v2826, %v2831
        %v2836 = vrsqrt.pop %v2825
        %v2837 = vmul.f32 %v2836, %v2825
        %v2838 = vmul.f32 %v2837, %v2836
        %v2839 = vmul.f32 0.5, %v2838
        %v2840 = vsub.f32 1.5, %v2839
        %v2841 = vmul.f32 %v2836, %v2840
        %vm2842 = vweird.f32 %v2825
        %vm2843 = vweird.f32 %v2836
        %vm2844 = vmor %vm2842, %vm2843
        %v2845 = vsel %vm2844, %v2836, %v2841
        %v2846 = vmul.f32 %v2812, %v2835
        %v2847 = vmul.f32 %v2813, %v2845
        %v2848 = vperm.slane %v1019, 2
        %v2849 = vmul.f32 %v2846, %v2848
        %v2850 = vmul.f32 %v2847, %v2848
        %v2851 = vperm.slane %v1020, 2
        %v2852 = vadd.f32 %v2849, %v2851
        %v2853 = vadd.f32 %v2850, %v2851
        %2854 = vst.msk [vmem:[#allocation2] sm:$0xff] %vm1031, %v2852
        %2855 = vst.msk [vmem:[#allocation2 + $0x8] sm:$0xff] %vm1031, %v2853
        %p2856 = scmp.eq.s32.totalorder %s35, 1
        // Predicated region
        $region117: #{forward.1} parent=111 // pred_check
          %p2857 = pneg %p2856
        $region118: #{forward.1} parent=111 // pred_check_branch
          %2859 = sbr.rel (%p2857) target = $region120
        $region119: #{forward.1} parent=111 // pred_region
          %v2860 = vld [vmem:[%s5] sm:$0xff]
          %v2861 = vld [vmem:[%s5 + $0x8] sm:$0xff]
          %v2862 = vld [vmem:[%s5 + $0x10] sm:$0xff]
          %v2863 = vld [vmem:[%s5 + $0x18] sm:$0xff]
          %v2864 = vld [vmem:[%s5 + $0x20] sm:$0xff]
          %v2865 = vld [vmem:[%s5 + $0x28] sm:$0xff]
          %v2866 = vld [vmem:[%s5 + $0x30] sm:$0xff]
          %v2867 = vld [vmem:[%s5 + $0x38] sm:$0xff]
          %v2868 = vld [vmem:[%s5 + $0x40] sm:$0xff]
          %v2869 = vld [vmem:[%s5 + $0x48] sm:$0xff]
          %v2870 = vld [vmem:[%s5 + $0x50] sm:$0xff]
          %v2871 = vld [vmem:[%s5 + $0x58] sm:$0xff]
          %v2872 = vld [vmem:[%s5 + $0x60] sm:$0xff]
          %v2873 = vld [vmem:[%s5 + $0x68] sm:$0xff]
          %v2874 = vld [vmem:[%s5 + $0x70] sm:$0xff]
          %v2875 = vld [vmem:[%s5 + $0x78] sm:$0xff]
          %v2876 = vld [vmem:[%s6] sm:$0x1]
          %v2878 = vperm.slane %v2876, 0
          %v2881 = vsel %vm1031, %v2852, 0
          %v2884 = vsel %vm1031, %v2853, 0
          %v2887 = vsel %vm1031, %v2860, 0
          %v2890 = vsel %vm1031, %v2861, 0
          %v2893 = vsel %vm1031, %v2862, 0
          %v2896 = vsel %vm1031, %v2863, 0
          %v2899 = vsel %vm1031, %v2864, 0
          %v2902 = vsel %vm1031, %v2865, 0
          %v2905 = vsel %vm1031, %v2866, 0
          %v2908 = vsel %vm1031, %v2867, 0
          %v2911 = vsel %vm1031, %v2868, 0
          %v2914 = vsel %vm1031, %v2869, 0
          %v2917 = vsel %vm1031, %v2870, 0
          %v2920 = vsel %vm1031, %v2871, 0
          %v2923 = vsel %vm1031, %v2872, 0
          %v2926 = vsel %vm1031, %v2873, 0
          %v2929 = vsel %vm1031, %v2874, 0
          %v2932 = vsel %vm1031, %v2875, 0
          %2934 = vmatpush.xpose.msra.mxu0 %v2932
          %2935 = vmatpush.xpose.msra.mxu0 %v2929
          %2936 = vmatpush.xpose.msra.mxu0 %v2926
          %2937 = vmatpush.xpose.msra.mxu0 %v2923
          %2938 = vmatpush.xpose.msra.mxu0 %v2920
          %2939 = vmatpush.xpose.msra.mxu0 %v2917
          %2940 = vmatpush.xpose.msra.mxu0 %v2914
          %2941 = vmatpush.xpose.msra.mxu0 %v2911
          %2942 = vmatpush.xpose.msra.mxu0 %v2908
          %2943 = vmatpush.xpose.msra.mxu0 %v2905
          %2944 = vmatpush.xpose.msra.mxu0 %v2902
          %2945 = vmatpush.xpose.msra.mxu0 %v2899
          %2946 = vmatpush.xpose.msra.mxu0 %v2896
          %2947 = vmatpush.xpose.msra.mxu0 %v2893
          %2948 = vmatpush.xpose.msra.mxu0 %v2890
          %2949 = vmatpush.xpose.msra.mxu0 %v2887
          %2950 = vmatmul.f32.gmra.mxu0 %v2881
          %v2951 = vpop.f32.mrf.mxu0
          %v2952 = vadd.f32 %v2878, %v2951
          %2953 = vmatmul.f32.gmra.mxu0 %v2884
          %v2954 = vpop.f32.mrf.mxu0
          %v2955 = vadd.f32 %v2878, %v2954
          %2956 = vdwg.mxu0
          %v2957 = vlaneseq
          %v2958 = vand.u32 %v2957, 127
          %vm2959 = vcmp.lt.s32.totalorder %v2958, 21
          %v2960 = vsel %vm2959, %v2952, -1e+30
          %v2961 = vsel %vm2959, %v2955, -1e+30
          %2962 = vmax.xlane.f32.xlu0 %v2960
          %v2963 = vpop.xlane.xlu0 %2962
          %2964 = vmax.xlane.f32.xlu0 %v2961
          %v2965 = vpop.xlane.xlu0 %2964
          %v2966 = vsub.f32 %v2960, %v2963
          %v2967 = vsub.f32 %v2961, %v2965
          %v2968 = vmul.f32 %v2966, 1.442695
          %v2969 = vpow.pop %v2968
          %v2970 = vmul.f32 %v2967, 1.442695
          %v2971 = vpow.pop %v2970
          %2972 = vadd.xlane.f32.xlu0 %v2969
          %v2973 = vpop.xlane.xlu0 %2972
          %2974 = vadd.xlane.f32.xlu0 %v2971
          %v2975 = vpop.xlane.xlu0 %2974
          %v2976 = vlog2.pop %v2973
          %v2977 = vmul.f32 %v2976, 0.6931472
          %v2978 = vlog2.pop %v2975
          %v2979 = vmul.f32 %v2978, 0.6931472
          %v2980 = vadd.f32 %v2977, %v2963
          %v2981 = vadd.f32 %v2979, %v2965
          %v2982 = vsub.f32 %v2960, %v2980
          %v2983 = vsub.f32 %v2961, %v2981
          %2984 = vst [vmem:[#allocation4] sm:$0xff] %v2982
          %2985 = vst [vmem:[#allocation4 + $0x8] sm:$0xff] %v2983
        $region120: #{forward.1} parent=111 // pred_fallthru
          _
        // Predicated region
        $region121: #{forward.1} parent=111 // pred_check
          %p2986 = pneg %p611
        $region122: #{forward.1} parent=111 // pred_check_branch
          %2988 = sbr.rel (%p2986) target = $region124
        $region123: #{forward.1} parent=111 // pred_region
          %2990 = vsyncadd [#allocation5], 0
          %s2991 = sshll.u32 [#allocation4], 4
          %s2992 = int_to_ptr.vmem [resolvable:$true] %s2991
          %s2993 = sshll.u32 %s23, 4
          %s2994 = int_to_ptr.hbm [resolvable:$true] %s2993
          %2999 = dma.vmem_to_hbm [thread:$0]  %s2992, 256, %s2994, [#allocation5], 128, 128, 8
        $region124: #{forward.1} parent=111 // pred_fallthru
          _
        // Predicated region
        $region125: #{forward.1} parent=111 // pred_check
          %p3000 = pneg %p611
        $region126: #{forward.1} parent=111 // pred_check_branch
          %3002 = sbr.rel (%p3000) target = $region128
        $region127: #{forward.1} parent=111 // pred_region
          %3004 = dma.done [#allocation5], 256
        $region128: #{forward.1} parent=111 // pred_fallthru
          _
      $region112: #{forward.1} parent=5 // pred_fallthru
        _
      %p3005 = scmp.le.s32.totalorder 2, %s30
      // Predicated region
      $region129: #{forward.1} parent=5 // pred_check
        %p3006 = pneg %p3005
      $region130: #{forward.1} parent=5 // pred_check_branch
        %3008 = sbr.rel (%p3006) target = $region132
      $region131: #{forward.1} parent=5 // pred_region
        %s3009 = ssub.s32 %s30, 2
      $region132: #{forward.1} parent=5 // pred_fallthru
        _
    $region6: #{forward.1} parent=1 // loop_footer
      %s34 = sadd.s32 1, %s30
    $region7: #{forward.1} parent=1 // loop_footer_branch
      %29 = sbr.rel target = $region3
    $region8: #{forward.1} parent=1 // loop_exit
      _
    %3010 = vsyncpa [#allocation5], 1
    %s3011 = scalar_lea.sflag [#allocation5], 1
    %3012 = vsyncpa %s3011, 1

</llo_original>
